<compile_context>
chip_gen: v6e
topology: v6e:2x2x1
jax: 0.10.0
libtpu: 0.0.40
codegen_flags: <defaults>
</compile_context>

<pallas_src>
import functools

import numpy as np
import jax
import jax.numpy as jnp
from jax import lax
from jax.experimental import pallas as pl
from jax.experimental.pallas import tpu as pltpu


# --------------------------------------------------------------------------- #
# Host-side helpers
# --------------------------------------------------------------------------- #
def _interp_matrix(in_size: int, out_size: int) -> np.ndarray:
    """1-D bilinear interpolation matrix matching torch.nn.Upsample(
    mode='bilinear', align_corners=False) along one axis."""
    scale = in_size / out_size
    o = np.arange(out_size, dtype=np.float64)
    src = np.maximum((o + 0.5) * scale - 0.5, 0.0)
    i0 = np.floor(src).astype(np.int64)
    i1 = np.minimum(i0 + 1, in_size - 1)
    w1 = src - i0
    w0 = 1.0 - w1
    m = np.zeros((out_size, in_size), dtype=np.float64)
    m[np.arange(out_size), i0] += w0
    m[np.arange(out_size), i1] += w1
    return m.astype(np.float32)


def _round_up(x: int, m: int) -> int:
    return ((x + m - 1) // m) * m


def _chip_params():
    """Generation-aware VMEM budget / limit, matmul precision, megacore hint."""
    kind = ""
    try:
        kind = jax.devices()[0].device_kind.lower()
    except Exception:
        pass
    is_v5e = ("v5 lite" in kind) or ("v5e" in kind) or ("v5lite" in kind)
    big_vmem = ("v5" in kind) or ("v6" in kind)      # 128 MiB VMEM generations
    if big_vmem:
        vmem_budget, vmem_limit = 44 * 1024 * 1024, 96 * 1024 * 1024
    else:
        # Unknown / v7x: only 64 MiB VMEM per TensorCore -> stay conservative.
        vmem_budget, vmem_limit = 22 * 1024 * 1024, 48 * 1024 * 1024
    # f32 HIGHEST is ~6 MXU passes; on v5e (~197 TF/s, ~0.8 TB/s HBM) that can
    # stop hiding under the DMA for larger images.  factor=2 weights are
    # bf16-exact, so HIGH (bf16_3x) keeps fp32-level accuracy there.
    precision = lax.Precision.HIGH if is_v5e else lax.Precision.HIGHEST
    # Two TensorCores share the "parallel" grid axis on v7x -> prefer an even
    # block count (costs nothing when we only resize; padding gated on this).
    prefer_even = not big_vmem
    return vmem_budget, vmem_limit, precision, prefer_even


def _pick_tb_kron(hw, howo, in_isz, out_isz, budget):
    """VMEM model for the fused-Kronecker path (f32 lane padding to 128)."""
    pad = lambda n: _round_up(n, 128)
    const_bytes = 2 * hw * pad(howo) * 4           # double-buffered kron matrix
    per_img = (2 * pad(hw) * in_isz                # input block, double-buffered
               + 2 * pad(howo) * out_isz           # output block, double-buffered
               + pad(howo) * 4)                    # f32 accumulator before store
    avail = max(budget - const_bytes, 8 * per_img)
    tb = avail // max(per_img, 1)
    return int(max(8, min(2048, (tb // 8) * 8)))


def _pick_tb_separable(h, w, h_out, w_out, in_isz, out_isz, budget):
    """VMEM model for the separable (two-matmul) path."""
    pad = lambda n: _round_up(n, 128)
    const_bytes = 2 * 4 * (w * pad(w_out) + h * pad(h_out))
    per_img = (2 * h * pad(w) * in_isz
               + 2 * h_out * pad(w_out) * out_isz
               + 4 * (h * pad(w_out)               # W-pass result
                      + w_out * pad(h)             # transposed
                      + w_out * pad(h_out)         # H-pass result (transposed)
                      + h_out * pad(w_out)))       # final before store
    avail = max(budget - const_bytes, 0)
    # No 8-image floor here: a single large image is allowed to be its own block.
    # TODO(synk): images so large that even tb=1 exceeds VMEM need spatial tiling
    # of H with a 1-row halo; not implemented.
    return int(max(1, min(1024, avail // max(per_img, 1))))


def _choose_blocks(B, tb_cap, *, prefer_even):
    """Pick (tb, nblocks). tb is a multiple of 8 when possible (sublane tile /
    legal 2-D block), >=4 blocks when B allows (pipeline ramp/drain hiding),
    even block count for 2-TensorCore chips."""
    if tb_cap < 8:
        tb = max(1, tb_cap)
        return tb, -(-B // tb)
    tb = min((tb_cap // 8) * 8, _round_up(B, 8))
    nblocks = -(-B // tb)
    if nblocks < 4 and B >= 4 * 8:
        tb = _round_up(-(-B // 4), 8)
        nblocks = -(-B // tb)
    if nblocks % 2 == 1 and B > 8:
        tb_try = _round_up(-(-B // (nblocks + 1)), 8)
        nb_try = -(-B // tb_try)
        if nb_try % 2 == 0:
            tb, nblocks = tb_try, nb_try
        elif prefer_even:
            nblocks += 1                     # one padded block beats an idle core
    return tb, nblocks


# --------------------------------------------------------------------------- #
# Kernels
# --------------------------------------------------------------------------- #
def _kron_kernel(m_ref, x_ref, o_ref, *, precision):
    # One lane-dense MXU matmul: (TB, H*W) @ (H*W, H_out*W_out).
    o_ref[...] = jnp.dot(
        x_ref[...], m_ref[...],
        preferred_element_type=jnp.float32,
        precision=precision,
    ).astype(o_ref.dtype)


def _separable_kernel(a_w_t_ref, a_h_t_ref, x_ref, o_ref, *, precision):
    tb, h, w = x_ref.shape
    _, h_out, w_out = o_ref.shape
    x = x_ref[...]                                   # native dtype (no f32 cast)
    # NOTE: H should be a multiple of 8 so this reshape is a free view
    # (sublane tile); otherwise Mosaic inserts a relayout copy (correct, slower).
    y = jnp.dot(x.reshape(tb * h, w), a_w_t_ref[...],
                preferred_element_type=jnp.float32, precision=precision)
    y = y.reshape(tb, h, w_out)
    # H-pass as a second big-M dense matmul: transpose the last two dims (XLU),
    # flatten, right-multiply by A_h^T, transpose back.  No broadcast, no tiny
    # batched matmuls.
    yt = jnp.swapaxes(y, 1, 2).reshape(tb * w_out, h)
    z = jnp.dot(yt, a_h_t_ref[...].astype(yt.dtype),
                preferred_element_type=jnp.float32, precision=precision)
    z = jnp.swapaxes(z.reshape(tb, w_out, h_out), 1, 2)
    o_ref[...] = z.astype(o_ref.dtype)


# --------------------------------------------------------------------------- #
# Wrapper
# --------------------------------------------------------------------------- #
def upsample_bilinear(x: jax.Array, factor: int = 2, out_dtype=None) -> jax.Array:
    """x: (N, C, H, W) -> (N, C, factor*H, factor*W), PyTorch align_corners=False.

    out_dtype: optional (e.g. jnp.bfloat16) to halve the dominant output HBM
    traffic when downstream tolerates it; defaults to x.dtype (PyTorch parity).
    """
    N, C, H, W = x.shape
    H_out, W_out = H * factor, W * factor
    out_dtype = x.dtype if out_dtype is None else out_dtype

    vmem_budget, vmem_limit, precision, prefer_even = _chip_params()

    mat_dtype = x.dtype if x.dtype == jnp.bfloat16 else jnp.float32
    a_h_np = _interp_matrix(H, H_out)                # (H_out, H)
    a_w_np = _interp_matrix(W, W_out)                # (W_out, W)

    B = N * C
    in_isz = int(jnp.dtype(x.dtype).itemsize)
    out_isz = int(jnp.dtype(out_dtype).itemsize)
    HW, HoWo = H * W, H_out * W_out

    compiler_params = pltpu.CompilerParams(
        dimension_semantics=("parallel",),
        vmem_limit_bytes=vmem_limit,
    )

    use_kron = (W_out < 128) and (HW * HoWo * 4 <= 8 * 1024 * 1024)

    if use_kron:
        # Fused path: out_flat = x_flat @ kron(A_h, A_w)^T.  Lane-dense K and N.
        m = jnp.asarray(np.kron(a_h_np, a_w_np).T, dtype=mat_dtype)  # (HW, HoWo)
        xb = x.reshape(B, HW)
        tb_cap = _pick_tb_kron(HW, HoWo, in_isz, out_isz, vmem_budget)
        tb, nblocks = _choose_blocks(B, tb_cap, prefer_even=prefer_even)
        B_pad = nblocks * tb
        if B_pad != B:
            xb = jnp.pad(xb, ((0, B_pad - B), (0, 0)))

        cost = pl.CostEstimate(
            flops=2 * B_pad * HW * HoWo,
            transcendentals=0,
            bytes_accessed=B_pad * (HW * in_isz + HoWo * out_isz)
            + HW * HoWo * int(jnp.dtype(mat_dtype).itemsize),
        )

        out = pl.pallas_call(
            functools.partial(_kron_kernel, precision=precision),
            out_shape=jax.ShapeDtypeStruct((B_pad, HoWo), out_dtype),
            grid_spec=pltpu.PrefetchScalarGridSpec(
                num_scalar_prefetch=0,
                grid=(nblocks,),
                in_specs=[
                    pl.BlockSpec((HW, HoWo), lambda i: (0, 0)),      # kron matrix
                    pl.BlockSpec((tb, HW), lambda i: (i, 0)),        # input block
                ],
                out_specs=pl.BlockSpec((tb, HoWo), lambda i: (i, 0)),
            ),
            compiler_params=compiler_params,
            cost_estimate=cost,
        )(m, xb)

        if B_pad != B:
            out = out[:B]
        return out.reshape(N, C, H_out, W_out)

    # Separable fallback for large images (W_out >= 128): two big-M matmuls.
    a_w_t = jnp.asarray(a_w_np.T, dtype=mat_dtype)   # (W, W_out)
    a_h_t = jnp.asarray(a_h_np.T, dtype=jnp.float32)  # (H, H_out)
    xb = x.reshape(B, H, W)
    tb_cap = _pick_tb_separable(H, W, H_out, W_out, in_isz, out_isz, vmem_budget)
    tb, nblocks = _choose_blocks(B, tb_cap, prefer_even=prefer_even)
    B_pad = nblocks * tb
    if B_pad != B:
        xb = jnp.pad(xb, ((0, B_pad - B), (0, 0), (0, 0)))

    cost = pl.CostEstimate(
        flops=2 * B_pad * H * W * W_out + 2 * B_pad * H * H_out * W_out,
        transcendentals=0,
        bytes_accessed=B_pad * (H * W * in_isz + H_out * W_out * out_isz)
        + 4 * (W * W_out + H * H_out),
    )

    out = pl.pallas_call(
        functools.partial(_separable_kernel, precision=precision),
        out_shape=jax.ShapeDtypeStruct((B_pad, H_out, W_out), out_dtype),
        grid_spec=pltpu.PrefetchScalarGridSpec(
            num_scalar_prefetch=0,
            grid=(nblocks,),
            in_specs=[
                pl.BlockSpec((W, W_out), lambda i: (0, 0)),          # A_w^T
                pl.BlockSpec((H, H_out), lambda i: (0, 0)),          # A_h^T
                pl.BlockSpec((tb, H, W), lambda i: (i, 0, 0)),       # input block
            ],
            out_specs=pl.BlockSpec((tb, H_out, W_out), lambda i: (i, 0, 0)),
        ),
        compiler_params=compiler_params,
        cost_estimate=cost,
    )(a_w_t, a_h_t, xb)

    if B_pad != B:
        out = out[:B]
    return out.reshape(N, C, H_out, W_out)


# --------------------------------------------------------------------------- #
# Plain-JAX reference (align_corners=False, direct 2-tap lerp)
# --------------------------------------------------------------------------- #
def _upsample_ref(x: jax.Array, factor: int) -> jax.Array:
    N, C, H, W = x.shape
    H_out, W_out = H * factor, W * factor

    def taps(in_size, out_size):
        scale = in_size / out_size
        src = np.maximum((np.arange(out_size) + 0.5) * scale - 0.5, 0.0)
        i0 = np.floor(src).astype(np.int32)
        i1 = np.minimum(i0 + 1, in_size - 1)
        w1 = (src - i0).astype(np.float32)
        return i0, i1, w1

    hi0, hi1, hw1 = taps(H, H_out)
    wi0, wi1, ww1 = taps(W, W_out)
    xf = x.astype(jnp.float32)
    xh = xf[:, :, hi0, :] * (1.0 - hw1)[None, None, :, None] \
        + xf[:, :, hi1, :] * hw1[None, None, :, None]
    out = xh[:, :, :, wi0] * (1.0 - ww1)[None, None, None, :] \
        + xh[:, :, :, wi1] * ww1[None, None, None, :]
    return out.astype(x.dtype)


if __name__ == "__main__":
    key = jax.random.PRNGKey(0)
    x = jax.random.normal(key, (2, 4, 16, 16), dtype=jnp.float32)

    y = jax.block_until_ready(upsample_bilinear(x, factor=2))
    ref = _upsample_ref(x, 2)

    assert y.shape == (2, 4, 32, 32), y.shape
    err = float(jnp.max(jnp.abs(y.astype(jnp.float32) - ref.astype(jnp.float32))))
    assert err < 1e-4, f"max abs err {err}"

    print("KERNEL_OK")
</pallas_src>

<mosaic_0001>
module attributes {stable_mosaic.version = 11 : i64} {
  func.func @_kron_kernel(%arg0: i32, %arg1: memref<256x1024xf32, #tpu.memory_space<vmem>>, %arg2: memref<8x256xf32, #tpu.memory_space<vmem>>, %arg3: memref<8x1024xf32, #tpu.memory_space<vmem>>) attributes {dimension_semantics = [#tpu.dimension_semantics<parallel>], iteration_bounds = array<i64: 1>, scalar_prefetch = 0 : i64, scratch_operands = 0 : i64, tpu.core_type = #tpu.core_type<tc>, window_params = [{pipeline_mode = #tpu.pipeline_mode<synchronous>, transform_indices = @transform_0, window_bounds = array<i64: 256, 1024>}, {transform_indices = @transform_1, window_bounds = array<i64: 8, 256>}, {transform_indices = @transform_2, window_bounds = array<i64: 8, 1024>}]} {
    %c0 = arith.constant 0 : index
    %c0_0 = arith.constant 0 : index
    %0 = vector.load %arg2[%c0, %c0_0] : memref<8x256xf32, #tpu.memory_space<vmem>>, vector<8x256xf32>
    %c0_1 = arith.constant 0 : index
    %c0_2 = arith.constant 0 : index
    %1 = vector.load %arg1[%c0_1, %c0_2] : memref<256x1024xf32, #tpu.memory_space<vmem>>, vector<256x1024xf32>
    %cst = arith.constant dense<0.000000e+00> : vector<8x1024xf32>
    %2 = tpu.matmul %0, %1, %cst {dimension_numbers = #tpu.dot_dimension_numbers<[1], [0], [0], [1], [0, 0, 1, 1], [], []>, precision = #tpu.contract_precision<fp32>} : vector<8x256xf32>, vector<256x1024xf32>, vector<8x1024xf32> -> vector<8x1024xf32>
    %c0_3 = arith.constant 0 : index
    %c0_4 = arith.constant 0 : index
    %3 = vector.load %arg3[%c0_3, %c0_4] : memref<8x1024xf32, #tpu.memory_space<vmem>>, vector<8x1024xf32>
    tpu.vector_store %arg3[%c0_3, %c0_4], %2 {strides = array<i32>} : memref<8x1024xf32, #tpu.memory_space<vmem>>, vector<8x1024xf32>,
    return
  }
  func.func @transform_0(%arg0: i32) -> (i32, i32) {
    %c0_i32 = arith.constant 0 : i32
    %c0_i32_0 = arith.constant 0 : i32
    %c0_i32_1 = arith.constant 0 : i32
    return %c0_i32, %c0_i32_0 : i32, i32
  }
  func.func @transform_1(%arg0: i32) -> (i32, i32) {
    %c0_i32 = arith.constant 0 : i32
    %c0_i32_0 = arith.constant 0 : i32
    return %arg0, %c0_i32 : i32, i32
  }
  func.func @transform_2(%arg0: i32) -> (i32, i32) {
    %c0_i32 = arith.constant 0 : i32
    %c0_i32_0 = arith.constant 0 : i32
    return %arg0, %c0_i32 : i32, i32
  }
}

</mosaic_0001>

<llo_original>
// kernel: tpu_custom_call.1
$region0: #{tpu_custom_call.1}
  #allocation0 [shape = 'u32[]', space=smem, size = 0x4, offset = 0x4, fixed_abs, tag = 'smem constant byte address 0x4 - core index']
  #allocation1 [shape = 'u32[144,128]{1,0:T(1,128)}', space=vmem, size = 0x12000, scoped, tag = 'internal scratch']
  %s0 = inlined_call_operand.hbm [shape: f32[256,1024], index: 0, kind: input, shape index: {}]
  %s1 = inlined_call_operand.hbm [shape: f32[8,256], index: 1, kind: input, shape index: {}]
  %s2 = inlined_call_operand.hbm [shape: f32[8,1024], index: 2, kind: output, shape index: {}]
  %s3 = sld [smem:[#allocation0]]
  $region26: #{tpu_custom_call.1} parent=0
    _
  %s5 = ssub.s32 1, %s3
  %s6 = scalar_select 0, %s5, %s3
  $region1: #{tpu_custom_call.1} parent=0
    #allocation2 [shape = 'u8[1048576]{0}', space=vmem, size = 0x100000, scoped, tag = 'input window, operand 0, single buffered']
    #allocation3 [shape = 's32[1]{0}', space=sflag, size = 0x4, scoped, tag = 'scoped memory for tpu_custom_call.1']
    #allocation4 [shape = 's32[1]{0}', space=sflag, size = 0x4, scoped, tag = 'scoped memory for tpu_custom_call.1']
    #allocation5 [shape = 'u8[8192]{0}', space=vmem, size = 0x2000, scoped, tag = 'input window, operand 1, single buffered']
    #allocation6 [shape = 's32[1]{0}', space=sflag, size = 0x4, scoped, tag = 'scoped memory for tpu_custom_call.1']
    #allocation7 [shape = 'u8[32768]{0}', space=vmem, size = 0x8000, scoped, tag = 'output window, operand 0, single buffered']
    %7 = vsyncpa [#allocation3], 0
    %8 = vsyncpa [#allocation6], 0
    %9 = vsyncpa [#allocation4], 0
    // Predicated region
    $region2: #{tpu_custom_call.1} parent=1 // pred_check
      _
    $region3: #{tpu_custom_call.1} parent=1 // pred_check_branch
      %11 = sbr.rel (0) target = $region5
    $region4: #{tpu_custom_call.1} parent=1 // pred_region
      %s13 = ssub.s32 32768, 32768
      %14 = vsyncadd [#allocation3], %s13
      %s15 = sshll.u32 [#allocation2], 4
      %s16 = int_to_ptr.vmem [resolvable:$true] %s15
      %21 = dma.hbm_to_vmem [thread:$0]  %s0, 32768, %s16, [#allocation3], 1024, 1024, 64
    $region5: #{tpu_custom_call.1} parent=1 // pred_fallthru
      _
    // Predicated region
    $region6: #{tpu_custom_call.1} parent=1 // pred_check
      _
    $region7: #{tpu_custom_call.1} parent=1 // pred_check_branch
      %23 = sbr.rel (0) target = $region9
    $region8: #{tpu_custom_call.1} parent=1 // pred_region
      %s25 = ssub.s32 256, 256
      %26 = vsyncadd [#allocation6], %s25
      %s28 = sshll.u32 [#allocation5], 4
      %s29 = int_to_ptr.vmem [resolvable:$true] %s28
      %31 = dma.hbm_to_vmem [thread:$0]  %s1, 256, %s29, [#allocation6]
    $region9: #{tpu_custom_call.1} parent=1 // pred_fallthru
      _
    // Predicated region
    $region10: #{tpu_custom_call.1} parent=1 // pred_check
      _
    $region11: #{tpu_custom_call.1} parent=1 // pred_check_branch
      %33 = sbr.rel (0) target = $region13
    $region12: #{tpu_custom_call.1} parent=1 // pred_region
      %34 = dma.done [#allocation3], 32768
    $region13: #{tpu_custom_call.1} parent=1 // pred_fallthru
      _
    // Predicated region
    $region14: #{tpu_custom_call.1} parent=1 // pred_check
      _
    $region15: #{tpu_custom_call.1} parent=1 // pred_check_branch
      %36 = sbr.rel (0) target = $region17
    $region16: #{tpu_custom_call.1} parent=1 // pred_region
      %37 = dma.done [#allocation6], 256
    $region17: #{tpu_custom_call.1} parent=1 // pred_fallthru
      _
    %v38 = vld [vmem:[#allocation5] sm:$0xff]
    %v39 = vld [vmem:[#allocation5 + $0x8] sm:$0xff]
    %v40 = vld [vmem:[#allocation2] sm:$0xff]
    %v41 = vld [vmem:[#allocation2 + $0x8] sm:$0xff]
    %v42 = vld [vmem:[#allocation2 + $0x10] sm:$0xff]
    %v43 = vld [vmem:[#allocation2 + $0x18] sm:$0xff]
    %v44 = vld [vmem:[#allocation2 + $0x20] sm:$0xff]
    %v45 = vld [vmem:[#allocation2 + $0x28] sm:$0xff]
    %v46 = vld [vmem:[#allocation2 + $0x30] sm:$0xff]
    %v47 = vld [vmem:[#allocation2 + $0x38] sm:$0xff]
    %v48 = vld [vmem:[#allocation2 + $0x40] sm:$0xff]
    %v49 = vld [vmem:[#allocation2 + $0x48] sm:$0xff]
    %v50 = vld [vmem:[#allocation2 + $0x50] sm:$0xff]
    %v51 = vld [vmem:[#allocation2 + $0x58] sm:$0xff]
    %v52 = vld [vmem:[#allocation2 + $0x60] sm:$0xff]
    %v53 = vld [vmem:[#allocation2 + $0x68] sm:$0xff]
    %v54 = vld [vmem:[#allocation2 + $0x70] sm:$0xff]
    %v55 = vld [vmem:[#allocation2 + $0x78] sm:$0xff]
    %v56 = vld [vmem:[#allocation2 + $0x80] sm:$0xff]
    %v57 = vld [vmem:[#allocation2 + $0x88] sm:$0xff]
    %v58 = vld [vmem:[#allocation2 + $0x90] sm:$0xff]
    %v59 = vld [vmem:[#allocation2 + $0x98] sm:$0xff]
    %v60 = vld [vmem:[#allocation2 + $0xa0] sm:$0xff]
    %v61 = vld [vmem:[#allocation2 + $0xa8] sm:$0xff]
    %v62 = vld [vmem:[#allocation2 + $0xb0] sm:$0xff]
    %v63 = vld [vmem:[#allocation2 + $0xb8] sm:$0xff]
    %v64 = vld [vmem:[#allocation2 + $0xc0] sm:$0xff]
    %v65 = vld [vmem:[#allocation2 + $0xc8] sm:$0xff]
    %v66 = vld [vmem:[#allocation2 + $0xd0] sm:$0xff]
    %v67 = vld [vmem:[#allocation2 + $0xd8] sm:$0xff]
    %v68 = vld [vmem:[#allocation2 + $0xe0] sm:$0xff]
    %v69 = vld [vmem:[#allocation2 + $0xe8] sm:$0xff]
    %v70 = vld [vmem:[#allocation2 + $0xf0] sm:$0xff]
    %v71 = vld [vmem:[#allocation2 + $0xf8] sm:$0xff]
    %v72 = vld [vmem:[#allocation2 + $0x100] sm:$0xff]
    %v73 = vld [vmem:[#allocation2 + $0x108] sm:$0xff]
    %v74 = vld [vmem:[#allocation2 + $0x110] sm:$0xff]
    %v75 = vld [vmem:[#allocation2 + $0x118] sm:$0xff]
    %v76 = vld [vmem:[#allocation2 + $0x120] sm:$0xff]
    %v77 = vld [vmem:[#allocation2 + $0x128] sm:$0xff]
    %v78 = vld [vmem:[#allocation2 + $0x130] sm:$0xff]
    %v79 = vld [vmem:[#allocation2 + $0x138] sm:$0xff]
    %v80 = vld [vmem:[#allocation2 + $0x140] sm:$0xff]
    %v81 = vld [vmem:[#allocation2 + $0x148] sm:$0xff]
    %v82 = vld [vmem:[#allocation2 + $0x150] sm:$0xff]
    %v83 = vld [vmem:[#allocation2 + $0x158] sm:$0xff]
    %v84 = vld [vmem:[#allocation2 + $0x160] sm:$0xff]
    %v85 = vld [vmem:[#allocation2 + $0x168] sm:$0xff]
    %v86 = vld [vmem:[#allocation2 + $0x170] sm:$0xff]
    %v87 = vld [vmem:[#allocation2 + $0x178] sm:$0xff]
    %v88 = vld [vmem:[#allocation2 + $0x180] sm:$0xff]
    %v89 = vld [vmem:[#allocation2 + $0x188] sm:$0xff]
    %v90 = vld [vmem:[#allocation2 + $0x190] sm:$0xff]
    %v91 = vld [vmem:[#allocation2 + $0x198] sm:$0xff]
    %v92 = vld [vmem:[#allocation2 + $0x1a0] sm:$0xff]
    %v93 = vld [vmem:[#allocation2 + $0x1a8] sm:$0xff]
    %v94 = vld [vmem:[#allocation2 + $0x1b0] sm:$0xff]
    %v95 = vld [vmem:[#allocation2 + $0x1b8] sm:$0xff]
    %v96 = vld [vmem:[#allocation2 + $0x1c0] sm:$0xff]
    %v97 = vld [vmem:[#allocation2 + $0x1c8] sm:$0xff]
    %v98 = vld [vmem:[#allocation2 + $0x1d0] sm:$0xff]
    %v99 = vld [vmem:[#allocation2 + $0x1d8] sm:$0xff]
    %v100 = vld [vmem:[#allocation2 + $0x1e0] sm:$0xff]
    %v101 = vld [vmem:[#allocation2 + $0x1e8] sm:$0xff]
    %v102 = vld [vmem:[#allocation2 + $0x1f0] sm:$0xff]
    %v103 = vld [vmem:[#allocation2 + $0x1f8] sm:$0xff]
    %v104 = vld [vmem:[#allocation2 + $0x200] sm:$0xff]
    %v105 = vld [vmem:[#allocation2 + $0x208] sm:$0xff]
    %v106 = vld [vmem:[#allocation2 + $0x210] sm:$0xff]
    %v107 = vld [vmem:[#allocation2 + $0x218] sm:$0xff]
    %v108 = vld [vmem:[#allocation2 + $0x220] sm:$0xff]
    %v109 = vld [vmem:[#allocation2 + $0x228] sm:$0xff]
    %v110 = vld [vmem:[#allocation2 + $0x230] sm:$0xff]
    %v111 = vld [vmem:[#allocation2 + $0x238] sm:$0xff]
    %v112 = vld [vmem:[#allocation2 + $0x240] sm:$0xff]
    %v113 = vld [vmem:[#allocation2 + $0x248] sm:$0xff]
    %v114 = vld [vmem:[#allocation2 + $0x250] sm:$0xff]
    %v115 = vld [vmem:[#allocation2 + $0x258] sm:$0xff]
    %v116 = vld [vmem:[#allocation2 + $0x260] sm:$0xff]
    %v117 = vld [vmem:[#allocation2 + $0x268] sm:$0xff]
    %v118 = vld [vmem:[#allocation2 + $0x270] sm:$0xff]
    %v119 = vld [vmem:[#allocation2 + $0x278] sm:$0xff]
    %v120 = vld [vmem:[#allocation2 + $0x280] sm:$0xff]
    %v121 = vld [vmem:[#allocation2 + $0x288] sm:$0xff]
    %v122 = vld [vmem:[#allocation2 + $0x290] sm:$0xff]
    %v123 = vld [vmem:[#allocation2 + $0x298] sm:$0xff]
    %v124 = vld [vmem:[#allocation2 + $0x2a0] sm:$0xff]
    %v125 = vld [vmem:[#allocation2 + $0x2a8] sm:$0xff]
    %v126 = vld [vmem:[#allocation2 + $0x2b0] sm:$0xff]
    %v127 = vld [vmem:[#allocation2 + $0x2b8] sm:$0xff]
    %v128 = vld [vmem:[#allocation2 + $0x2c0] sm:$0xff]
    %v129 = vld [vmem:[#allocation2 + $0x2c8] sm:$0xff]
    %v130 = vld [vmem:[#allocation2 + $0x2d0] sm:$0xff]
    %v131 = vld [vmem:[#allocation2 + $0x2d8] sm:$0xff]
    %v132 = vld [vmem:[#allocation2 + $0x2e0] sm:$0xff]
    %v133 = vld [vmem:[#allocation2 + $0x2e8] sm:$0xff]
    %v134 = vld [vmem:[#allocation2 + $0x2f0] sm:$0xff]
    %v135 = vld [vmem:[#allocation2 + $0x2f8] sm:$0xff]
    %v136 = vld [vmem:[#allocation2 + $0x300] sm:$0xff]
    %v137 = vld [vmem:[#allocation2 + $0x308] sm:$0xff]
    %v138 = vld [vmem:[#allocation2 + $0x310] sm:$0xff]
    %v139 = vld [vmem:[#allocation2 + $0x318] sm:$0xff]
    %v140 = vld [vmem:[#allocation2 + $0x320] sm:$0xff]
    %v141 = vld [vmem:[#allocation2 + $0x328] sm:$0xff]
    %v142 = vld [vmem:[#allocation2 + $0x330] sm:$0xff]
    %v143 = vld [vmem:[#allocation2 + $0x338] sm:$0xff]
    %v144 = vld [vmem:[#allocation2 + $0x340] sm:$0xff]
    %v145 = vld [vmem:[#allocation2 + $0x348] sm:$0xff]
    %v146 = vld [vmem:[#allocation2 + $0x350] sm:$0xff]
    %v147 = vld [vmem:[#allocation2 + $0x358] sm:$0xff]
    %v148 = vld [vmem:[#allocation2 + $0x360] sm:$0xff]
    %v149 = vld [vmem:[#allocation2 + $0x368] sm:$0xff]
    %v150 = vld [vmem:[#allocation2 + $0x370] sm:$0xff]
    %v151 = vld [vmem:[#allocation2 + $0x378] sm:$0xff]
    %v152 = vld [vmem:[#allocation2 + $0x380] sm:$0xff]
    %v153 = vld [vmem:[#allocation2 + $0x388] sm:$0xff]
    %v154 = vld [vmem:[#allocation2 + $0x390] sm:$0xff]
    %v155 = vld [vmem:[#allocation2 + $0x398] sm:$0xff]
    %v156 = vld [vmem:[#allocation2 + $0x3a0] sm:$0xff]
    %v157 = vld [vmem:[#allocation2 + $0x3a8] sm:$0xff]
    %v158 = vld [vmem:[#allocation2 + $0x3b0] sm:$0xff]
    %v159 = vld [vmem:[#allocation2 + $0x3b8] sm:$0xff]
    %v160 = vld [vmem:[#allocation2 + $0x3c0] sm:$0xff]
    %v161 = vld [vmem:[#allocation2 + $0x3c8] sm:$0xff]
    %v162 = vld [vmem:[#allocation2 + $0x3d0] sm:$0xff]
    %v163 = vld [vmem:[#allocation2 + $0x3d8] sm:$0xff]
    %v164 = vld [vmem:[#allocation2 + $0x3e0] sm:$0xff]
    %v165 = vld [vmem:[#allocation2 + $0x3e8] sm:$0xff]
    %v166 = vld [vmem:[#allocation2 + $0x3f0] sm:$0xff]
    %v167 = vld [vmem:[#allocation2 + $0x3f8] sm:$0xff]
    %v168 = vld [vmem:[#allocation2 + $0x400] sm:$0xff]
    %v169 = vld [vmem:[#allocation2 + $0x408] sm:$0xff]
    %v170 = vld [vmem:[#allocation2 + $0x410] sm:$0xff]
    %v171 = vld [vmem:[#allocation2 + $0x418] sm:$0xff]
    %v172 = vld [vmem:[#allocation2 + $0x420] sm:$0xff]
    %v173 = vld [vmem:[#allocation2 + $0x428] sm:$0xff]
    %v174 = vld [vmem:[#allocation2 + $0x430] sm:$0xff]
    %v175 = vld [vmem:[#allocation2 + $0x438] sm:$0xff]
    %v176 = vld [vmem:[#allocation2 + $0x440] sm:$0xff]
    %v177 = vld [vmem:[#allocation2 + $0x448] sm:$0xff]
    %v178 = vld [vmem:[#allocation2 + $0x450] sm:$0xff]
    %v179 = vld [vmem:[#allocation2 + $0x458] sm:$0xff]
    %v180 = vld [vmem:[#allocation2 + $0x460] sm:$0xff]
    %v181 = vld [vmem:[#allocation2 + $0x468] sm:$0xff]
    %v182 = vld [vmem:[#allocation2 + $0x470] sm:$0xff]
    %v183 = vld [vmem:[#allocation2 + $0x478] sm:$0xff]
    %v184 = vld [vmem:[#allocation2 + $0x480] sm:$0xff]
    %v185 = vld [vmem:[#allocation2 + $0x488] sm:$0xff]
    %v186 = vld [vmem:[#allocation2 + $0x490] sm:$0xff]
    %v187 = vld [vmem:[#allocation2 + $0x498] sm:$0xff]
    %v188 = vld [vmem:[#allocation2 + $0x4a0] sm:$0xff]
    %v189 = vld [vmem:[#allocation2 + $0x4a8] sm:$0xff]
    %v190 = vld [vmem:[#allocation2 + $0x4b0] sm:$0xff]
    %v191 = vld [vmem:[#allocation2 + $0x4b8] sm:$0xff]
    %v192 = vld [vmem:[#allocation2 + $0x4c0] sm:$0xff]
    %v193 = vld [vmem:[#allocation2 + $0x4c8] sm:$0xff]
    %v194 = vld [vmem:[#allocation2 + $0x4d0] sm:$0xff]
    %v195 = vld [vmem:[#allocation2 + $0x4d8] sm:$0xff]
    %v196 = vld [vmem:[#allocation2 + $0x4e0] sm:$0xff]
    %v197 = vld [vmem:[#allocation2 + $0x4e8] sm:$0xff]
    %v198 = vld [vmem:[#allocation2 + $0x4f0] sm:$0xff]
    %v199 = vld [vmem:[#allocation2 + $0x4f8] sm:$0xff]
    %v200 = vld [vmem:[#allocation2 + $0x500] sm:$0xff]
    %v201 = vld [vmem:[#allocation2 + $0x508] sm:$0xff]
    %v202 = vld [vmem:[#allocation2 + $0x510] sm:$0xff]
    %v203 = vld [vmem:[#allocation2 + $0x518] sm:$0xff]
    %v204 = vld [vmem:[#allocation2 + $0x520] sm:$0xff]
    %v205 = vld [vmem:[#allocation2 + $0x528] sm:$0xff]
    %v206 = vld [vmem:[#allocation2 + $0x530] sm:$0xff]
    %v207 = vld [vmem:[#allocation2 + $0x538] sm:$0xff]
    %v208 = vld [vmem:[#allocation2 + $0x540] sm:$0xff]
    %v209 = vld [vmem:[#allocation2 + $0x548] sm:$0xff]
    %v210 = vld [vmem:[#allocation2 + $0x550] sm:$0xff]
    %v211 = vld [vmem:[#allocation2 + $0x558] sm:$0xff]
    %v212 = vld [vmem:[#allocation2 + $0x560] sm:$0xff]
    %v213 = vld [vmem:[#allocation2 + $0x568] sm:$0xff]
    %v214 = vld [vmem:[#allocation2 + $0x570] sm:$0xff]
    %v215 = vld [vmem:[#allocation2 + $0x578] sm:$0xff]
    %v216 = vld [vmem:[#allocation2 + $0x580] sm:$0xff]
    %v217 = vld [vmem:[#allocation2 + $0x588] sm:$0xff]
    %v218 = vld [vmem:[#allocation2 + $0x590] sm:$0xff]
    %v219 = vld [vmem:[#allocation2 + $0x598] sm:$0xff]
    %v220 = vld [vmem:[#allocation2 + $0x5a0] sm:$0xff]
    %v221 = vld [vmem:[#allocation2 + $0x5a8] sm:$0xff]
    %v222 = vld [vmem:[#allocation2 + $0x5b0] sm:$0xff]
    %v223 = vld [vmem:[#allocation2 + $0x5b8] sm:$0xff]
    %v224 = vld [vmem:[#allocation2 + $0x5c0] sm:$0xff]
    %v225 = vld [vmem:[#allocation2 + $0x5c8] sm:$0xff]
    %v226 = vld [vmem:[#allocation2 + $0x5d0] sm:$0xff]
    %v227 = vld [vmem:[#allocation2 + $0x5d8] sm:$0xff]
    %v228 = vld [vmem:[#allocation2 + $0x5e0] sm:$0xff]
    %v229 = vld [vmem:[#allocation2 + $0x5e8] sm:$0xff]
    %v230 = vld [vmem:[#allocation2 + $0x5f0] sm:$0xff]
    %v231 = vld [vmem:[#allocation2 + $0x5f8] sm:$0xff]
    %v232 = vld [vmem:[#allocation2 + $0x600] sm:$0xff]
    %v233 = vld [vmem:[#allocation2 + $0x608] sm:$0xff]
    %v234 = vld [vmem:[#allocation2 + $0x610] sm:$0xff]
    %v235 = vld [vmem:[#allocation2 + $0x618] sm:$0xff]
    %v236 = vld [vmem:[#allocation2 + $0x620] sm:$0xff]
    %v237 = vld [vmem:[#allocation2 + $0x628] sm:$0xff]
    %v238 = vld [vmem:[#allocation2 + $0x630] sm:$0xff]
    %v239 = vld [vmem:[#allocation2 + $0x638] sm:$0xff]
    %v240 = vld [vmem:[#allocation2 + $0x640] sm:$0xff]
    %v241 = vld [vmem:[#allocation2 + $0x648] sm:$0xff]
    %v242 = vld [vmem:[#allocation2 + $0x650] sm:$0xff]
    %v243 = vld [vmem:[#allocation2 + $0x658] sm:$0xff]
    %v244 = vld [vmem:[#allocation2 + $0x660] sm:$0xff]
    %v245 = vld [vmem:[#allocation2 + $0x668] sm:$0xff]
    %v246 = vld [vmem:[#allocation2 + $0x670] sm:$0xff]
    %v247 = vld [vmem:[#allocation2 + $0x678] sm:$0xff]
    %v248 = vld [vmem:[#allocation2 + $0x680] sm:$0xff]
    %v249 = vld [vmem:[#allocation2 + $0x688] sm:$0xff]
    %v250 = vld [vmem:[#allocation2 + $0x690] sm:$0xff]
    %v251 = vld [vmem:[#allocation2 + $0x698] sm:$0xff]
    %v252 = vld [vmem:[#allocation2 + $0x6a0] sm:$0xff]
    %v253 = vld [vmem:[#allocation2 + $0x6a8] sm:$0xff]
    %v254 = vld [vmem:[#allocation2 + $0x6b0] sm:$0xff]
    %v255 = vld [vmem:[#allocation2 + $0x6b8] sm:$0xff]
    %v256 = vld [vmem:[#allocation2 + $0x6c0] sm:$0xff]
    %v257 = vld [vmem:[#allocation2 + $0x6c8] sm:$0xff]
    %v258 = vld [vmem:[#allocation2 + $0x6d0] sm:$0xff]
    %v259 = vld [vmem:[#allocation2 + $0x6d8] sm:$0xff]
    %v260 = vld [vmem:[#allocation2 + $0x6e0] sm:$0xff]
    %v261 = vld [vmem:[#allocation2 + $0x6e8] sm:$0xff]
    %v262 = vld [vmem:[#allocation2 + $0x6f0] sm:$0xff]
    %v263 = vld [vmem:[#allocation2 + $0x6f8] sm:$0xff]
    %v264 = vld [vmem:[#allocation2 + $0x700] sm:$0xff]
    %v265 = vld [vmem:[#allocation2 + $0x708] sm:$0xff]
    %v266 = vld [vmem:[#allocation2 + $0x710] sm:$0xff]
    %v267 = vld [vmem:[#allocation2 + $0x718] sm:$0xff]
    %v268 = vld [vmem:[#allocation2 + $0x720] sm:$0xff]
    %v269 = vld [vmem:[#allocation2 + $0x728] sm:$0xff]
    %v270 = vld [vmem:[#allocation2 + $0x730] sm:$0xff]
    %v271 = vld [vmem:[#allocation2 + $0x738] sm:$0xff]
    %v272 = vld [vmem:[#allocation2 + $0x740] sm:$0xff]
    %v273 = vld [vmem:[#allocation2 + $0x748] sm:$0xff]
    %v274 = vld [vmem:[#allocation2 + $0x750] sm:$0xff]
    %v275 = vld [vmem:[#allocation2 + $0x758] sm:$0xff]
    %v276 = vld [vmem:[#allocation2 + $0x760] sm:$0xff]
    %v277 = vld [vmem:[#allocation2 + $0x768] sm:$0xff]
    %v278 = vld [vmem:[#allocation2 + $0x770] sm:$0xff]
    %v279 = vld [vmem:[#allocation2 + $0x778] sm:$0xff]
    %v280 = vld [vmem:[#allocation2 + $0x780] sm:$0xff]
    %v281 = vld [vmem:[#allocation2 + $0x788] sm:$0xff]
    %v282 = vld [vmem:[#allocation2 + $0x790] sm:$0xff]
    %v283 = vld [vmem:[#allocation2 + $0x798] sm:$0xff]
    %v284 = vld [vmem:[#allocation2 + $0x7a0] sm:$0xff]
    %v285 = vld [vmem:[#allocation2 + $0x7a8] sm:$0xff]
    %v286 = vld [vmem:[#allocation2 + $0x7b0] sm:$0xff]
    %v287 = vld [vmem:[#allocation2 + $0x7b8] sm:$0xff]
    %v288 = vld [vmem:[#allocation2 + $0x7c0] sm:$0xff]
    %v289 = vld [vmem:[#allocation2 + $0x7c8] sm:$0xff]
    %v290 = vld [vmem:[#allocation2 + $0x7d0] sm:$0xff]
    %v291 = vld [vmem:[#allocation2 + $0x7d8] sm:$0xff]
    %v292 = vld [vmem:[#allocation2 + $0x7e0] sm:$0xff]
    %v293 = vld [vmem:[#allocation2 + $0x7e8] sm:$0xff]
    %v294 = vld [vmem:[#allocation2 + $0x7f0] sm:$0xff]
    %v295 = vld [vmem:[#allocation2 + $0x7f8] sm:$0xff]
    %v296 = vand.u32 %v161, 4294901760
    %297 = vmatprep.subr.mxu0 %v296
    %v298 = vand.u32 %v160, 4294901760
    %299 = vmatpush1.msra.mxu0 %v298
    %v300 = vand.u32 %v153, 4294901760
    %301 = vmatprep.subr.mxu0 %v300
    %v302 = vand.u32 %v152, 4294901760
    %303 = vmatpush1.msra.mxu0 %v302
    %v304 = vand.u32 %v145, 4294901760
    %305 = vmatprep.subr.mxu0 %v304
    %v306 = vand.u32 %v144, 4294901760
    %307 = vmatpush1.msra.mxu0 %v306
    %v308 = vand.u32 %v137, 4294901760
    %309 = vmatprep.subr.mxu0 %v308
    %v310 = vand.u32 %v136, 4294901760
    %311 = vmatpush1.msra.mxu0 %v310
    %v312 = vand.u32 %v129, 4294901760
    %313 = vmatprep.subr.mxu0 %v312
    %v314 = vand.u32 %v128, 4294901760
    %315 = vmatpush1.msra.mxu0 %v314
    %v316 = vand.u32 %v121, 4294901760
    %317 = vmatprep.subr.mxu0 %v316
    %v318 = vand.u32 %v120, 4294901760
    %319 = vmatpush1.msra.mxu0 %v318
    %v320 = vand.u32 %v113, 4294901760
    %321 = vmatprep.subr.mxu0 %v320
    %v322 = vand.u32 %v112, 4294901760
    %323 = vmatpush1.msra.mxu0 %v322
    %v324 = vand.u32 %v105, 4294901760
    %325 = vmatprep.subr.mxu0 %v324
    %v326 = vand.u32 %v104, 4294901760
    %327 = vmatpush1.msra.mxu0 %v326
    %v328 = vand.u32 %v97, 4294901760
    %329 = vmatprep.subr.mxu0 %v328
    %v330 = vand.u32 %v96, 4294901760
    %331 = vmatpush1.msra.mxu0 %v330
    %v332 = vand.u32 %v89, 4294901760
    %333 = vmatprep.subr.mxu0 %v332
    %v334 = vand.u32 %v88, 4294901760
    %335 = vmatpush1.msra.mxu0 %v334
    %v336 = vand.u32 %v81, 4294901760
    %337 = vmatprep.subr.mxu0 %v336
    %v338 = vand.u32 %v80, 4294901760
    %339 = vmatpush1.msra.mxu0 %v338
    %v340 = vand.u32 %v73, 4294901760
    %341 = vmatprep.subr.mxu0 %v340
    %v342 = vand.u32 %v72, 4294901760
    %343 = vmatpush1.msra.mxu0 %v342
    %v344 = vand.u32 %v65, 4294901760
    %345 = vmatprep.subr.mxu0 %v344
    %v346 = vand.u32 %v64, 4294901760
    %347 = vmatpush1.msra.mxu0 %v346
    %v348 = vand.u32 %v57, 4294901760
    %349 = vmatprep.subr.mxu0 %v348
    %v350 = vand.u32 %v56, 4294901760
    %351 = vmatpush1.msra.mxu0 %v350
    %v352 = vand.u32 %v49, 4294901760
    %353 = vmatprep.subr.mxu0 %v352
    %v354 = vand.u32 %v48, 4294901760
    %355 = vmatpush1.msra.mxu0 %v354
    %v356 = vand.u32 %v41, 4294901760
    %357 = vmatprep.subr.mxu0 %v356
    %v358 = vand.u32 %v40, 4294901760
    %359 = vmatpush1.msra.mxu0 %v358
    %v360 = vand.u32 %v289, 4294901760
    %361 = vmatprep.subr.mxu0 %v360
    %v362 = vand.u32 %v288, 4294901760
    %363 = vmatpush2.msra.mxu0 %v362
    %v364 = vand.u32 %v281, 4294901760
    %365 = vmatprep.subr.mxu0 %v364
    %v366 = vand.u32 %v280, 4294901760
    %367 = vmatpush2.msra.mxu0 %v366
    %v368 = vand.u32 %v273, 4294901760
    %369 = vmatprep.subr.mxu0 %v368
    %v370 = vand.u32 %v272, 4294901760
    %371 = vmatpush2.msra.mxu0 %v370
    %v372 = vand.u32 %v265, 4294901760
    %373 = vmatprep.subr.mxu0 %v372
    %v374 = vand.u32 %v264, 4294901760
    %375 = vmatpush2.msra.mxu0 %v374
    %v376 = vand.u32 %v257, 4294901760
    %377 = vmatprep.subr.mxu0 %v376
    %v378 = vand.u32 %v256, 4294901760
    %379 = vmatpush2.msra.mxu0 %v378
    %v380 = vand.u32 %v249, 4294901760
    %381 = vmatprep.subr.mxu0 %v380
    %v382 = vand.u32 %v248, 4294901760
    %383 = vmatpush2.msra.mxu0 %v382
    %v384 = vand.u32 %v241, 4294901760
    %385 = vmatprep.subr.mxu0 %v384
    %v386 = vand.u32 %v240, 4294901760
    %387 = vmatpush2.msra.mxu0 %v386
    %v388 = vand.u32 %v233, 4294901760
    %389 = vmatprep.subr.mxu0 %v388
    %v390 = vand.u32 %v232, 4294901760
    %391 = vmatpush2.msra.mxu0 %v390
    %v392 = vand.u32 %v225, 4294901760
    %393 = vmatprep.subr.mxu0 %v392
    %v394 = vand.u32 %v224, 4294901760
    %395 = vmatpush2.msra.mxu0 %v394
    %v396 = vand.u32 %v217, 4294901760
    %397 = vmatprep.subr.mxu0 %v396
    %v398 = vand.u32 %v216, 4294901760
    %399 = vmatpush2.msra.mxu0 %v398
    %v400 = vand.u32 %v209, 4294901760
    %401 = vmatprep.subr.mxu0 %v400
    %v402 = vand.u32 %v208, 4294901760
    %403 = vmatpush2.msra.mxu0 %v402
    %v404 = vand.u32 %v201, 4294901760
    %405 = vmatprep.subr.mxu0 %v404
    %v406 = vand.u32 %v200, 4294901760
    %407 = vmatpush2.msra.mxu0 %v406
    %v408 = vand.u32 %v193, 4294901760
    %409 = vmatprep.subr.mxu0 %v408
    %v410 = vand.u32 %v192, 4294901760
    %411 = vmatpush2.msra.mxu0 %v410
    %v412 = vand.u32 %v185, 4294901760
    %413 = vmatprep.subr.mxu0 %v412
    %v414 = vand.u32 %v184, 4294901760
    %415 = vmatpush2.msra.mxu0 %v414
    %v416 = vand.u32 %v177, 4294901760
    %417 = vmatprep.subr.mxu0 %v416
    %v418 = vand.u32 %v176, 4294901760
    %419 = vmatpush2.msra.mxu0 %v418
    %v420 = vand.u32 %v169, 4294901760
    %421 = vmatprep.subr.mxu0 %v420
    %v422 = vand.u32 %v168, 4294901760
    %423 = vmatpush2.msra.mxu0 %v422
    %v424 = vand.u32 %v39, 4294901760
    %v425 = vsub.f32 %v39, %v424
    %v426 = vand.u32 %v425, 4294901760
    %v427 = vsub.f32 %v425, %v426
    %v428 = vand.u32 %v427, 4294901760
    %429 = vmatprep.mubr.f32.mxu0 %v428
    %v430 = vand.u32 %v38, 4294901760
    %v431 = vsub.f32 %v38, %v430
    %v432 = vand.u32 %v431, 4294901760
    %v433 = vsub.f32 %v431, %v432
    %v434 = vand.u32 %v433, 4294901760
    %435 = vmatmul.mubr.f32.gmra.mxu0 %v434
    %v436 = vpop.f32.mrf.mxu0
    %v437 = vadd.f32 0.0, %v436
    %v438 = vpop.f32.mrf.mxu0
    %v439 = vadd.f32 0.0, %v438
    %440 = vdwg.mxu0
    %v441 = vand.u32 %v161, 4294901760
    %v442 = vsub.f32 %v161, %v441
    %v443 = vand.u32 %v442, 4294901760
    %v444 = vsub.f32 %v442, %v443
    %v445 = vand.u32 %v444, 4294901760
    %446 = vmatprep.subr.mxu0 %v445
    %v447 = vand.u32 %v160, 4294901760
    %v448 = vsub.f32 %v160, %v447
    %v449 = vand.u32 %v448, 4294901760
    %v450 = vsub.f32 %v448, %v449
    %v451 = vand.u32 %v450, 4294901760
    %452 = vmatpush1.msra.mxu0 %v451
    %v453 = vand.u32 %v153, 4294901760
    %v454 = vsub.f32 %v153, %v453
    %v455 = vand.u32 %v454, 4294901760
    %v456 = vsub.f32 %v454, %v455
    %v457 = vand.u32 %v456, 4294901760
    %458 = vmatprep.subr.mxu0 %v457
    %v459 = vand.u32 %v152, 4294901760
    %v460 = vsub.f32 %v152, %v459
    %v461 = vand.u32 %v460, 4294901760
    %v462 = vsub.f32 %v460, %v461
    %v463 = vand.u32 %v462, 4294901760
    %464 = vmatpush1.msra.mxu0 %v463
    %v465 = vand.u32 %v145, 4294901760
    %v466 = vsub.f32 %v145, %v465
    %v467 = vand.u32 %v466, 4294901760
    %v468 = vsub.f32 %v466, %v467
    %v469 = vand.u32 %v468, 4294901760
    %470 = vmatprep.subr.mxu0 %v469
    %v471 = vand.u32 %v144, 4294901760
    %v472 = vsub.f32 %v144, %v471
    %v473 = vand.u32 %v472, 4294901760
    %v474 = vsub.f32 %v472, %v473
    %v475 = vand.u32 %v474, 4294901760
    %476 = vmatpush1.msra.mxu0 %v475
    %v477 = vand.u32 %v137, 4294901760
    %v478 = vsub.f32 %v137, %v477
    %v479 = vand.u32 %v478, 4294901760
    %v480 = vsub.f32 %v478, %v479
    %v481 = vand.u32 %v480, 4294901760
    %482 = vmatprep.subr.mxu0 %v481
    %v483 = vand.u32 %v136, 4294901760
    %v484 = vsub.f32 %v136, %v483
    %v485 = vand.u32 %v484, 4294901760
    %v486 = vsub.f32 %v484, %v485
    %v487 = vand.u32 %v486, 4294901760
    %488 = vmatpush1.msra.mxu0 %v487
    %v489 = vand.u32 %v129, 4294901760
    %v490 = vsub.f32 %v129, %v489
    %v491 = vand.u32 %v490, 4294901760
    %v492 = vsub.f32 %v490, %v491
    %v493 = vand.u32 %v492, 4294901760
    %494 = vmatprep.subr.mxu0 %v493
    %v495 = vand.u32 %v128, 4294901760
    %v496 = vsub.f32 %v128, %v495
    %v497 = vand.u32 %v496, 4294901760
    %v498 = vsub.f32 %v496, %v497
    %v499 = vand.u32 %v498, 4294901760
    %500 = vmatpush1.msra.mxu0 %v499
    %v501 = vand.u32 %v121, 4294901760
    %v502 = vsub.f32 %v121, %v501
    %v503 = vand.u32 %v502, 4294901760
    %v504 = vsub.f32 %v502, %v503
    %v505 = vand.u32 %v504, 4294901760
    %506 = vmatprep.subr.mxu0 %v505
    %v507 = vand.u32 %v120, 4294901760
    %v508 = vsub.f32 %v120, %v507
    %v509 = vand.u32 %v508, 4294901760
    %v510 = vsub.f32 %v508, %v509
    %v511 = vand.u32 %v510, 4294901760
    %512 = vmatpush1.msra.mxu0 %v511
    %v513 = vand.u32 %v113, 4294901760
    %v514 = vsub.f32 %v113, %v513
    %v515 = vand.u32 %v514, 4294901760
    %v516 = vsub.f32 %v514, %v515
    %v517 = vand.u32 %v516, 4294901760
    %518 = vmatprep.subr.mxu0 %v517
    %v519 = vand.u32 %v112, 4294901760
    %v520 = vsub.f32 %v112, %v519
    %v521 = vand.u32 %v520, 4294901760
    %v522 = vsub.f32 %v520, %v521
    %v523 = vand.u32 %v522, 4294901760
    %524 = vmatpush1.msra.mxu0 %v523
    %v525 = vand.u32 %v105, 4294901760
    %v526 = vsub.f32 %v105, %v525
    %v527 = vand.u32 %v526, 4294901760
    %v528 = vsub.f32 %v526, %v527
    %v529 = vand.u32 %v528, 4294901760
    %530 = vmatprep.subr.mxu0 %v529
    %v531 = vand.u32 %v104, 4294901760
    %v532 = vsub.f32 %v104, %v531
    %v533 = vand.u32 %v532, 4294901760
    %v534 = vsub.f32 %v532, %v533
    %v535 = vand.u32 %v534, 4294901760
    %536 = vmatpush1.msra.mxu0 %v535
    %v537 = vand.u32 %v97, 4294901760
    %v538 = vsub.f32 %v97, %v537
    %v539 = vand.u32 %v538, 4294901760
    %v540 = vsub.f32 %v538, %v539
    %v541 = vand.u32 %v540, 4294901760
    %542 = vmatprep.subr.mxu0 %v541
    %v543 = vand.u32 %v96, 4294901760
    %v544 = vsub.f32 %v96, %v543
    %v545 = vand.u32 %v544, 4294901760
    %v546 = vsub.f32 %v544, %v545
    %v547 = vand.u32 %v546, 4294901760
    %548 = vmatpush1.msra.mxu0 %v547
    %v549 = vand.u32 %v89, 4294901760
    %v550 = vsub.f32 %v89, %v549
    %v551 = vand.u32 %v550, 4294901760
    %v552 = vsub.f32 %v550, %v551
    %v553 = vand.u32 %v552, 4294901760
    %554 = vmatprep.subr.mxu0 %v553
    %v555 = vand.u32 %v88, 4294901760
    %v556 = vsub.f32 %v88, %v555
    %v557 = vand.u32 %v556, 4294901760
    %v558 = vsub.f32 %v556, %v557
    %v559 = vand.u32 %v558, 4294901760
    %560 = vmatpush1.msra.mxu0 %v559
    %v561 = vand.u32 %v81, 4294901760
    %v562 = vsub.f32 %v81, %v561
    %v563 = vand.u32 %v562, 4294901760
    %v564 = vsub.f32 %v562, %v563
    %v565 = vand.u32 %v564, 4294901760
    %566 = vmatprep.subr.mxu0 %v565
    %v567 = vand.u32 %v80, 4294901760
    %v568 = vsub.f32 %v80, %v567
    %v569 = vand.u32 %v568, 4294901760
    %v570 = vsub.f32 %v568, %v569
    %v571 = vand.u32 %v570, 4294901760
    %572 = vmatpush1.msra.mxu0 %v571
    %v573 = vand.u32 %v73, 4294901760
    %v574 = vsub.f32 %v73, %v573
    %v575 = vand.u32 %v574, 4294901760
    %v576 = vsub.f32 %v574, %v575
    %v577 = vand.u32 %v576, 4294901760
    %578 = vmatprep.subr.mxu0 %v577
    %v579 = vand.u32 %v72, 4294901760
    %v580 = vsub.f32 %v72, %v579
    %v581 = vand.u32 %v580, 4294901760
    %v582 = vsub.f32 %v580, %v581
    %v583 = vand.u32 %v582, 4294901760
    %584 = vmatpush1.msra.mxu0 %v583
    %v585 = vand.u32 %v65, 4294901760
    %v586 = vsub.f32 %v65, %v585
    %v587 = vand.u32 %v586, 4294901760
    %v588 = vsub.f32 %v586, %v587
    %v589 = vand.u32 %v588, 4294901760
    %590 = vmatprep.subr.mxu0 %v589
    %v591 = vand.u32 %v64, 4294901760
    %v592 = vsub.f32 %v64, %v591
    %v593 = vand.u32 %v592, 4294901760
    %v594 = vsub.f32 %v592, %v593
    %v595 = vand.u32 %v594, 4294901760
    %596 = vmatpush1.msra.mxu0 %v595
    %v597 = vand.u32 %v57, 4294901760
    %v598 = vsub.f32 %v57, %v597
    %v599 = vand.u32 %v598, 4294901760
    %v600 = vsub.f32 %v598, %v599
    %v601 = vand.u32 %v600, 4294901760
    %602 = vmatprep.subr.mxu0 %v601
    %v603 = vand.u32 %v56, 4294901760
    %v604 = vsub.f32 %v56, %v603
    %v605 = vand.u32 %v604, 4294901760
    %v606 = vsub.f32 %v604, %v605
    %v607 = vand.u32 %v606, 4294901760
    %608 = vmatpush1.msra.mxu0 %v607
    %v609 = vand.u32 %v49, 4294901760
    %v610 = vsub.f32 %v49, %v609
    %v611 = vand.u32 %v610, 4294901760
    %v612 = vsub.f32 %v610, %v611
    %v613 = vand.u32 %v612, 4294901760
    %614 = vmatprep.subr.mxu0 %v613
    %v615 = vand.u32 %v48, 4294901760
    %v616 = vsub.f32 %v48, %v615
    %v617 = vand.u32 %v616, 4294901760
    %v618 = vsub.f32 %v616, %v617
    %v619 = vand.u32 %v618, 4294901760
    %620 = vmatpush1.msra.mxu0 %v619
    %v621 = vand.u32 %v41, 4294901760
    %v622 = vsub.f32 %v41, %v621
    %v623 = vand.u32 %v622, 4294901760
    %v624 = vsub.f32 %v622, %v623
    %v625 = vand.u32 %v624, 4294901760
    %626 = vmatprep.subr.mxu0 %v625
    %v627 = vand.u32 %v40, 4294901760
    %v628 = vsub.f32 %v40, %v627
    %v629 = vand.u32 %v628, 4294901760
    %v630 = vsub.f32 %v628, %v629
    %v631 = vand.u32 %v630, 4294901760
    %632 = vmatpush1.msra.mxu0 %v631
    %v633 = vand.u32 %v289, 4294901760
    %v634 = vsub.f32 %v289, %v633
    %v635 = vand.u32 %v634, 4294901760
    %v636 = vsub.f32 %v634, %v635
    %v637 = vand.u32 %v636, 4294901760
    %638 = vmatprep.subr.mxu0 %v637
    %v639 = vand.u32 %v288, 4294901760
    %v640 = vsub.f32 %v288, %v639
    %v641 = vand.u32 %v640, 4294901760
    %v642 = vsub.f32 %v640, %v641
    %v643 = vand.u32 %v642, 4294901760
    %644 = vmatpush2.msra.mxu0 %v643
    %v645 = vand.u32 %v281, 4294901760
    %v646 = vsub.f32 %v281, %v645
    %v647 = vand.u32 %v646, 4294901760
    %v648 = vsub.f32 %v646, %v647
    %v649 = vand.u32 %v648, 4294901760
    %650 = vmatprep.subr.mxu0 %v649
    %v651 = vand.u32 %v280, 4294901760
    %v652 = vsub.f32 %v280, %v651
    %v653 = vand.u32 %v652, 4294901760
    %v654 = vsub.f32 %v652, %v653
    %v655 = vand.u32 %v654, 4294901760
    %656 = vmatpush2.msra.mxu0 %v655
    %v657 = vand.u32 %v273, 4294901760
    %v658 = vsub.f32 %v273, %v657
    %v659 = vand.u32 %v658, 4294901760
    %v660 = vsub.f32 %v658, %v659
    %v661 = vand.u32 %v660, 4294901760
    %662 = vmatprep.subr.mxu0 %v661
    %v663 = vand.u32 %v272, 4294901760
    %v664 = vsub.f32 %v272, %v663
    %v665 = vand.u32 %v664, 4294901760
    %v666 = vsub.f32 %v664, %v665
    %v667 = vand.u32 %v666, 4294901760
    %668 = vmatpush2.msra.mxu0 %v667
    %v669 = vand.u32 %v265, 4294901760
    %v670 = vsub.f32 %v265, %v669
    %v671 = vand.u32 %v670, 4294901760
    %v672 = vsub.f32 %v670, %v671
    %v673 = vand.u32 %v672, 4294901760
    %674 = vmatprep.subr.mxu0 %v673
    %v675 = vand.u32 %v264, 4294901760
    %v676 = vsub.f32 %v264, %v675
    %v677 = vand.u32 %v676, 4294901760
    %v678 = vsub.f32 %v676, %v677
    %v679 = vand.u32 %v678, 4294901760
    %680 = vmatpush2.msra.mxu0 %v679
    %v681 = vand.u32 %v257, 4294901760
    %v682 = vsub.f32 %v257, %v681
    %v683 = vand.u32 %v682, 4294901760
    %v684 = vsub.f32 %v682, %v683
    %v685 = vand.u32 %v684, 4294901760
    %686 = vmatprep.subr.mxu0 %v685
    %v687 = vand.u32 %v256, 4294901760
    %v688 = vsub.f32 %v256, %v687
    %v689 = vand.u32 %v688, 4294901760
    %v690 = vsub.f32 %v688, %v689
    %v691 = vand.u32 %v690, 4294901760
    %692 = vmatpush2.msra.mxu0 %v691
    %v693 = vand.u32 %v249, 4294901760
    %v694 = vsub.f32 %v249, %v693
    %v695 = vand.u32 %v694, 4294901760
    %v696 = vsub.f32 %v694, %v695
    %v697 = vand.u32 %v696, 4294901760
    %698 = vmatprep.subr.mxu0 %v697
    %v699 = vand.u32 %v248, 4294901760
    %v700 = vsub.f32 %v248, %v699
    %v701 = vand.u32 %v700, 4294901760
    %v702 = vsub.f32 %v700, %v701
    %v703 = vand.u32 %v702, 4294901760
    %704 = vmatpush2.msra.mxu0 %v703
    %v705 = vand.u32 %v241, 4294901760
    %v706 = vsub.f32 %v241, %v705
    %v707 = vand.u32 %v706, 4294901760
    %v708 = vsub.f32 %v706, %v707
    %v709 = vand.u32 %v708, 4294901760
    %710 = vmatprep.subr.mxu0 %v709
    %v711 = vand.u32 %v240, 4294901760
    %v712 = vsub.f32 %v240, %v711
    %v713 = vand.u32 %v712, 4294901760
    %v714 = vsub.f32 %v712, %v713
    %v715 = vand.u32 %v714, 4294901760
    %716 = vmatpush2.msra.mxu0 %v715
    %v717 = vand.u32 %v233, 4294901760
    %v718 = vsub.f32 %v233, %v717
    %v719 = vand.u32 %v718, 4294901760
    %v720 = vsub.f32 %v718, %v719
    %v721 = vand.u32 %v720, 4294901760
    %722 = vmatprep.subr.mxu0 %v721
    %v723 = vand.u32 %v232, 4294901760
    %v724 = vsub.f32 %v232, %v723
    %v725 = vand.u32 %v724, 4294901760
    %v726 = vsub.f32 %v724, %v725
    %v727 = vand.u32 %v726, 4294901760
    %728 = vmatpush2.msra.mxu0 %v727
    %v729 = vand.u32 %v225, 4294901760
    %v730 = vsub.f32 %v225, %v729
    %v731 = vand.u32 %v730, 4294901760
    %v732 = vsub.f32 %v730, %v731
    %v733 = vand.u32 %v732, 4294901760
    %734 = vmatprep.subr.mxu0 %v733
    %v735 = vand.u32 %v224, 4294901760
    %v736 = vsub.f32 %v224, %v735
    %v737 = vand.u32 %v736, 4294901760
    %v738 = vsub.f32 %v736, %v737
    %v739 = vand.u32 %v738, 4294901760
    %740 = vmatpush2.msra.mxu0 %v739
    %v741 = vand.u32 %v217, 4294901760
    %v742 = vsub.f32 %v217, %v741
    %v743 = vand.u32 %v742, 4294901760
    %v744 = vsub.f32 %v742, %v743
    %v745 = vand.u32 %v744, 4294901760
    %746 = vmatprep.subr.mxu0 %v745
    %v747 = vand.u32 %v216, 4294901760
    %v748 = vsub.f32 %v216, %v747
    %v749 = vand.u32 %v748, 4294901760
    %v750 = vsub.f32 %v748, %v749
    %v751 = vand.u32 %v750, 4294901760
    %752 = vmatpush2.msra.mxu0 %v751
    %v753 = vand.u32 %v209, 4294901760
    %v754 = vsub.f32 %v209, %v753
    %v755 = vand.u32 %v754, 4294901760
    %v756 = vsub.f32 %v754, %v755
    %v757 = vand.u32 %v756, 4294901760
    %758 = vmatprep.subr.mxu0 %v757
    %v759 = vand.u32 %v208, 4294901760
    %v760 = vsub.f32 %v208, %v759
    %v761 = vand.u32 %v760, 4294901760
    %v762 = vsub.f32 %v760, %v761
    %v763 = vand.u32 %v762, 4294901760
    %764 = vmatpush2.msra.mxu0 %v763
    %v765 = vand.u32 %v201, 4294901760
    %v766 = vsub.f32 %v201, %v765
    %v767 = vand.u32 %v766, 4294901760
    %v768 = vsub.f32 %v766, %v767
    %v769 = vand.u32 %v768, 4294901760
    %770 = vmatprep.subr.mxu0 %v769
    %v771 = vand.u32 %v200, 4294901760
    %v772 = vsub.f32 %v200, %v771
    %v773 = vand.u32 %v772, 4294901760
    %v774 = vsub.f32 %v772, %v773
    %v775 = vand.u32 %v774, 4294901760
    %776 = vmatpush2.msra.mxu0 %v775
    %v777 = vand.u32 %v193, 4294901760
    %v778 = vsub.f32 %v193, %v777
    %v779 = vand.u32 %v778, 4294901760
    %v780 = vsub.f32 %v778, %v779
    %v781 = vand.u32 %v780, 4294901760
    %782 = vmatprep.subr.mxu0 %v781
    %v783 = vand.u32 %v192, 4294901760
    %v784 = vsub.f32 %v192, %v783
    %v785 = vand.u32 %v784, 4294901760
    %v786 = vsub.f32 %v784, %v785
    %v787 = vand.u32 %v786, 4294901760
    %788 = vmatpush2.msra.mxu0 %v787
    %v789 = vand.u32 %v185, 4294901760
    %v790 = vsub.f32 %v185, %v789
    %v791 = vand.u32 %v790, 4294901760
    %v792 = vsub.f32 %v790, %v791
    %v793 = vand.u32 %v792, 4294901760
    %794 = vmatprep.subr.mxu0 %v793
    %v795 = vand.u32 %v184, 4294901760
    %v796 = vsub.f32 %v184, %v795
    %v797 = vand.u32 %v796, 4294901760
    %v798 = vsub.f32 %v796, %v797
    %v799 = vand.u32 %v798, 4294901760
    %800 = vmatpush2.msra.mxu0 %v799
    %v801 = vand.u32 %v177, 4294901760
    %v802 = vsub.f32 %v177, %v801
    %v803 = vand.u32 %v802, 4294901760
    %v804 = vsub.f32 %v802, %v803
    %v805 = vand.u32 %v804, 4294901760
    %806 = vmatprep.subr.mxu0 %v805
    %v807 = vand.u32 %v176, 4294901760
    %v808 = vsub.f32 %v176, %v807
    %v809 = vand.u32 %v808, 4294901760
    %v810 = vsub.f32 %v808, %v809
    %v811 = vand.u32 %v810, 4294901760
    %812 = vmatpush2.msra.mxu0 %v811
    %v813 = vand.u32 %v169, 4294901760
    %v814 = vsub.f32 %v169, %v813
    %v815 = vand.u32 %v814, 4294901760
    %v816 = vsub.f32 %v814, %v815
    %v817 = vand.u32 %v816, 4294901760
    %818 = vmatprep.subr.mxu0 %v817
    %v819 = vand.u32 %v168, 4294901760
    %v820 = vsub.f32 %v168, %v819
    %v821 = vand.u32 %v820, 4294901760
    %v822 = vsub.f32 %v820, %v821
    %v823 = vand.u32 %v822, 4294901760
    %824 = vmatpush2.msra.mxu0 %v823
    %v825 = vand.u32 %v39, 4294901760
    %826 = vmatprep.mubr.f32.mxu0 %v825
    %v827 = vand.u32 %v38, 4294901760
    %828 = vmatmul.mubr.f32.gmra.mxu0 %v827
    %v829 = vpop.f32.mrf.mxu0
    %v830 = vadd.f32 %v437, %v829
    %v831 = vpop.f32.mrf.mxu0
    %v832 = vadd.f32 %v439, %v831
    %833 = vdwg.mxu0
    %v834 = vand.u32 %v161, 4294901760
    %v835 = vsub.f32 %v161, %v834
    %836 = vmatprep.subr.mxu0 %v835
    %v837 = vand.u32 %v160, 4294901760
    %v838 = vsub.f32 %v160, %v837
    %839 = vmatpush1.msra.mxu0 %v838
    %v840 = vand.u32 %v153, 4294901760
    %v841 = vsub.f32 %v153, %v840
    %842 = vmatprep.subr.mxu0 %v841
    %v843 = vand.u32 %v152, 4294901760
    %v844 = vsub.f32 %v152, %v843
    %845 = vmatpush1.msra.mxu0 %v844
    %v846 = vand.u32 %v145, 4294901760
    %v847 = vsub.f32 %v145, %v846
    %848 = vmatprep.subr.mxu0 %v847
    %v849 = vand.u32 %v144, 4294901760
    %v850 = vsub.f32 %v144, %v849
    %851 = vmatpush1.msra.mxu0 %v850
    %v852 = vand.u32 %v137, 4294901760
    %v853 = vsub.f32 %v137, %v852
    %854 = vmatprep.subr.mxu0 %v853
    %v855 = vand.u32 %v136, 4294901760
    %v856 = vsub.f32 %v136, %v855
    %857 = vmatpush1.msra.mxu0 %v856
    %v858 = vand.u32 %v129, 4294901760
    %v859 = vsub.f32 %v129, %v858
    %860 = vmatprep.subr.mxu0 %v859
    %v861 = vand.u32 %v128, 4294901760
    %v862 = vsub.f32 %v128, %v861
    %863 = vmatpush1.msra.mxu0 %v862
    %v864 = vand.u32 %v121, 4294901760
    %v865 = vsub.f32 %v121, %v864
    %866 = vmatprep.subr.mxu0 %v865
    %v867 = vand.u32 %v120, 4294901760
    %v868 = vsub.f32 %v120, %v867
    %869 = vmatpush1.msra.mxu0 %v868
    %v870 = vand.u32 %v113, 4294901760
    %v871 = vsub.f32 %v113, %v870
    %872 = vmatprep.subr.mxu0 %v871
    %v873 = vand.u32 %v112, 4294901760
    %v874 = vsub.f32 %v112, %v873
    %875 = vmatpush1.msra.mxu0 %v874
    %v876 = vand.u32 %v105, 4294901760
    %v877 = vsub.f32 %v105, %v876
    %878 = vmatprep.subr.mxu0 %v877
    %v879 = vand.u32 %v104, 4294901760
    %v880 = vsub.f32 %v104, %v879
    %881 = vmatpush1.msra.mxu0 %v880
    %v882 = vand.u32 %v97, 4294901760
    %v883 = vsub.f32 %v97, %v882
    %884 = vmatprep.subr.mxu0 %v883
    %v885 = vand.u32 %v96, 4294901760
    %v886 = vsub.f32 %v96, %v885
    %887 = vmatpush1.msra.mxu0 %v886
    %v888 = vand.u32 %v89, 4294901760
    %v889 = vsub.f32 %v89, %v888
    %890 = vmatprep.subr.mxu0 %v889
    %v891 = vand.u32 %v88, 4294901760
    %v892 = vsub.f32 %v88, %v891
    %893 = vmatpush1.msra.mxu0 %v892
    %v894 = vand.u32 %v81, 4294901760
    %v895 = vsub.f32 %v81, %v894
    %896 = vmatprep.subr.mxu0 %v895
    %v897 = vand.u32 %v80, 4294901760
    %v898 = vsub.f32 %v80, %v897
    %899 = vmatpush1.msra.mxu0 %v898
    %v900 = vand.u32 %v73, 4294901760
    %v901 = vsub.f32 %v73, %v900
    %902 = vmatprep.subr.mxu0 %v901
    %v903 = vand.u32 %v72, 4294901760
    %v904 = vsub.f32 %v72, %v903
    %905 = vmatpush1.msra.mxu0 %v904
    %v906 = vand.u32 %v65, 4294901760
    %v907 = vsub.f32 %v65, %v906
    %908 = vmatprep.subr.mxu0 %v907
    %v909 = vand.u32 %v64, 4294901760
    %v910 = vsub.f32 %v64, %v909
    %911 = vmatpush1.msra.mxu0 %v910
    %v912 = vand.u32 %v57, 4294901760
    %v913 = vsub.f32 %v57, %v912
    %914 = vmatprep.subr.mxu0 %v913
    %v915 = vand.u32 %v56, 4294901760
    %v916 = vsub.f32 %v56, %v915
    %917 = vmatpush1.msra.mxu0 %v916
    %v918 = vand.u32 %v49, 4294901760
    %v919 = vsub.f32 %v49, %v918
    %920 = vmatprep.subr.mxu0 %v919
    %v921 = vand.u32 %v48, 4294901760
    %v922 = vsub.f32 %v48, %v921
    %923 = vmatpush1.msra.mxu0 %v922
    %v924 = vand.u32 %v41, 4294901760
    %v925 = vsub.f32 %v41, %v924
    %926 = vmatprep.subr.mxu0 %v925
    %v927 = vand.u32 %v40, 4294901760
    %v928 = vsub.f32 %v40, %v927
    %929 = vmatpush1.msra.mxu0 %v928
    %v930 = vand.u32 %v289, 4294901760
    %v931 = vsub.f32 %v289, %v930
    %932 = vmatprep.subr.mxu0 %v931
    %v933 = vand.u32 %v288, 4294901760
    %v934 = vsub.f32 %v288, %v933
    %935 = vmatpush2.msra.mxu0 %v934
    %v936 = vand.u32 %v281, 4294901760
    %v937 = vsub.f32 %v281, %v936
    %938 = vmatprep.subr.mxu0 %v937
    %v939 = vand.u32 %v280, 4294901760
    %v940 = vsub.f32 %v280, %v939
    %941 = vmatpush2.msra.mxu0 %v940
    %v942 = vand.u32 %v273, 4294901760
    %v943 = vsub.f32 %v273, %v942
    %944 = vmatprep.subr.mxu0 %v943
    %v945 = vand.u32 %v272, 4294901760
    %v946 = vsub.f32 %v272, %v945
    %947 = vmatpush2.msra.mxu0 %v946
    %v948 = vand.u32 %v265, 4294901760
    %v949 = vsub.f32 %v265, %v948
    %950 = vmatprep.subr.mxu0 %v949
    %v951 = vand.u32 %v264, 4294901760
    %v952 = vsub.f32 %v264, %v951
    %953 = vmatpush2.msra.mxu0 %v952
    %v954 = vand.u32 %v257, 4294901760
    %v955 = vsub.f32 %v257, %v954
    %956 = vmatprep.subr.mxu0 %v955
    %v957 = vand.u32 %v256, 4294901760
    %v958 = vsub.f32 %v256, %v957
    %959 = vmatpush2.msra.mxu0 %v958
    %v960 = vand.u32 %v249, 4294901760
    %v961 = vsub.f32 %v249, %v960
    %962 = vmatprep.subr.mxu0 %v961
    %v963 = vand.u32 %v248, 4294901760
    %v964 = vsub.f32 %v248, %v963
    %965 = vmatpush2.msra.mxu0 %v964
    %v966 = vand.u32 %v241, 4294901760
    %v967 = vsub.f32 %v241, %v966
    %968 = vmatprep.subr.mxu0 %v967
    %v969 = vand.u32 %v240, 4294901760
    %v970 = vsub.f32 %v240, %v969
    %971 = vmatpush2.msra.mxu0 %v970
    %v972 = vand.u32 %v233, 4294901760
    %v973 = vsub.f32 %v233, %v972
    %974 = vmatprep.subr.mxu0 %v973
    %v975 = vand.u32 %v232, 4294901760
    %v976 = vsub.f32 %v232, %v975
    %977 = vmatpush2.msra.mxu0 %v976
    %v978 = vand.u32 %v225, 4294901760
    %v979 = vsub.f32 %v225, %v978
    %980 = vmatprep.subr.mxu0 %v979
    %v981 = vand.u32 %v224, 4294901760
    %v982 = vsub.f32 %v224, %v981
    %983 = vmatpush2.msra.mxu0 %v982
    %v984 = vand.u32 %v217, 4294901760
    %v985 = vsub.f32 %v217, %v984
    %986 = vmatprep.subr.mxu0 %v985
    %v987 = vand.u32 %v216, 4294901760
    %v988 = vsub.f32 %v216, %v987
    %989 = vmatpush2.msra.mxu0 %v988
    %v990 = vand.u32 %v209, 4294901760
    %v991 = vsub.f32 %v209, %v990
    %992 = vmatprep.subr.mxu0 %v991
    %v993 = vand.u32 %v208, 4294901760
    %v994 = vsub.f32 %v208, %v993
    %995 = vmatpush2.msra.mxu0 %v994
    %v996 = vand.u32 %v201, 4294901760
    %v997 = vsub.f32 %v201, %v996
    %998 = vmatprep.subr.mxu0 %v997
    %v999 = vand.u32 %v200, 4294901760
    %v1000 = vsub.f32 %v200, %v999
    %1001 = vmatpush2.msra.mxu0 %v1000
    %v1002 = vand.u32 %v193, 4294901760
    %v1003 = vsub.f32 %v193, %v1002
    %1004 = vmatprep.subr.mxu0 %v1003
    %v1005 = vand.u32 %v192, 4294901760
    %v1006 = vsub.f32 %v192, %v1005
    %1007 = vmatpush2.msra.mxu0 %v1006
    %v1008 = vand.u32 %v185, 4294901760
    %v1009 = vsub.f32 %v185, %v1008
    %1010 = vmatprep.subr.mxu0 %v1009
    %v1011 = vand.u32 %v184, 4294901760
    %v1012 = vsub.f32 %v184, %v1011
    %1013 = vmatpush2.msra.mxu0 %v1012
    %v1014 = vand.u32 %v177, 4294901760
    %v1015 = vsub.f32 %v177, %v1014
    %1016 = vmatprep.subr.mxu0 %v1015
    %v1017 = vand.u32 %v176, 4294901760
    %v1018 = vsub.f32 %v176, %v1017
    %1019 = vmatpush2.msra.mxu0 %v1018
    %v1020 = vand.u32 %v169, 4294901760
    %v1021 = vsub.f32 %v169, %v1020
    %1022 = vmatprep.subr.mxu0 %v1021
    %v1023 = vand.u32 %v168, 4294901760
    %v1024 = vsub.f32 %v168, %v1023
    %1025 = vmatpush2.msra.mxu0 %v1024
    %v1026 = vand.u32 %v39, 4294901760
    %v1027 = vsub.f32 %v39, %v1026
    %1028 = vmatprep.mubr.f32.mxu0 %v1027
    %v1029 = vand.u32 %v38, 4294901760
    %v1030 = vsub.f32 %v38, %v1029
    %1031 = vmatmul.mubr.f32.gmra.mxu0 %v1030
    %v1032 = vpop.f32.mrf.mxu0
    %v1033 = vadd.f32 %v830, %v1032
    %v1034 = vpop.f32.mrf.mxu0
    %v1035 = vadd.f32 %v832, %v1034
    %1036 = vdwg.mxu0
    %v1037 = vand.u32 %v161, 4294901760
    %1038 = vmatprep.subr.mxu0 %v1037
    %v1039 = vand.u32 %v160, 4294901760
    %1040 = vmatpush1.msra.mxu0 %v1039
    %v1041 = vand.u32 %v153, 4294901760
    %1042 = vmatprep.subr.mxu0 %v1041
    %v1043 = vand.u32 %v152, 4294901760
    %1044 = vmatpush1.msra.mxu0 %v1043
    %v1045 = vand.u32 %v145, 4294901760
    %1046 = vmatprep.subr.mxu0 %v1045
    %v1047 = vand.u32 %v144, 4294901760
    %1048 = vmatpush1.msra.mxu0 %v1047
    %v1049 = vand.u32 %v137, 4294901760
    %1050 = vmatprep.subr.mxu0 %v1049
    %v1051 = vand.u32 %v136, 4294901760
    %1052 = vmatpush1.msra.mxu0 %v1051
    %v1053 = vand.u32 %v129, 4294901760
    %1054 = vmatprep.subr.mxu0 %v1053
    %v1055 = vand.u32 %v128, 4294901760
    %1056 = vmatpush1.msra.mxu0 %v1055
    %v1057 = vand.u32 %v121, 4294901760
    %1058 = vmatprep.subr.mxu0 %v1057
    %v1059 = vand.u32 %v120, 4294901760
    %1060 = vmatpush1.msra.mxu0 %v1059
    %v1061 = vand.u32 %v113, 4294901760
    %1062 = vmatprep.subr.mxu0 %v1061
    %v1063 = vand.u32 %v112, 4294901760
    %1064 = vmatpush1.msra.mxu0 %v1063
    %v1065 = vand.u32 %v105, 4294901760
    %1066 = vmatprep.subr.mxu0 %v1065
    %v1067 = vand.u32 %v104, 4294901760
    %1068 = vmatpush1.msra.mxu0 %v1067
    %v1069 = vand.u32 %v97, 4294901760
    %1070 = vmatprep.subr.mxu0 %v1069
    %v1071 = vand.u32 %v96, 4294901760
    %1072 = vmatpush1.msra.mxu0 %v1071
    %v1073 = vand.u32 %v89, 4294901760
    %1074 = vmatprep.subr.mxu0 %v1073
    %v1075 = vand.u32 %v88, 4294901760
    %1076 = vmatpush1.msra.mxu0 %v1075
    %v1077 = vand.u32 %v81, 4294901760
    %1078 = vmatprep.subr.mxu0 %v1077
    %v1079 = vand.u32 %v80, 4294901760
    %1080 = vmatpush1.msra.mxu0 %v1079
    %v1081 = vand.u32 %v73, 4294901760
    %1082 = vmatprep.subr.mxu0 %v1081
    %v1083 = vand.u32 %v72, 4294901760
    %1084 = vmatpush1.msra.mxu0 %v1083
    %v1085 = vand.u32 %v65, 4294901760
    %1086 = vmatprep.subr.mxu0 %v1085
    %v1087 = vand.u32 %v64, 4294901760
    %1088 = vmatpush1.msra.mxu0 %v1087
    %v1089 = vand.u32 %v57, 4294901760
    %1090 = vmatprep.subr.mxu0 %v1089
    %v1091 = vand.u32 %v56, 4294901760
    %1092 = vmatpush1.msra.mxu0 %v1091
    %v1093 = vand.u32 %v49, 4294901760
    %1094 = vmatprep.subr.mxu0 %v1093
    %v1095 = vand.u32 %v48, 4294901760
    %1096 = vmatpush1.msra.mxu0 %v1095
    %v1097 = vand.u32 %v41, 4294901760
    %1098 = vmatprep.subr.mxu0 %v1097
    %v1099 = vand.u32 %v40, 4294901760
    %1100 = vmatpush1.msra.mxu0 %v1099
    %v1101 = vand.u32 %v289, 4294901760
    %1102 = vmatprep.subr.mxu0 %v1101
    %v1103 = vand.u32 %v288, 4294901760
    %1104 = vmatpush2.msra.mxu0 %v1103
    %v1105 = vand.u32 %v281, 4294901760
    %1106 = vmatprep.subr.mxu0 %v1105
    %v1107 = vand.u32 %v280, 4294901760
    %1108 = vmatpush2.msra.mxu0 %v1107
    %v1109 = vand.u32 %v273, 4294901760
    %1110 = vmatprep.subr.mxu0 %v1109
    %v1111 = vand.u32 %v272, 4294901760
    %1112 = vmatpush2.msra.mxu0 %v1111
    %v1113 = vand.u32 %v265, 4294901760
    %1114 = vmatprep.subr.mxu0 %v1113
    %v1115 = vand.u32 %v264, 4294901760
    %1116 = vmatpush2.msra.mxu0 %v1115
    %v1117 = vand.u32 %v257, 4294901760
    %1118 = vmatprep.subr.mxu0 %v1117
    %v1119 = vand.u32 %v256, 4294901760
    %1120 = vmatpush2.msra.mxu0 %v1119
    %v1121 = vand.u32 %v249, 4294901760
    %1122 = vmatprep.subr.mxu0 %v1121
    %v1123 = vand.u32 %v248, 4294901760
    %1124 = vmatpush2.msra.mxu0 %v1123
    %v1125 = vand.u32 %v241, 4294901760
    %1126 = vmatprep.subr.mxu0 %v1125
    %v1127 = vand.u32 %v240, 4294901760
    %1128 = vmatpush2.msra.mxu0 %v1127
    %v1129 = vand.u32 %v233, 4294901760
    %1130 = vmatprep.subr.mxu0 %v1129
    %v1131 = vand.u32 %v232, 4294901760
    %1132 = vmatpush2.msra.mxu0 %v1131
    %v1133 = vand.u32 %v225, 4294901760
    %1134 = vmatprep.subr.mxu0 %v1133
    %v1135 = vand.u32 %v224, 4294901760
    %1136 = vmatpush2.msra.mxu0 %v1135
    %v1137 = vand.u32 %v217, 4294901760
    %1138 = vmatprep.subr.mxu0 %v1137
    %v1139 = vand.u32 %v216, 4294901760
    %1140 = vmatpush2.msra.mxu0 %v1139
    %v1141 = vand.u32 %v209, 4294901760
    %1142 = vmatprep.subr.mxu0 %v1141
    %v1143 = vand.u32 %v208, 4294901760
    %1144 = vmatpush2.msra.mxu0 %v1143
    %v1145 = vand.u32 %v201, 4294901760
    %1146 = vmatprep.subr.mxu0 %v1145
    %v1147 = vand.u32 %v200, 4294901760
    %1148 = vmatpush2.msra.mxu0 %v1147
    %v1149 = vand.u32 %v193, 4294901760
    %1150 = vmatprep.subr.mxu0 %v1149
    %v1151 = vand.u32 %v192, 4294901760
    %1152 = vmatpush2.msra.mxu0 %v1151
    %v1153 = vand.u32 %v185, 4294901760
    %1154 = vmatprep.subr.mxu0 %v1153
    %v1155 = vand.u32 %v184, 4294901760
    %1156 = vmatpush2.msra.mxu0 %v1155
    %v1157 = vand.u32 %v177, 4294901760
    %1158 = vmatprep.subr.mxu0 %v1157
    %v1159 = vand.u32 %v176, 4294901760
    %1160 = vmatpush2.msra.mxu0 %v1159
    %v1161 = vand.u32 %v169, 4294901760
    %1162 = vmatprep.subr.mxu0 %v1161
    %v1163 = vand.u32 %v168, 4294901760
    %1164 = vmatpush2.msra.mxu0 %v1163
    %v1165 = vand.u32 %v39, 4294901760
    %v1166 = vsub.f32 %v39, %v1165
    %v1167 = vand.u32 %v1166, 4294901760
    %1168 = vmatprep.mubr.f32.mxu0 %v1167
    %v1169 = vand.u32 %v38, 4294901760
    %v1170 = vsub.f32 %v38, %v1169
    %v1171 = vand.u32 %v1170, 4294901760
    %1172 = vmatmul.mubr.f32.gmra.mxu0 %v1171
    %v1173 = vpop.f32.mrf.mxu0
    %v1174 = vadd.f32 %v1033, %v1173
    %v1175 = vpop.f32.mrf.mxu0
    %v1176 = vadd.f32 %v1035, %v1175
    %1177 = vdwg.mxu0
    %v1178 = vand.u32 %v161, 4294901760
    %v1179 = vsub.f32 %v161, %v1178
    %v1180 = vand.u32 %v1179, 4294901760
    %1181 = vmatprep.subr.mxu0 %v1180
    %v1182 = vand.u32 %v160, 4294901760
    %v1183 = vsub.f32 %v160, %v1182
    %v1184 = vand.u32 %v1183, 4294901760
    %1185 = vmatpush1.msra.mxu0 %v1184
    %v1186 = vand.u32 %v153, 4294901760
    %v1187 = vsub.f32 %v153, %v1186
    %v1188 = vand.u32 %v1187, 4294901760
    %1189 = vmatprep.subr.mxu0 %v1188
    %v1190 = vand.u32 %v152, 4294901760
    %v1191 = vsub.f32 %v152, %v1190
    %v1192 = vand.u32 %v1191, 4294901760
    %1193 = vmatpush1.msra.mxu0 %v1192
    %v1194 = vand.u32 %v145, 4294901760
    %v1195 = vsub.f32 %v145, %v1194
    %v1196 = vand.u32 %v1195, 4294901760
    %1197 = vmatprep.subr.mxu0 %v1196
    %v1198 = vand.u32 %v144, 4294901760
    %v1199 = vsub.f32 %v144, %v1198
    %v1200 = vand.u32 %v1199, 4294901760
    %1201 = vmatpush1.msra.mxu0 %v1200
    %v1202 = vand.u32 %v137, 4294901760
    %v1203 = vsub.f32 %v137, %v1202
    %v1204 = vand.u32 %v1203, 4294901760
    %1205 = vmatprep.subr.mxu0 %v1204
    %v1206 = vand.u32 %v136, 4294901760
    %v1207 = vsub.f32 %v136, %v1206
    %v1208 = vand.u32 %v1207, 4294901760
    %1209 = vmatpush1.msra.mxu0 %v1208
    %v1210 = vand.u32 %v129, 4294901760
    %v1211 = vsub.f32 %v129, %v1210
    %v1212 = vand.u32 %v1211, 4294901760
    %1213 = vmatprep.subr.mxu0 %v1212
    %v1214 = vand.u32 %v128, 4294901760
    %v1215 = vsub.f32 %v128, %v1214
    %v1216 = vand.u32 %v1215, 4294901760
    %1217 = vmatpush1.msra.mxu0 %v1216
    %v1218 = vand.u32 %v121, 4294901760
    %v1219 = vsub.f32 %v121, %v1218
    %v1220 = vand.u32 %v1219, 4294901760
    %1221 = vmatprep.subr.mxu0 %v1220
    %v1222 = vand.u32 %v120, 4294901760
    %v1223 = vsub.f32 %v120, %v1222
    %v1224 = vand.u32 %v1223, 4294901760
    %1225 = vmatpush1.msra.mxu0 %v1224
    %v1226 = vand.u32 %v113, 4294901760
    %v1227 = vsub.f32 %v113, %v1226
    %v1228 = vand.u32 %v1227, 4294901760
    %1229 = vmatprep.subr.mxu0 %v1228
    %v1230 = vand.u32 %v112, 4294901760
    %v1231 = vsub.f32 %v112, %v1230
    %v1232 = vand.u32 %v1231, 4294901760
    %1233 = vmatpush1.msra.mxu0 %v1232
    %v1234 = vand.u32 %v105, 4294901760
    %v1235 = vsub.f32 %v105, %v1234
    %v1236 = vand.u32 %v1235, 4294901760
    %1237 = vmatprep.subr.mxu0 %v1236
    %v1238 = vand.u32 %v104, 4294901760
    %v1239 = vsub.f32 %v104, %v1238
    %v1240 = vand.u32 %v1239, 4294901760
    %1241 = vmatpush1.msra.mxu0 %v1240
    %v1242 = vand.u32 %v97, 4294901760
    %v1243 = vsub.f32 %v97, %v1242
    %v1244 = vand.u32 %v1243, 4294901760
    %1245 = vmatprep.subr.mxu0 %v1244
    %v1246 = vand.u32 %v96, 4294901760
    %v1247 = vsub.f32 %v96, %v1246
    %v1248 = vand.u32 %v1247, 4294901760
    %1249 = vmatpush1.msra.mxu0 %v1248
    %v1250 = vand.u32 %v89, 4294901760
    %v1251 = vsub.f32 %v89, %v1250
    %v1252 = vand.u32 %v1251, 4294901760
    %1253 = vmatprep.subr.mxu0 %v1252
    %v1254 = vand.u32 %v88, 4294901760
    %v1255 = vsub.f32 %v88, %v1254
    %v1256 = vand.u32 %v1255, 4294901760
    %1257 = vmatpush1.msra.mxu0 %v1256
    %v1258 = vand.u32 %v81, 4294901760
    %v1259 = vsub.f32 %v81, %v1258
    %v1260 = vand.u32 %v1259, 4294901760
    %1261 = vmatprep.subr.mxu0 %v1260
    %v1262 = vand.u32 %v80, 4294901760
    %v1263 = vsub.f32 %v80, %v1262
    %v1264 = vand.u32 %v1263, 4294901760
    %1265 = vmatpush1.msra.mxu0 %v1264
    %v1266 = vand.u32 %v73, 4294901760
    %v1267 = vsub.f32 %v73, %v1266
    %v1268 = vand.u32 %v1267, 4294901760
    %1269 = vmatprep.subr.mxu0 %v1268
    %v1270 = vand.u32 %v72, 4294901760
    %v1271 = vsub.f32 %v72, %v1270
    %v1272 = vand.u32 %v1271, 4294901760
    %1273 = vmatpush1.msra.mxu0 %v1272
    %v1274 = vand.u32 %v65, 4294901760
    %v1275 = vsub.f32 %v65, %v1274
    %v1276 = vand.u32 %v1275, 4294901760
    %1277 = vmatprep.subr.mxu0 %v1276
    %v1278 = vand.u32 %v64, 4294901760
    %v1279 = vsub.f32 %v64, %v1278
    %v1280 = vand.u32 %v1279, 4294901760
    %1281 = vmatpush1.msra.mxu0 %v1280
    %v1282 = vand.u32 %v57, 4294901760
    %v1283 = vsub.f32 %v57, %v1282
    %v1284 = vand.u32 %v1283, 4294901760
    %1285 = vmatprep.subr.mxu0 %v1284
    %v1286 = vand.u32 %v56, 4294901760
    %v1287 = vsub.f32 %v56, %v1286
    %v1288 = vand.u32 %v1287, 4294901760
    %1289 = vmatpush1.msra.mxu0 %v1288
    %v1290 = vand.u32 %v49, 4294901760
    %v1291 = vsub.f32 %v49, %v1290
    %v1292 = vand.u32 %v1291, 4294901760
    %1293 = vmatprep.subr.mxu0 %v1292
    %v1294 = vand.u32 %v48, 4294901760
    %v1295 = vsub.f32 %v48, %v1294
    %v1296 = vand.u32 %v1295, 4294901760
    %1297 = vmatpush1.msra.mxu0 %v1296
    %v1298 = vand.u32 %v41, 4294901760
    %v1299 = vsub.f32 %v41, %v1298
    %v1300 = vand.u32 %v1299, 4294901760
    %1301 = vmatprep.subr.mxu0 %v1300
    %v1302 = vand.u32 %v40, 4294901760
    %v1303 = vsub.f32 %v40, %v1302
    %v1304 = vand.u32 %v1303, 4294901760
    %1305 = vmatpush1.msra.mxu0 %v1304
    %v1306 = vand.u32 %v289, 4294901760
    %v1307 = vsub.f32 %v289, %v1306
    %v1308 = vand.u32 %v1307, 4294901760
    %1309 = vmatprep.subr.mxu0 %v1308
    %v1310 = vand.u32 %v288, 4294901760
    %v1311 = vsub.f32 %v288, %v1310
    %v1312 = vand.u32 %v1311, 4294901760
    %1313 = vmatpush2.msra.mxu0 %v1312
    %v1314 = vand.u32 %v281, 4294901760
    %v1315 = vsub.f32 %v281, %v1314
    %v1316 = vand.u32 %v1315, 4294901760
    %1317 = vmatprep.subr.mxu0 %v1316
    %v1318 = vand.u32 %v280, 4294901760
    %v1319 = vsub.f32 %v280, %v1318
    %v1320 = vand.u32 %v1319, 4294901760
    %1321 = vmatpush2.msra.mxu0 %v1320
    %v1322 = vand.u32 %v273, 4294901760
    %v1323 = vsub.f32 %v273, %v1322
    %v1324 = vand.u32 %v1323, 4294901760
    %1325 = vmatprep.subr.mxu0 %v1324
    %v1326 = vand.u32 %v272, 4294901760
    %v1327 = vsub.f32 %v272, %v1326
    %v1328 = vand.u32 %v1327, 4294901760
    %1329 = vmatpush2.msra.mxu0 %v1328
    %v1330 = vand.u32 %v265, 4294901760
    %v1331 = vsub.f32 %v265, %v1330
    %v1332 = vand.u32 %v1331, 4294901760
    %1333 = vmatprep.subr.mxu0 %v1332
    %v1334 = vand.u32 %v264, 4294901760
    %v1335 = vsub.f32 %v264, %v1334
    %v1336 = vand.u32 %v1335, 4294901760
    %1337 = vmatpush2.msra.mxu0 %v1336
    %v1338 = vand.u32 %v257, 4294901760
    %v1339 = vsub.f32 %v257, %v1338
    %v1340 = vand.u32 %v1339, 4294901760
    %1341 = vmatprep.subr.mxu0 %v1340
    %v1342 = vand.u32 %v256, 4294901760
    %v1343 = vsub.f32 %v256, %v1342
    %v1344 = vand.u32 %v1343, 4294901760
    %1345 = vmatpush2.msra.mxu0 %v1344
    %v1346 = vand.u32 %v249, 4294901760
    %v1347 = vsub.f32 %v249, %v1346
    %v1348 = vand.u32 %v1347, 4294901760
    %1349 = vmatprep.subr.mxu0 %v1348
    %v1350 = vand.u32 %v248, 4294901760
    %v1351 = vsub.f32 %v248, %v1350
    %v1352 = vand.u32 %v1351, 4294901760
    %1353 = vmatpush2.msra.mxu0 %v1352
    %v1354 = vand.u32 %v241, 4294901760
    %v1355 = vsub.f32 %v241, %v1354
    %v1356 = vand.u32 %v1355, 4294901760
    %1357 = vmatprep.subr.mxu0 %v1356
    %v1358 = vand.u32 %v240, 4294901760
    %v1359 = vsub.f32 %v240, %v1358
    %v1360 = vand.u32 %v1359, 4294901760
    %1361 = vmatpush2.msra.mxu0 %v1360
    %v1362 = vand.u32 %v233, 4294901760
    %v1363 = vsub.f32 %v233, %v1362
    %v1364 = vand.u32 %v1363, 4294901760
    %1365 = vmatprep.subr.mxu0 %v1364
    %v1366 = vand.u32 %v232, 4294901760
    %v1367 = vsub.f32 %v232, %v1366
    %v1368 = vand.u32 %v1367, 4294901760
    %1369 = vmatpush2.msra.mxu0 %v1368
    %v1370 = vand.u32 %v225, 4294901760
    %v1371 = vsub.f32 %v225, %v1370
    %v1372 = vand.u32 %v1371, 4294901760
    %1373 = vmatprep.subr.mxu0 %v1372
    %v1374 = vand.u32 %v224, 4294901760
    %v1375 = vsub.f32 %v224, %v1374
    %v1376 = vand.u32 %v1375, 4294901760
    %1377 = vmatpush2.msra.mxu0 %v1376
    %v1378 = vand.u32 %v217, 4294901760
    %v1379 = vsub.f32 %v217, %v1378
    %v1380 = vand.u32 %v1379, 4294901760
    %1381 = vmatprep.subr.mxu0 %v1380
    %v1382 = vand.u32 %v216, 4294901760
    %v1383 = vsub.f32 %v216, %v1382
    %v1384 = vand.u32 %v1383, 4294901760
    %1385 = vmatpush2.msra.mxu0 %v1384
    %v1386 = vand.u32 %v209, 4294901760
    %v1387 = vsub.f32 %v209, %v1386
    %v1388 = vand.u32 %v1387, 4294901760
    %1389 = vmatprep.subr.mxu0 %v1388
    %v1390 = vand.u32 %v208, 4294901760
    %v1391 = vsub.f32 %v208, %v1390
    %v1392 = vand.u32 %v1391, 4294901760
    %1393 = vmatpush2.msra.mxu0 %v1392
    %v1394 = vand.u32 %v201, 4294901760
    %v1395 = vsub.f32 %v201, %v1394
    %v1396 = vand.u32 %v1395, 4294901760
    %1397 = vmatprep.subr.mxu0 %v1396
    %v1398 = vand.u32 %v200, 4294901760
    %v1399 = vsub.f32 %v200, %v1398
    %v1400 = vand.u32 %v1399, 4294901760
    %1401 = vmatpush2.msra.mxu0 %v1400
    %v1402 = vand.u32 %v193, 4294901760
    %v1403 = vsub.f32 %v193, %v1402
    %v1404 = vand.u32 %v1403, 4294901760
    %1405 = vmatprep.subr.mxu0 %v1404
    %v1406 = vand.u32 %v192, 4294901760
    %v1407 = vsub.f32 %v192, %v1406
    %v1408 = vand.u32 %v1407, 4294901760
    %1409 = vmatpush2.msra.mxu0 %v1408
    %v1410 = vand.u32 %v185, 4294901760
    %v1411 = vsub.f32 %v185, %v1410
    %v1412 = vand.u32 %v1411, 4294901760
    %1413 = vmatprep.subr.mxu0 %v1412
    %v1414 = vand.u32 %v184, 4294901760
    %v1415 = vsub.f32 %v184, %v1414
    %v1416 = vand.u32 %v1415, 4294901760
    %1417 = vmatpush2.msra.mxu0 %v1416
    %v1418 = vand.u32 %v177, 4294901760
    %v1419 = vsub.f32 %v177, %v1418
    %v1420 = vand.u32 %v1419, 4294901760
    %1421 = vmatprep.subr.mxu0 %v1420
    %v1422 = vand.u32 %v176, 4294901760
    %v1423 = vsub.f32 %v176, %v1422
    %v1424 = vand.u32 %v1423, 4294901760
    %1425 = vmatpush2.msra.mxu0 %v1424
    %v1426 = vand.u32 %v169, 4294901760
    %v1427 = vsub.f32 %v169, %v1426
    %v1428 = vand.u32 %v1427, 4294901760
    %1429 = vmatprep.subr.mxu0 %v1428
    %v1430 = vand.u32 %v168, 4294901760
    %v1431 = vsub.f32 %v168, %v1430
    %v1432 = vand.u32 %v1431, 4294901760
    %1433 = vmatpush2.msra.mxu0 %v1432
    %v1434 = vand.u32 %v39, 4294901760
    %1435 = vmatprep.mubr.f32.mxu0 %v1434
    %v1436 = vand.u32 %v38, 4294901760
    %1437 = vmatmul.mubr.f32.gmra.mxu0 %v1436
    %v1438 = vpop.f32.mrf.mxu0
    %v1439 = vadd.f32 %v1174, %v1438
    %v1440 = vpop.f32.mrf.mxu0
    %v1441 = vadd.f32 %v1176, %v1440
    %1442 = vdwg.mxu0
    %v1443 = vand.u32 %v161, 4294901760
    %1444 = vmatprep.subr.mxu0 %v1443
    %v1445 = vand.u32 %v160, 4294901760
    %1446 = vmatpush1.msra.mxu0 %v1445
    %v1447 = vand.u32 %v153, 4294901760
    %1448 = vmatprep.subr.mxu0 %v1447
    %v1449 = vand.u32 %v152, 4294901760
    %1450 = vmatpush1.msra.mxu0 %v1449
    %v1451 = vand.u32 %v145, 4294901760
    %1452 = vmatprep.subr.mxu0 %v1451
    %v1453 = vand.u32 %v144, 4294901760
    %1454 = vmatpush1.msra.mxu0 %v1453
    %v1455 = vand.u32 %v137, 4294901760
    %1456 = vmatprep.subr.mxu0 %v1455
    %v1457 = vand.u32 %v136, 4294901760
    %1458 = vmatpush1.msra.mxu0 %v1457
    %v1459 = vand.u32 %v129, 4294901760
    %1460 = vmatprep.subr.mxu0 %v1459
    %v1461 = vand.u32 %v128, 4294901760
    %1462 = vmatpush1.msra.mxu0 %v1461
    %v1463 = vand.u32 %v121, 4294901760
    %1464 = vmatprep.subr.mxu0 %v1463
    %v1465 = vand.u32 %v120, 4294901760
    %1466 = vmatpush1.msra.mxu0 %v1465
    %v1467 = vand.u32 %v113, 4294901760
    %1468 = vmatprep.subr.mxu0 %v1467
    %v1469 = vand.u32 %v112, 4294901760
    %1470 = vmatpush1.msra.mxu0 %v1469
    %v1471 = vand.u32 %v105, 4294901760
    %1472 = vmatprep.subr.mxu0 %v1471
    %v1473 = vand.u32 %v104, 4294901760
    %1474 = vmatpush1.msra.mxu0 %v1473
    %v1475 = vand.u32 %v97, 4294901760
    %1476 = vmatprep.subr.mxu0 %v1475
    %v1477 = vand.u32 %v96, 4294901760
    %1478 = vmatpush1.msra.mxu0 %v1477
    %v1479 = vand.u32 %v89, 4294901760
    %1480 = vmatprep.subr.mxu0 %v1479
    %v1481 = vand.u32 %v88, 4294901760
    %1482 = vmatpush1.msra.mxu0 %v1481
    %v1483 = vand.u32 %v81, 4294901760
    %1484 = vmatprep.subr.mxu0 %v1483
    %v1485 = vand.u32 %v80, 4294901760
    %1486 = vmatpush1.msra.mxu0 %v1485
    %v1487 = vand.u32 %v73, 4294901760
    %1488 = vmatprep.subr.mxu0 %v1487
    %v1489 = vand.u32 %v72, 4294901760
    %1490 = vmatpush1.msra.mxu0 %v1489
    %v1491 = vand.u32 %v65, 4294901760
    %1492 = vmatprep.subr.mxu0 %v1491
    %v1493 = vand.u32 %v64, 4294901760
    %1494 = vmatpush1.msra.mxu0 %v1493
    %v1495 = vand.u32 %v57, 4294901760
    %1496 = vmatprep.subr.mxu0 %v1495
    %v1497 = vand.u32 %v56, 4294901760
    %1498 = vmatpush1.msra.mxu0 %v1497
    %v1499 = vand.u32 %v49, 4294901760
    %1500 = vmatprep.subr.mxu0 %v1499
    %v1501 = vand.u32 %v48, 4294901760
    %1502 = vmatpush1.msra.mxu0 %v1501
    %v1503 = vand.u32 %v41, 4294901760
    %1504 = vmatprep.subr.mxu0 %v1503
    %v1505 = vand.u32 %v40, 4294901760
    %1506 = vmatpush1.msra.mxu0 %v1505
    %v1507 = vand.u32 %v289, 4294901760
    %1508 = vmatprep.subr.mxu0 %v1507
    %v1509 = vand.u32 %v288, 4294901760
    %1510 = vmatpush2.msra.mxu0 %v1509
    %v1511 = vand.u32 %v281, 4294901760
    %1512 = vmatprep.subr.mxu0 %v1511
    %v1513 = vand.u32 %v280, 4294901760
    %1514 = vmatpush2.msra.mxu0 %v1513
    %v1515 = vand.u32 %v273, 4294901760
    %1516 = vmatprep.subr.mxu0 %v1515
    %v1517 = vand.u32 %v272, 4294901760
    %1518 = vmatpush2.msra.mxu0 %v1517
    %v1519 = vand.u32 %v265, 4294901760
    %1520 = vmatprep.subr.mxu0 %v1519
    %v1521 = vand.u32 %v264, 4294901760
    %1522 = vmatpush2.msra.mxu0 %v1521
    %v1523 = vand.u32 %v257, 4294901760
    %1524 = vmatprep.subr.mxu0 %v1523
    %v1525 = vand.u32 %v256, 4294901760
    %1526 = vmatpush2.msra.mxu0 %v1525
    %v1527 = vand.u32 %v249, 4294901760
    %1528 = vmatprep.subr.mxu0 %v1527
    %v1529 = vand.u32 %v248, 4294901760
    %1530 = vmatpush2.msra.mxu0 %v1529
    %v1531 = vand.u32 %v241, 4294901760
    %1532 = vmatprep.subr.mxu0 %v1531
    %v1533 = vand.u32 %v240, 4294901760
    %1534 = vmatpush2.msra.mxu0 %v1533
    %v1535 = vand.u32 %v233, 4294901760
    %1536 = vmatprep.subr.mxu0 %v1535
    %v1537 = vand.u32 %v232, 4294901760
    %1538 = vmatpush2.msra.mxu0 %v1537
    %v1539 = vand.u32 %v225, 4294901760
    %1540 = vmatprep.subr.mxu0 %v1539
    %v1541 = vand.u32 %v224, 4294901760
    %1542 = vmatpush2.msra.mxu0 %v1541
    %v1543 = vand.u32 %v217, 4294901760
    %1544 = vmatprep.subr.mxu0 %v1543
    %v1545 = vand.u32 %v216, 4294901760
    %1546 = vmatpush2.msra.mxu0 %v1545
    %v1547 = vand.u32 %v209, 4294901760
    %1548 = vmatprep.subr.mxu0 %v1547
    %v1549 = vand.u32 %v208, 4294901760
    %1550 = vmatpush2.msra.mxu0 %v1549
    %v1551 = vand.u32 %v201, 4294901760
    %1552 = vmatprep.subr.mxu0 %v1551
    %v1553 = vand.u32 %v200, 4294901760
    %1554 = vmatpush2.msra.mxu0 %v1553
    %v1555 = vand.u32 %v193, 4294901760
    %1556 = vmatprep.subr.mxu0 %v1555
    %v1557 = vand.u32 %v192, 4294901760
    %1558 = vmatpush2.msra.mxu0 %v1557
    %v1559 = vand.u32 %v185, 4294901760
    %1560 = vmatprep.subr.mxu0 %v1559
    %v1561 = vand.u32 %v184, 4294901760
    %1562 = vmatpush2.msra.mxu0 %v1561
    %v1563 = vand.u32 %v177, 4294901760
    %1564 = vmatprep.subr.mxu0 %v1563
    %v1565 = vand.u32 %v176, 4294901760
    %1566 = vmatpush2.msra.mxu0 %v1565
    %v1567 = vand.u32 %v169, 4294901760
    %1568 = vmatprep.subr.mxu0 %v1567
    %v1569 = vand.u32 %v168, 4294901760
    %1570 = vmatpush2.msra.mxu0 %v1569
    %v1571 = vand.u32 %v39, 4294901760
    %1572 = vmatprep.mubr.f32.mxu0 %v1571
    %v1573 = vand.u32 %v38, 4294901760
    %1574 = vmatmul.mubr.f32.gmra.mxu0 %v1573
    %v1575 = vpop.f32.mrf.mxu0
    %v1576 = vadd.f32 %v1439, %v1575
    %v1577 = vpop.f32.mrf.mxu0
    %v1578 = vadd.f32 %v1441, %v1577
    %1579 = vdwg.mxu0
    %v1580 = vand.u32 %v163, 4294901760
    %1581 = vmatprep.subr.mxu0 %v1580
    %v1582 = vand.u32 %v162, 4294901760
    %1583 = vmatpush1.msra.mxu0 %v1582
    %v1584 = vand.u32 %v155, 4294901760
    %1585 = vmatprep.subr.mxu0 %v1584
    %v1586 = vand.u32 %v154, 4294901760
    %1587 = vmatpush1.msra.mxu0 %v1586
    %v1588 = vand.u32 %v147, 4294901760
    %1589 = vmatprep.subr.mxu0 %v1588
    %v1590 = vand.u32 %v146, 4294901760
    %1591 = vmatpush1.msra.mxu0 %v1590
    %v1592 = vand.u32 %v139, 4294901760
    %1593 = vmatprep.subr.mxu0 %v1592
    %v1594 = vand.u32 %v138, 4294901760
    %1595 = vmatpush1.msra.mxu0 %v1594
    %v1596 = vand.u32 %v131, 4294901760
    %1597 = vmatprep.subr.mxu0 %v1596
    %v1598 = vand.u32 %v130, 4294901760
    %1599 = vmatpush1.msra.mxu0 %v1598
    %v1600 = vand.u32 %v123, 4294901760
    %1601 = vmatprep.subr.mxu0 %v1600
    %v1602 = vand.u32 %v122, 4294901760
    %1603 = vmatpush1.msra.mxu0 %v1602
    %v1604 = vand.u32 %v115, 4294901760
    %1605 = vmatprep.subr.mxu0 %v1604
    %v1606 = vand.u32 %v114, 4294901760
    %1607 = vmatpush1.msra.mxu0 %v1606
    %v1608 = vand.u32 %v107, 4294901760
    %1609 = vmatprep.subr.mxu0 %v1608
    %v1610 = vand.u32 %v106, 4294901760
    %1611 = vmatpush1.msra.mxu0 %v1610
    %v1612 = vand.u32 %v99, 4294901760
    %1613 = vmatprep.subr.mxu0 %v1612
    %v1614 = vand.u32 %v98, 4294901760
    %1615 = vmatpush1.msra.mxu0 %v1614
    %v1616 = vand.u32 %v91, 4294901760
    %1617 = vmatprep.subr.mxu0 %v1616
    %v1618 = vand.u32 %v90, 4294901760
    %1619 = vmatpush1.msra.mxu0 %v1618
    %v1620 = vand.u32 %v83, 4294901760
    %1621 = vmatprep.subr.mxu0 %v1620
    %v1622 = vand.u32 %v82, 4294901760
    %1623 = vmatpush1.msra.mxu0 %v1622
    %v1624 = vand.u32 %v75, 4294901760
    %1625 = vmatprep.subr.mxu0 %v1624
    %v1626 = vand.u32 %v74, 4294901760
    %1627 = vmatpush1.msra.mxu0 %v1626
    %v1628 = vand.u32 %v67, 4294901760
    %1629 = vmatprep.subr.mxu0 %v1628
    %v1630 = vand.u32 %v66, 4294901760
    %1631 = vmatpush1.msra.mxu0 %v1630
    %v1632 = vand.u32 %v59, 4294901760
    %1633 = vmatprep.subr.mxu0 %v1632
    %v1634 = vand.u32 %v58, 4294901760
    %1635 = vmatpush1.msra.mxu0 %v1634
    %v1636 = vand.u32 %v51, 4294901760
    %1637 = vmatprep.subr.mxu0 %v1636
    %v1638 = vand.u32 %v50, 4294901760
    %1639 = vmatpush1.msra.mxu0 %v1638
    %v1640 = vand.u32 %v43, 4294901760
    %1641 = vmatprep.subr.mxu0 %v1640
    %v1642 = vand.u32 %v42, 4294901760
    %1643 = vmatpush1.msra.mxu0 %v1642
    %v1644 = vand.u32 %v291, 4294901760
    %1645 = vmatprep.subr.mxu0 %v1644
    %v1646 = vand.u32 %v290, 4294901760
    %1647 = vmatpush2.msra.mxu0 %v1646
    %v1648 = vand.u32 %v283, 4294901760
    %1649 = vmatprep.subr.mxu0 %v1648
    %v1650 = vand.u32 %v282, 4294901760
    %1651 = vmatpush2.msra.mxu0 %v1650
    %v1652 = vand.u32 %v275, 4294901760
    %1653 = vmatprep.subr.mxu0 %v1652
    %v1654 = vand.u32 %v274, 4294901760
    %1655 = vmatpush2.msra.mxu0 %v1654
    %v1656 = vand.u32 %v267, 4294901760
    %1657 = vmatprep.subr.mxu0 %v1656
    %v1658 = vand.u32 %v266, 4294901760
    %1659 = vmatpush2.msra.mxu0 %v1658
    %v1660 = vand.u32 %v259, 4294901760
    %1661 = vmatprep.subr.mxu0 %v1660
    %v1662 = vand.u32 %v258, 4294901760
    %1663 = vmatpush2.msra.mxu0 %v1662
    %v1664 = vand.u32 %v251, 4294901760
    %1665 = vmatprep.subr.mxu0 %v1664
    %v1666 = vand.u32 %v250, 4294901760
    %1667 = vmatpush2.msra.mxu0 %v1666
    %v1668 = vand.u32 %v243, 4294901760
    %1669 = vmatprep.subr.mxu0 %v1668
    %v1670 = vand.u32 %v242, 4294901760
    %1671 = vmatpush2.msra.mxu0 %v1670
    %v1672 = vand.u32 %v235, 4294901760
    %1673 = vmatprep.subr.mxu0 %v1672
    %v1674 = vand.u32 %v234, 4294901760
    %1675 = vmatpush2.msra.mxu0 %v1674
    %v1676 = vand.u32 %v227, 4294901760
    %1677 = vmatprep.subr.mxu0 %v1676
    %v1678 = vand.u32 %v226, 4294901760
    %1679 = vmatpush2.msra.mxu0 %v1678
    %v1680 = vand.u32 %v219, 4294901760
    %1681 = vmatprep.subr.mxu0 %v1680
    %v1682 = vand.u32 %v218, 4294901760
    %1683 = vmatpush2.msra.mxu0 %v1682
    %v1684 = vand.u32 %v211, 4294901760
    %1685 = vmatprep.subr.mxu0 %v1684
    %v1686 = vand.u32 %v210, 4294901760
    %1687 = vmatpush2.msra.mxu0 %v1686
    %v1688 = vand.u32 %v203, 4294901760
    %1689 = vmatprep.subr.mxu0 %v1688
    %v1690 = vand.u32 %v202, 4294901760
    %1691 = vmatpush2.msra.mxu0 %v1690
    %v1692 = vand.u32 %v195, 4294901760
    %1693 = vmatprep.subr.mxu0 %v1692
    %v1694 = vand.u32 %v194, 4294901760
    %1695 = vmatpush2.msra.mxu0 %v1694
    %v1696 = vand.u32 %v187, 4294901760
    %1697 = vmatprep.subr.mxu0 %v1696
    %v1698 = vand.u32 %v186, 4294901760
    %1699 = vmatpush2.msra.mxu0 %v1698
    %v1700 = vand.u32 %v179, 4294901760
    %1701 = vmatprep.subr.mxu0 %v1700
    %v1702 = vand.u32 %v178, 4294901760
    %1703 = vmatpush2.msra.mxu0 %v1702
    %v1704 = vand.u32 %v171, 4294901760
    %1705 = vmatprep.subr.mxu0 %v1704
    %v1706 = vand.u32 %v170, 4294901760
    %1707 = vmatpush2.msra.mxu0 %v1706
    %v1708 = vand.u32 %v39, 4294901760
    %v1709 = vsub.f32 %v39, %v1708
    %v1710 = vand.u32 %v1709, 4294901760
    %v1711 = vsub.f32 %v1709, %v1710
    %v1712 = vand.u32 %v1711, 4294901760
    %1713 = vmatprep.mubr.f32.mxu0 %v1712
    %v1714 = vand.u32 %v38, 4294901760
    %v1715 = vsub.f32 %v38, %v1714
    %v1716 = vand.u32 %v1715, 4294901760
    %v1717 = vsub.f32 %v1715, %v1716
    %v1718 = vand.u32 %v1717, 4294901760
    %1719 = vmatmul.mubr.f32.gmra.mxu0 %v1718
    %v1720 = vpop.f32.mrf.mxu0
    %v1721 = vadd.f32 0.0, %v1720
    %v1722 = vpop.f32.mrf.mxu0
    %v1723 = vadd.f32 0.0, %v1722
    %1724 = vdwg.mxu0
    %v1725 = vand.u32 %v163, 4294901760
    %v1726 = vsub.f32 %v163, %v1725
    %v1727 = vand.u32 %v1726, 4294901760
    %v1728 = vsub.f32 %v1726, %v1727
    %v1729 = vand.u32 %v1728, 4294901760
    %1730 = vmatprep.subr.mxu0 %v1729
    %v1731 = vand.u32 %v162, 4294901760
    %v1732 = vsub.f32 %v162, %v1731
    %v1733 = vand.u32 %v1732, 4294901760
    %v1734 = vsub.f32 %v1732, %v1733
    %v1735 = vand.u32 %v1734, 4294901760
    %1736 = vmatpush1.msra.mxu0 %v1735
    %v1737 = vand.u32 %v155, 4294901760
    %v1738 = vsub.f32 %v155, %v1737
    %v1739 = vand.u32 %v1738, 4294901760
    %v1740 = vsub.f32 %v1738, %v1739
    %v1741 = vand.u32 %v1740, 4294901760
    %1742 = vmatprep.subr.mxu0 %v1741
    %v1743 = vand.u32 %v154, 4294901760
    %v1744 = vsub.f32 %v154, %v1743
    %v1745 = vand.u32 %v1744, 4294901760
    %v1746 = vsub.f32 %v1744, %v1745
    %v1747 = vand.u32 %v1746, 4294901760
    %1748 = vmatpush1.msra.mxu0 %v1747
    %v1749 = vand.u32 %v147, 4294901760
    %v1750 = vsub.f32 %v147, %v1749
    %v1751 = vand.u32 %v1750, 4294901760
    %v1752 = vsub.f32 %v1750, %v1751
    %v1753 = vand.u32 %v1752, 4294901760
    %1754 = vmatprep.subr.mxu0 %v1753
    %v1755 = vand.u32 %v146, 4294901760
    %v1756 = vsub.f32 %v146, %v1755
    %v1757 = vand.u32 %v1756, 4294901760
    %v1758 = vsub.f32 %v1756, %v1757
    %v1759 = vand.u32 %v1758, 4294901760
    %1760 = vmatpush1.msra.mxu0 %v1759
    %v1761 = vand.u32 %v139, 4294901760
    %v1762 = vsub.f32 %v139, %v1761
    %v1763 = vand.u32 %v1762, 4294901760
    %v1764 = vsub.f32 %v1762, %v1763
    %v1765 = vand.u32 %v1764, 4294901760
    %1766 = vmatprep.subr.mxu0 %v1765
    %v1767 = vand.u32 %v138, 4294901760
    %v1768 = vsub.f32 %v138, %v1767
    %v1769 = vand.u32 %v1768, 4294901760
    %v1770 = vsub.f32 %v1768, %v1769
    %v1771 = vand.u32 %v1770, 4294901760
    %1772 = vmatpush1.msra.mxu0 %v1771
    %v1773 = vand.u32 %v131, 4294901760
    %v1774 = vsub.f32 %v131, %v1773
    %v1775 = vand.u32 %v1774, 4294901760
    %v1776 = vsub.f32 %v1774, %v1775
    %v1777 = vand.u32 %v1776, 4294901760
    %1778 = vmatprep.subr.mxu0 %v1777
    %v1779 = vand.u32 %v130, 4294901760
    %v1780 = vsub.f32 %v130, %v1779
    %v1781 = vand.u32 %v1780, 4294901760
    %v1782 = vsub.f32 %v1780, %v1781
    %v1783 = vand.u32 %v1782, 4294901760
    %1784 = vmatpush1.msra.mxu0 %v1783
    %v1785 = vand.u32 %v123, 4294901760
    %v1786 = vsub.f32 %v123, %v1785
    %v1787 = vand.u32 %v1786, 4294901760
    %v1788 = vsub.f32 %v1786, %v1787
    %v1789 = vand.u32 %v1788, 4294901760
    %1790 = vmatprep.subr.mxu0 %v1789
    %v1791 = vand.u32 %v122, 4294901760
    %v1792 = vsub.f32 %v122, %v1791
    %v1793 = vand.u32 %v1792, 4294901760
    %v1794 = vsub.f32 %v1792, %v1793
    %v1795 = vand.u32 %v1794, 4294901760
    %1796 = vmatpush1.msra.mxu0 %v1795
    %v1797 = vand.u32 %v115, 4294901760
    %v1798 = vsub.f32 %v115, %v1797
    %v1799 = vand.u32 %v1798, 4294901760
    %v1800 = vsub.f32 %v1798, %v1799
    %v1801 = vand.u32 %v1800, 4294901760
    %1802 = vmatprep.subr.mxu0 %v1801
    %v1803 = vand.u32 %v114, 4294901760
    %v1804 = vsub.f32 %v114, %v1803
    %v1805 = vand.u32 %v1804, 4294901760
    %v1806 = vsub.f32 %v1804, %v1805
    %v1807 = vand.u32 %v1806, 4294901760
    %1808 = vmatpush1.msra.mxu0 %v1807
    %v1809 = vand.u32 %v107, 4294901760
    %v1810 = vsub.f32 %v107, %v1809
    %v1811 = vand.u32 %v1810, 4294901760
    %v1812 = vsub.f32 %v1810, %v1811
    %v1813 = vand.u32 %v1812, 4294901760
    %1814 = vmatprep.subr.mxu0 %v1813
    %v1815 = vand.u32 %v106, 4294901760
    %v1816 = vsub.f32 %v106, %v1815
    %v1817 = vand.u32 %v1816, 4294901760
    %v1818 = vsub.f32 %v1816, %v1817
    %v1819 = vand.u32 %v1818, 4294901760
    %1820 = vmatpush1.msra.mxu0 %v1819
    %v1821 = vand.u32 %v99, 4294901760
    %v1822 = vsub.f32 %v99, %v1821
    %v1823 = vand.u32 %v1822, 4294901760
    %v1824 = vsub.f32 %v1822, %v1823
    %v1825 = vand.u32 %v1824, 4294901760
    %1826 = vmatprep.subr.mxu0 %v1825
    %v1827 = vand.u32 %v98, 4294901760
    %v1828 = vsub.f32 %v98, %v1827
    %v1829 = vand.u32 %v1828, 4294901760
    %v1830 = vsub.f32 %v1828, %v1829
    %v1831 = vand.u32 %v1830, 4294901760
    %1832 = vmatpush1.msra.mxu0 %v1831
    %v1833 = vand.u32 %v91, 4294901760
    %v1834 = vsub.f32 %v91, %v1833
    %v1835 = vand.u32 %v1834, 4294901760
    %v1836 = vsub.f32 %v1834, %v1835
    %v1837 = vand.u32 %v1836, 4294901760
    %1838 = vmatprep.subr.mxu0 %v1837
    %v1839 = vand.u32 %v90, 4294901760
    %v1840 = vsub.f32 %v90, %v1839
    %v1841 = vand.u32 %v1840, 4294901760
    %v1842 = vsub.f32 %v1840, %v1841
    %v1843 = vand.u32 %v1842, 4294901760
    %1844 = vmatpush1.msra.mxu0 %v1843
    %v1845 = vand.u32 %v83, 4294901760
    %v1846 = vsub.f32 %v83, %v1845
    %v1847 = vand.u32 %v1846, 4294901760
    %v1848 = vsub.f32 %v1846, %v1847
    %v1849 = vand.u32 %v1848, 4294901760
    %1850 = vmatprep.subr.mxu0 %v1849
    %v1851 = vand.u32 %v82, 4294901760
    %v1852 = vsub.f32 %v82, %v1851
    %v1853 = vand.u32 %v1852, 4294901760
    %v1854 = vsub.f32 %v1852, %v1853
    %v1855 = vand.u32 %v1854, 4294901760
    %1856 = vmatpush1.msra.mxu0 %v1855
    %v1857 = vand.u32 %v75, 4294901760
    %v1858 = vsub.f32 %v75, %v1857
    %v1859 = vand.u32 %v1858, 4294901760
    %v1860 = vsub.f32 %v1858, %v1859
    %v1861 = vand.u32 %v1860, 4294901760
    %1862 = vmatprep.subr.mxu0 %v1861
    %v1863 = vand.u32 %v74, 4294901760
    %v1864 = vsub.f32 %v74, %v1863
    %v1865 = vand.u32 %v1864, 4294901760
    %v1866 = vsub.f32 %v1864, %v1865
    %v1867 = vand.u32 %v1866, 4294901760
    %1868 = vmatpush1.msra.mxu0 %v1867
    %v1869 = vand.u32 %v67, 4294901760
    %v1870 = vsub.f32 %v67, %v1869
    %v1871 = vand.u32 %v1870, 4294901760
    %v1872 = vsub.f32 %v1870, %v1871
    %v1873 = vand.u32 %v1872, 4294901760
    %1874 = vmatprep.subr.mxu0 %v1873
    %v1875 = vand.u32 %v66, 4294901760
    %v1876 = vsub.f32 %v66, %v1875
    %v1877 = vand.u32 %v1876, 4294901760
    %v1878 = vsub.f32 %v1876, %v1877
    %v1879 = vand.u32 %v1878, 4294901760
    %1880 = vmatpush1.msra.mxu0 %v1879
    %v1881 = vand.u32 %v59, 4294901760
    %v1882 = vsub.f32 %v59, %v1881
    %v1883 = vand.u32 %v1882, 4294901760
    %v1884 = vsub.f32 %v1882, %v1883
    %v1885 = vand.u32 %v1884, 4294901760
    %1886 = vmatprep.subr.mxu0 %v1885
    %v1887 = vand.u32 %v58, 4294901760
    %v1888 = vsub.f32 %v58, %v1887
    %v1889 = vand.u32 %v1888, 4294901760
    %v1890 = vsub.f32 %v1888, %v1889
    %v1891 = vand.u32 %v1890, 4294901760
    %1892 = vmatpush1.msra.mxu0 %v1891
    %v1893 = vand.u32 %v51, 4294901760
    %v1894 = vsub.f32 %v51, %v1893
    %v1895 = vand.u32 %v1894, 4294901760
    %v1896 = vsub.f32 %v1894, %v1895
    %v1897 = vand.u32 %v1896, 4294901760
    %1898 = vmatprep.subr.mxu0 %v1897
    %v1899 = vand.u32 %v50, 4294901760
    %v1900 = vsub.f32 %v50, %v1899
    %v1901 = vand.u32 %v1900, 4294901760
    %v1902 = vsub.f32 %v1900, %v1901
    %v1903 = vand.u32 %v1902, 4294901760
    %1904 = vmatpush1.msra.mxu0 %v1903
    %v1905 = vand.u32 %v43, 4294901760
    %v1906 = vsub.f32 %v43, %v1905
    %v1907 = vand.u32 %v1906, 4294901760
    %v1908 = vsub.f32 %v1906, %v1907
    %v1909 = vand.u32 %v1908, 4294901760
    %1910 = vmatprep.subr.mxu0 %v1909
    %v1911 = vand.u32 %v42, 4294901760
    %v1912 = vsub.f32 %v42, %v1911
    %v1913 = vand.u32 %v1912, 4294901760
    %v1914 = vsub.f32 %v1912, %v1913
    %v1915 = vand.u32 %v1914, 4294901760
    %1916 = vmatpush1.msra.mxu0 %v1915
    %v1917 = vand.u32 %v291, 4294901760
    %v1918 = vsub.f32 %v291, %v1917
    %v1919 = vand.u32 %v1918, 4294901760
    %v1920 = vsub.f32 %v1918, %v1919
    %v1921 = vand.u32 %v1920, 4294901760
    %1922 = vmatprep.subr.mxu0 %v1921
    %v1923 = vand.u32 %v290, 4294901760
    %v1924 = vsub.f32 %v290, %v1923
    %v1925 = vand.u32 %v1924, 4294901760
    %v1926 = vsub.f32 %v1924, %v1925
    %v1927 = vand.u32 %v1926, 4294901760
    %1928 = vmatpush2.msra.mxu0 %v1927
    %v1929 = vand.u32 %v283, 4294901760
    %v1930 = vsub.f32 %v283, %v1929
    %v1931 = vand.u32 %v1930, 4294901760
    %v1932 = vsub.f32 %v1930, %v1931
    %v1933 = vand.u32 %v1932, 4294901760
    %1934 = vmatprep.subr.mxu0 %v1933
    %v1935 = vand.u32 %v282, 4294901760
    %v1936 = vsub.f32 %v282, %v1935
    %v1937 = vand.u32 %v1936, 4294901760
    %v1938 = vsub.f32 %v1936, %v1937
    %v1939 = vand.u32 %v1938, 4294901760
    %1940 = vmatpush2.msra.mxu0 %v1939
    %v1941 = vand.u32 %v275, 4294901760
    %v1942 = vsub.f32 %v275, %v1941
    %v1943 = vand.u32 %v1942, 4294901760
    %v1944 = vsub.f32 %v1942, %v1943
    %v1945 = vand.u32 %v1944, 4294901760
    %1946 = vmatprep.subr.mxu0 %v1945
    %v1947 = vand.u32 %v274, 4294901760
    %v1948 = vsub.f32 %v274, %v1947
    %v1949 = vand.u32 %v1948, 4294901760
    %v1950 = vsub.f32 %v1948, %v1949
    %v1951 = vand.u32 %v1950, 4294901760
    %1952 = vmatpush2.msra.mxu0 %v1951
    %v1953 = vand.u32 %v267, 4294901760
    %v1954 = vsub.f32 %v267, %v1953
    %v1955 = vand.u32 %v1954, 4294901760
    %v1956 = vsub.f32 %v1954, %v1955
    %v1957 = vand.u32 %v1956, 4294901760
    %1958 = vmatprep.subr.mxu0 %v1957
    %v1959 = vand.u32 %v266, 4294901760
    %v1960 = vsub.f32 %v266, %v1959
    %v1961 = vand.u32 %v1960, 4294901760
    %v1962 = vsub.f32 %v1960, %v1961
    %v1963 = vand.u32 %v1962, 4294901760
    %1964 = vmatpush2.msra.mxu0 %v1963
    %v1965 = vand.u32 %v259, 4294901760
    %v1966 = vsub.f32 %v259, %v1965
    %v1967 = vand.u32 %v1966, 4294901760
    %v1968 = vsub.f32 %v1966, %v1967
    %v1969 = vand.u32 %v1968, 4294901760
    %1970 = vmatprep.subr.mxu0 %v1969
    %v1971 = vand.u32 %v258, 4294901760
    %v1972 = vsub.f32 %v258, %v1971
    %v1973 = vand.u32 %v1972, 4294901760
    %v1974 = vsub.f32 %v1972, %v1973
    %v1975 = vand.u32 %v1974, 4294901760
    %1976 = vmatpush2.msra.mxu0 %v1975
    %v1977 = vand.u32 %v251, 4294901760
    %v1978 = vsub.f32 %v251, %v1977
    %v1979 = vand.u32 %v1978, 4294901760
    %v1980 = vsub.f32 %v1978, %v1979
    %v1981 = vand.u32 %v1980, 4294901760
    %1982 = vmatprep.subr.mxu0 %v1981
    %v1983 = vand.u32 %v250, 4294901760
    %v1984 = vsub.f32 %v250, %v1983
    %v1985 = vand.u32 %v1984, 4294901760
    %v1986 = vsub.f32 %v1984, %v1985
    %v1987 = vand.u32 %v1986, 4294901760
    %1988 = vmatpush2.msra.mxu0 %v1987
    %v1989 = vand.u32 %v243, 4294901760
    %v1990 = vsub.f32 %v243, %v1989
    %v1991 = vand.u32 %v1990, 4294901760
    %v1992 = vsub.f32 %v1990, %v1991
    %v1993 = vand.u32 %v1992, 4294901760
    %1994 = vmatprep.subr.mxu0 %v1993
    %v1995 = vand.u32 %v242, 4294901760
    %v1996 = vsub.f32 %v242, %v1995
    %v1997 = vand.u32 %v1996, 4294901760
    %v1998 = vsub.f32 %v1996, %v1997
    %v1999 = vand.u32 %v1998, 4294901760
    %2000 = vmatpush2.msra.mxu0 %v1999
    %v2001 = vand.u32 %v235, 4294901760
    %v2002 = vsub.f32 %v235, %v2001
    %v2003 = vand.u32 %v2002, 4294901760
    %v2004 = vsub.f32 %v2002, %v2003
    %v2005 = vand.u32 %v2004, 4294901760
    %2006 = vmatprep.subr.mxu0 %v2005
    %v2007 = vand.u32 %v234, 4294901760
    %v2008 = vsub.f32 %v234, %v2007
    %v2009 = vand.u32 %v2008, 4294901760
    %v2010 = vsub.f32 %v2008, %v2009
    %v2011 = vand.u32 %v2010, 4294901760
    %2012 = vmatpush2.msra.mxu0 %v2011
    %v2013 = vand.u32 %v227, 4294901760
    %v2014 = vsub.f32 %v227, %v2013
    %v2015 = vand.u32 %v2014, 4294901760
    %v2016 = vsub.f32 %v2014, %v2015
    %v2017 = vand.u32 %v2016, 4294901760
    %2018 = vmatprep.subr.mxu0 %v2017
    %v2019 = vand.u32 %v226, 4294901760
    %v2020 = vsub.f32 %v226, %v2019
    %v2021 = vand.u32 %v2020, 4294901760
    %v2022 = vsub.f32 %v2020, %v2021
    %v2023 = vand.u32 %v2022, 4294901760
    %2024 = vmatpush2.msra.mxu0 %v2023
    %v2025 = vand.u32 %v219, 4294901760
    %v2026 = vsub.f32 %v219, %v2025
    %v2027 = vand.u32 %v2026, 4294901760
    %v2028 = vsub.f32 %v2026, %v2027
    %v2029 = vand.u32 %v2028, 4294901760
    %2030 = vmatprep.subr.mxu0 %v2029
    %v2031 = vand.u32 %v218, 4294901760
    %v2032 = vsub.f32 %v218, %v2031
    %v2033 = vand.u32 %v2032, 4294901760
    %v2034 = vsub.f32 %v2032, %v2033
    %v2035 = vand.u32 %v2034, 4294901760
    %2036 = vmatpush2.msra.mxu0 %v2035
    %v2037 = vand.u32 %v211, 4294901760
    %v2038 = vsub.f32 %v211, %v2037
    %v2039 = vand.u32 %v2038, 4294901760
    %v2040 = vsub.f32 %v2038, %v2039
    %v2041 = vand.u32 %v2040, 4294901760
    %2042 = vmatprep.subr.mxu0 %v2041
    %v2043 = vand.u32 %v210, 4294901760
    %v2044 = vsub.f32 %v210, %v2043
    %v2045 = vand.u32 %v2044, 4294901760
    %v2046 = vsub.f32 %v2044, %v2045
    %v2047 = vand.u32 %v2046, 4294901760
    %2048 = vmatpush2.msra.mxu0 %v2047
    %v2049 = vand.u32 %v203, 4294901760
    %v2050 = vsub.f32 %v203, %v2049
    %v2051 = vand.u32 %v2050, 4294901760
    %v2052 = vsub.f32 %v2050, %v2051
    %v2053 = vand.u32 %v2052, 4294901760
    %2054 = vmatprep.subr.mxu0 %v2053
    %v2055 = vand.u32 %v202, 4294901760
    %v2056 = vsub.f32 %v202, %v2055
    %v2057 = vand.u32 %v2056, 4294901760
    %v2058 = vsub.f32 %v2056, %v2057
    %v2059 = vand.u32 %v2058, 4294901760
    %2060 = vmatpush2.msra.mxu0 %v2059
    %v2061 = vand.u32 %v195, 4294901760
    %v2062 = vsub.f32 %v195, %v2061
    %v2063 = vand.u32 %v2062, 4294901760
    %v2064 = vsub.f32 %v2062, %v2063
    %v2065 = vand.u32 %v2064, 4294901760
    %2066 = vmatprep.subr.mxu0 %v2065
    %v2067 = vand.u32 %v194, 4294901760
    %v2068 = vsub.f32 %v194, %v2067
    %v2069 = vand.u32 %v2068, 4294901760
    %v2070 = vsub.f32 %v2068, %v2069
    %v2071 = vand.u32 %v2070, 4294901760
    %2072 = vmatpush2.msra.mxu0 %v2071
    %v2073 = vand.u32 %v187, 4294901760
    %v2074 = vsub.f32 %v187, %v2073
    %v2075 = vand.u32 %v2074, 4294901760
    %v2076 = vsub.f32 %v2074, %v2075
    %v2077 = vand.u32 %v2076, 4294901760
    %2078 = vmatprep.subr.mxu0 %v2077
    %v2079 = vand.u32 %v186, 4294901760
    %v2080 = vsub.f32 %v186, %v2079
    %v2081 = vand.u32 %v2080, 4294901760
    %v2082 = vsub.f32 %v2080, %v2081
    %v2083 = vand.u32 %v2082, 4294901760
    %2084 = vmatpush2.msra.mxu0 %v2083
    %v2085 = vand.u32 %v179, 4294901760
    %v2086 = vsub.f32 %v179, %v2085
    %v2087 = vand.u32 %v2086, 4294901760
    %v2088 = vsub.f32 %v2086, %v2087
    %v2089 = vand.u32 %v2088, 4294901760
    %2090 = vmatprep.subr.mxu0 %v2089
    %v2091 = vand.u32 %v178, 4294901760
    %v2092 = vsub.f32 %v178, %v2091
    %v2093 = vand.u32 %v2092, 4294901760
    %v2094 = vsub.f32 %v2092, %v2093
    %v2095 = vand.u32 %v2094, 4294901760
    %2096 = vmatpush2.msra.mxu0 %v2095
    %v2097 = vand.u32 %v171, 4294901760
    %v2098 = vsub.f32 %v171, %v2097
    %v2099 = vand.u32 %v2098, 4294901760
    %v2100 = vsub.f32 %v2098, %v2099
    %v2101 = vand.u32 %v2100, 4294901760
    %2102 = vmatprep.subr.mxu0 %v2101
    %v2103 = vand.u32 %v170, 4294901760
    %v2104 = vsub.f32 %v170, %v2103
    %v2105 = vand.u32 %v2104, 4294901760
    %v2106 = vsub.f32 %v2104, %v2105
    %v2107 = vand.u32 %v2106, 4294901760
    %2108 = vmatpush2.msra.mxu0 %v2107
    %v2109 = vand.u32 %v39, 4294901760
    %2110 = vmatprep.mubr.f32.mxu0 %v2109
    %v2111 = vand.u32 %v38, 4294901760
    %2112 = vmatmul.mubr.f32.gmra.mxu0 %v2111
    %v2113 = vpop.f32.mrf.mxu0
    %v2114 = vadd.f32 %v1721, %v2113
    %v2115 = vpop.f32.mrf.mxu0
    %v2116 = vadd.f32 %v1723, %v2115
    %2117 = vdwg.mxu0
    %v2118 = vand.u32 %v163, 4294901760
    %v2119 = vsub.f32 %v163, %v2118
    %2120 = vmatprep.subr.mxu0 %v2119
    %v2121 = vand.u32 %v162, 4294901760
    %v2122 = vsub.f32 %v162, %v2121
    %2123 = vmatpush1.msra.mxu0 %v2122
    %v2124 = vand.u32 %v155, 4294901760
    %v2125 = vsub.f32 %v155, %v2124
    %2126 = vmatprep.subr.mxu0 %v2125
    %v2127 = vand.u32 %v154, 4294901760
    %v2128 = vsub.f32 %v154, %v2127
    %2129 = vmatpush1.msra.mxu0 %v2128
    %v2130 = vand.u32 %v147, 4294901760
    %v2131 = vsub.f32 %v147, %v2130
    %2132 = vmatprep.subr.mxu0 %v2131
    %v2133 = vand.u32 %v146, 4294901760
    %v2134 = vsub.f32 %v146, %v2133
    %2135 = vmatpush1.msra.mxu0 %v2134
    %v2136 = vand.u32 %v139, 4294901760
    %v2137 = vsub.f32 %v139, %v2136
    %2138 = vmatprep.subr.mxu0 %v2137
    %v2139 = vand.u32 %v138, 4294901760
    %v2140 = vsub.f32 %v138, %v2139
    %2141 = vmatpush1.msra.mxu0 %v2140
    %v2142 = vand.u32 %v131, 4294901760
    %v2143 = vsub.f32 %v131, %v2142
    %2144 = vmatprep.subr.mxu0 %v2143
    %v2145 = vand.u32 %v130, 4294901760
    %v2146 = vsub.f32 %v130, %v2145
    %2147 = vmatpush1.msra.mxu0 %v2146
    %v2148 = vand.u32 %v123, 4294901760
    %v2149 = vsub.f32 %v123, %v2148
    %2150 = vmatprep.subr.mxu0 %v2149
    %v2151 = vand.u32 %v122, 4294901760
    %v2152 = vsub.f32 %v122, %v2151
    %2153 = vmatpush1.msra.mxu0 %v2152
    %v2154 = vand.u32 %v115, 4294901760
    %v2155 = vsub.f32 %v115, %v2154
    %2156 = vmatprep.subr.mxu0 %v2155
    %v2157 = vand.u32 %v114, 4294901760
    %v2158 = vsub.f32 %v114, %v2157
    %2159 = vmatpush1.msra.mxu0 %v2158
    %v2160 = vand.u32 %v107, 4294901760
    %v2161 = vsub.f32 %v107, %v2160
    %2162 = vmatprep.subr.mxu0 %v2161
    %v2163 = vand.u32 %v106, 4294901760
    %v2164 = vsub.f32 %v106, %v2163
    %2165 = vmatpush1.msra.mxu0 %v2164
    %v2166 = vand.u32 %v99, 4294901760
    %v2167 = vsub.f32 %v99, %v2166
    %2168 = vmatprep.subr.mxu0 %v2167
    %v2169 = vand.u32 %v98, 4294901760
    %v2170 = vsub.f32 %v98, %v2169
    %2171 = vmatpush1.msra.mxu0 %v2170
    %v2172 = vand.u32 %v91, 4294901760
    %v2173 = vsub.f32 %v91, %v2172
    %2174 = vmatprep.subr.mxu0 %v2173
    %v2175 = vand.u32 %v90, 4294901760
    %v2176 = vsub.f32 %v90, %v2175
    %2177 = vmatpush1.msra.mxu0 %v2176
    %v2178 = vand.u32 %v83, 4294901760
    %v2179 = vsub.f32 %v83, %v2178
    %2180 = vmatprep.subr.mxu0 %v2179
    %v2181 = vand.u32 %v82, 4294901760
    %v2182 = vsub.f32 %v82, %v2181
    %2183 = vmatpush1.msra.mxu0 %v2182
    %v2184 = vand.u32 %v75, 4294901760
    %v2185 = vsub.f32 %v75, %v2184
    %2186 = vmatprep.subr.mxu0 %v2185
    %v2187 = vand.u32 %v74, 4294901760
    %v2188 = vsub.f32 %v74, %v2187
    %2189 = vmatpush1.msra.mxu0 %v2188
    %v2190 = vand.u32 %v67, 4294901760
    %v2191 = vsub.f32 %v67, %v2190
    %2192 = vmatprep.subr.mxu0 %v2191
    %v2193 = vand.u32 %v66, 4294901760
    %v2194 = vsub.f32 %v66, %v2193
    %2195 = vmatpush1.msra.mxu0 %v2194
    %v2196 = vand.u32 %v59, 4294901760
    %v2197 = vsub.f32 %v59, %v2196
    %2198 = vmatprep.subr.mxu0 %v2197
    %v2199 = vand.u32 %v58, 4294901760
    %v2200 = vsub.f32 %v58, %v2199
    %2201 = vmatpush1.msra.mxu0 %v2200
    %v2202 = vand.u32 %v51, 4294901760
    %v2203 = vsub.f32 %v51, %v2202
    %2204 = vmatprep.subr.mxu0 %v2203
    %v2205 = vand.u32 %v50, 4294901760
    %v2206 = vsub.f32 %v50, %v2205
    %2207 = vmatpush1.msra.mxu0 %v2206
    %v2208 = vand.u32 %v43, 4294901760
    %v2209 = vsub.f32 %v43, %v2208
    %2210 = vmatprep.subr.mxu0 %v2209
    %v2211 = vand.u32 %v42, 4294901760
    %v2212 = vsub.f32 %v42, %v2211
    %2213 = vmatpush1.msra.mxu0 %v2212
    %v2214 = vand.u32 %v291, 4294901760
    %v2215 = vsub.f32 %v291, %v2214
    %2216 = vmatprep.subr.mxu0 %v2215
    %v2217 = vand.u32 %v290, 4294901760
    %v2218 = vsub.f32 %v290, %v2217
    %2219 = vmatpush2.msra.mxu0 %v2218
    %v2220 = vand.u32 %v283, 4294901760
    %v2221 = vsub.f32 %v283, %v2220
    %2222 = vmatprep.subr.mxu0 %v2221
    %v2223 = vand.u32 %v282, 4294901760
    %v2224 = vsub.f32 %v282, %v2223
    %2225 = vmatpush2.msra.mxu0 %v2224
    %v2226 = vand.u32 %v275, 4294901760
    %v2227 = vsub.f32 %v275, %v2226
    %2228 = vmatprep.subr.mxu0 %v2227
    %v2229 = vand.u32 %v274, 4294901760
    %v2230 = vsub.f32 %v274, %v2229
    %2231 = vmatpush2.msra.mxu0 %v2230
    %v2232 = vand.u32 %v267, 4294901760
    %v2233 = vsub.f32 %v267, %v2232
    %2234 = vmatprep.subr.mxu0 %v2233
    %v2235 = vand.u32 %v266, 4294901760
    %v2236 = vsub.f32 %v266, %v2235
    %2237 = vmatpush2.msra.mxu0 %v2236
    %v2238 = vand.u32 %v259, 4294901760
    %v2239 = vsub.f32 %v259, %v2238
    %2240 = vmatprep.subr.mxu0 %v2239
    %v2241 = vand.u32 %v258, 4294901760
    %v2242 = vsub.f32 %v258, %v2241
    %2243 = vmatpush2.msra.mxu0 %v2242
    %v2244 = vand.u32 %v251, 4294901760
    %v2245 = vsub.f32 %v251, %v2244
    %2246 = vmatprep.subr.mxu0 %v2245
    %v2247 = vand.u32 %v250, 4294901760
    %v2248 = vsub.f32 %v250, %v2247
    %2249 = vmatpush2.msra.mxu0 %v2248
    %v2250 = vand.u32 %v243, 4294901760
    %v2251 = vsub.f32 %v243, %v2250
    %2252 = vmatprep.subr.mxu0 %v2251
    %v2253 = vand.u32 %v242, 4294901760
    %v2254 = vsub.f32 %v242, %v2253
    %2255 = vmatpush2.msra.mxu0 %v2254
    %v2256 = vand.u32 %v235, 4294901760
    %v2257 = vsub.f32 %v235, %v2256
    %2258 = vmatprep.subr.mxu0 %v2257
    %v2259 = vand.u32 %v234, 4294901760
    %v2260 = vsub.f32 %v234, %v2259
    %2261 = vmatpush2.msra.mxu0 %v2260
    %v2262 = vand.u32 %v227, 4294901760
    %v2263 = vsub.f32 %v227, %v2262
    %2264 = vmatprep.subr.mxu0 %v2263
    %v2265 = vand.u32 %v226, 4294901760
    %v2266 = vsub.f32 %v226, %v2265
    %2267 = vmatpush2.msra.mxu0 %v2266
    %v2268 = vand.u32 %v219, 4294901760
    %v2269 = vsub.f32 %v219, %v2268
    %2270 = vmatprep.subr.mxu0 %v2269
    %v2271 = vand.u32 %v218, 4294901760
    %v2272 = vsub.f32 %v218, %v2271
    %2273 = vmatpush2.msra.mxu0 %v2272
    %v2274 = vand.u32 %v211, 4294901760
    %v2275 = vsub.f32 %v211, %v2274
    %2276 = vmatprep.subr.mxu0 %v2275
    %v2277 = vand.u32 %v210, 4294901760
    %v2278 = vsub.f32 %v210, %v2277
    %2279 = vmatpush2.msra.mxu0 %v2278
    %v2280 = vand.u32 %v203, 4294901760
    %v2281 = vsub.f32 %v203, %v2280
    %2282 = vmatprep.subr.mxu0 %v2281
    %v2283 = vand.u32 %v202, 4294901760
    %v2284 = vsub.f32 %v202, %v2283
    %2285 = vmatpush2.msra.mxu0 %v2284
    %v2286 = vand.u32 %v195, 4294901760
    %v2287 = vsub.f32 %v195, %v2286
    %2288 = vmatprep.subr.mxu0 %v2287
    %v2289 = vand.u32 %v194, 4294901760
    %v2290 = vsub.f32 %v194, %v2289
    %2291 = vmatpush2.msra.mxu0 %v2290
    %v2292 = vand.u32 %v187, 4294901760
    %v2293 = vsub.f32 %v187, %v2292
    %2294 = vmatprep.subr.mxu0 %v2293
    %v2295 = vand.u32 %v186, 4294901760
    %v2296 = vsub.f32 %v186, %v2295
    %2297 = vmatpush2.msra.mxu0 %v2296
    %v2298 = vand.u32 %v179, 4294901760
    %v2299 = vsub.f32 %v179, %v2298
    %2300 = vmatprep.subr.mxu0 %v2299
    %v2301 = vand.u32 %v178, 4294901760
    %v2302 = vsub.f32 %v178, %v2301
    %2303 = vmatpush2.msra.mxu0 %v2302
    %v2304 = vand.u32 %v171, 4294901760
    %v2305 = vsub.f32 %v171, %v2304
    %2306 = vmatprep.subr.mxu0 %v2305
    %v2307 = vand.u32 %v170, 4294901760
    %v2308 = vsub.f32 %v170, %v2307
    %2309 = vmatpush2.msra.mxu0 %v2308
    %v2310 = vand.u32 %v39, 4294901760
    %v2311 = vsub.f32 %v39, %v2310
    %2312 = vmatprep.mubr.f32.mxu0 %v2311
    %v2313 = vand.u32 %v38, 4294901760
    %v2314 = vsub.f32 %v38, %v2313
    %2315 = vmatmul.mubr.f32.gmra.mxu0 %v2314
    %v2316 = vpop.f32.mrf.mxu0
    %v2317 = vadd.f32 %v2114, %v2316
    %v2318 = vpop.f32.mrf.mxu0
    %v2319 = vadd.f32 %v2116, %v2318
    %2320 = vdwg.mxu0
    %v2321 = vand.u32 %v163, 4294901760
    %2322 = vmatprep.subr.mxu0 %v2321
    %v2323 = vand.u32 %v162, 4294901760
    %2324 = vmatpush1.msra.mxu0 %v2323
    %v2325 = vand.u32 %v155, 4294901760
    %2326 = vmatprep.subr.mxu0 %v2325
    %v2327 = vand.u32 %v154, 4294901760
    %2328 = vmatpush1.msra.mxu0 %v2327
    %v2329 = vand.u32 %v147, 4294901760
    %2330 = vmatprep.subr.mxu0 %v2329
    %v2331 = vand.u32 %v146, 4294901760
    %2332 = vmatpush1.msra.mxu0 %v2331
    %v2333 = vand.u32 %v139, 4294901760
    %2334 = vmatprep.subr.mxu0 %v2333
    %v2335 = vand.u32 %v138, 4294901760
    %2336 = vmatpush1.msra.mxu0 %v2335
    %v2337 = vand.u32 %v131, 4294901760
    %2338 = vmatprep.subr.mxu0 %v2337
    %v2339 = vand.u32 %v130, 4294901760
    %2340 = vmatpush1.msra.mxu0 %v2339
    %v2341 = vand.u32 %v123, 4294901760
    %2342 = vmatprep.subr.mxu0 %v2341
    %v2343 = vand.u32 %v122, 4294901760
    %2344 = vmatpush1.msra.mxu0 %v2343
    %v2345 = vand.u32 %v115, 4294901760
    %2346 = vmatprep.subr.mxu0 %v2345
    %v2347 = vand.u32 %v114, 4294901760
    %2348 = vmatpush1.msra.mxu0 %v2347
    %v2349 = vand.u32 %v107, 4294901760
    %2350 = vmatprep.subr.mxu0 %v2349
    %v2351 = vand.u32 %v106, 4294901760
    %2352 = vmatpush1.msra.mxu0 %v2351
    %v2353 = vand.u32 %v99, 4294901760
    %2354 = vmatprep.subr.mxu0 %v2353
    %v2355 = vand.u32 %v98, 4294901760
    %2356 = vmatpush1.msra.mxu0 %v2355
    %v2357 = vand.u32 %v91, 4294901760
    %2358 = vmatprep.subr.mxu0 %v2357
    %v2359 = vand.u32 %v90, 4294901760
    %2360 = vmatpush1.msra.mxu0 %v2359
    %v2361 = vand.u32 %v83, 4294901760
    %2362 = vmatprep.subr.mxu0 %v2361
    %v2363 = vand.u32 %v82, 4294901760
    %2364 = vmatpush1.msra.mxu0 %v2363
    %v2365 = vand.u32 %v75, 4294901760
    %2366 = vmatprep.subr.mxu0 %v2365
    %v2367 = vand.u32 %v74, 4294901760
    %2368 = vmatpush1.msra.mxu0 %v2367
    %v2369 = vand.u32 %v67, 4294901760
    %2370 = vmatprep.subr.mxu0 %v2369
    %v2371 = vand.u32 %v66, 4294901760
    %2372 = vmatpush1.msra.mxu0 %v2371
    %v2373 = vand.u32 %v59, 4294901760
    %2374 = vmatprep.subr.mxu0 %v2373
    %v2375 = vand.u32 %v58, 4294901760
    %2376 = vmatpush1.msra.mxu0 %v2375
    %v2377 = vand.u32 %v51, 4294901760
    %2378 = vmatprep.subr.mxu0 %v2377
    %v2379 = vand.u32 %v50, 4294901760
    %2380 = vmatpush1.msra.mxu0 %v2379
    %v2381 = vand.u32 %v43, 4294901760
    %2382 = vmatprep.subr.mxu0 %v2381
    %v2383 = vand.u32 %v42, 4294901760
    %2384 = vmatpush1.msra.mxu0 %v2383
    %v2385 = vand.u32 %v291, 4294901760
    %2386 = vmatprep.subr.mxu0 %v2385
    %v2387 = vand.u32 %v290, 4294901760
    %2388 = vmatpush2.msra.mxu0 %v2387
    %v2389 = vand.u32 %v283, 4294901760
    %2390 = vmatprep.subr.mxu0 %v2389
    %v2391 = vand.u32 %v282, 4294901760
    %2392 = vmatpush2.msra.mxu0 %v2391
    %v2393 = vand.u32 %v275, 4294901760
    %2394 = vmatprep.subr.mxu0 %v2393
    %v2395 = vand.u32 %v274, 4294901760
    %2396 = vmatpush2.msra.mxu0 %v2395
    %v2397 = vand.u32 %v267, 4294901760
    %2398 = vmatprep.subr.mxu0 %v2397
    %v2399 = vand.u32 %v266, 4294901760
    %2400 = vmatpush2.msra.mxu0 %v2399
    %v2401 = vand.u32 %v259, 4294901760
    %2402 = vmatprep.subr.mxu0 %v2401
    %v2403 = vand.u32 %v258, 4294901760
    %2404 = vmatpush2.msra.mxu0 %v2403
    %v2405 = vand.u32 %v251, 4294901760
    %2406 = vmatprep.subr.mxu0 %v2405
    %v2407 = vand.u32 %v250, 4294901760
    %2408 = vmatpush2.msra.mxu0 %v2407
    %v2409 = vand.u32 %v243, 4294901760
    %2410 = vmatprep.subr.mxu0 %v2409
    %v2411 = vand.u32 %v242, 4294901760
    %2412 = vmatpush2.msra.mxu0 %v2411
    %v2413 = vand.u32 %v235, 4294901760
    %2414 = vmatprep.subr.mxu0 %v2413
    %v2415 = vand.u32 %v234, 4294901760
    %2416 = vmatpush2.msra.mxu0 %v2415
    %v2417 = vand.u32 %v227, 4294901760
    %2418 = vmatprep.subr.mxu0 %v2417
    %v2419 = vand.u32 %v226, 4294901760
    %2420 = vmatpush2.msra.mxu0 %v2419
    %v2421 = vand.u32 %v219, 4294901760
    %2422 = vmatprep.subr.mxu0 %v2421
    %v2423 = vand.u32 %v218, 4294901760
    %2424 = vmatpush2.msra.mxu0 %v2423
    %v2425 = vand.u32 %v211, 4294901760
    %2426 = vmatprep.subr.mxu0 %v2425
    %v2427 = vand.u32 %v210, 4294901760
    %2428 = vmatpush2.msra.mxu0 %v2427
    %v2429 = vand.u32 %v203, 4294901760
    %2430 = vmatprep.subr.mxu0 %v2429
    %v2431 = vand.u32 %v202, 4294901760
    %2432 = vmatpush2.msra.mxu0 %v2431
    %v2433 = vand.u32 %v195, 4294901760
    %2434 = vmatprep.subr.mxu0 %v2433
    %v2435 = vand.u32 %v194, 4294901760
    %2436 = vmatpush2.msra.mxu0 %v2435
    %v2437 = vand.u32 %v187, 4294901760
    %2438 = vmatprep.subr.mxu0 %v2437
    %v2439 = vand.u32 %v186, 4294901760
    %2440 = vmatpush2.msra.mxu0 %v2439
    %v2441 = vand.u32 %v179, 4294901760
    %2442 = vmatprep.subr.mxu0 %v2441
    %v2443 = vand.u32 %v178, 4294901760
    %2444 = vmatpush2.msra.mxu0 %v2443
    %v2445 = vand.u32 %v171, 4294901760
    %2446 = vmatprep.subr.mxu0 %v2445
    %v2447 = vand.u32 %v170, 4294901760
    %2448 = vmatpush2.msra.mxu0 %v2447
    %v2449 = vand.u32 %v39, 4294901760
    %v2450 = vsub.f32 %v39, %v2449
    %v2451 = vand.u32 %v2450, 4294901760
    %2452 = vmatprep.mubr.f32.mxu0 %v2451
    %v2453 = vand.u32 %v38, 4294901760
    %v2454 = vsub.f32 %v38, %v2453
    %v2455 = vand.u32 %v2454, 4294901760
    %2456 = vmatmul.mubr.f32.gmra.mxu0 %v2455
    %v2457 = vpop.f32.mrf.mxu0
    %v2458 = vadd.f32 %v2317, %v2457
    %v2459 = vpop.f32.mrf.mxu0
    %v2460 = vadd.f32 %v2319, %v2459
    %2461 = vdwg.mxu0
    %v2462 = vand.u32 %v163, 4294901760
    %v2463 = vsub.f32 %v163, %v2462
    %v2464 = vand.u32 %v2463, 4294901760
    %2465 = vmatprep.subr.mxu0 %v2464
    %v2466 = vand.u32 %v162, 4294901760
    %v2467 = vsub.f32 %v162, %v2466
    %v2468 = vand.u32 %v2467, 4294901760
    %2469 = vmatpush1.msra.mxu0 %v2468
    %v2470 = vand.u32 %v155, 4294901760
    %v2471 = vsub.f32 %v155, %v2470
    %v2472 = vand.u32 %v2471, 4294901760
    %2473 = vmatprep.subr.mxu0 %v2472
    %v2474 = vand.u32 %v154, 4294901760
    %v2475 = vsub.f32 %v154, %v2474
    %v2476 = vand.u32 %v2475, 4294901760
    %2477 = vmatpush1.msra.mxu0 %v2476
    %v2478 = vand.u32 %v147, 4294901760
    %v2479 = vsub.f32 %v147, %v2478
    %v2480 = vand.u32 %v2479, 4294901760
    %2481 = vmatprep.subr.mxu0 %v2480
    %v2482 = vand.u32 %v146, 4294901760
    %v2483 = vsub.f32 %v146, %v2482
    %v2484 = vand.u32 %v2483, 4294901760
    %2485 = vmatpush1.msra.mxu0 %v2484
    %v2486 = vand.u32 %v139, 4294901760
    %v2487 = vsub.f32 %v139, %v2486
    %v2488 = vand.u32 %v2487, 4294901760
    %2489 = vmatprep.subr.mxu0 %v2488
    %v2490 = vand.u32 %v138, 4294901760
    %v2491 = vsub.f32 %v138, %v2490
    %v2492 = vand.u32 %v2491, 4294901760
    %2493 = vmatpush1.msra.mxu0 %v2492
    %v2494 = vand.u32 %v131, 4294901760
    %v2495 = vsub.f32 %v131, %v2494
    %v2496 = vand.u32 %v2495, 4294901760
    %2497 = vmatprep.subr.mxu0 %v2496
    %v2498 = vand.u32 %v130, 4294901760
    %v2499 = vsub.f32 %v130, %v2498
    %v2500 = vand.u32 %v2499, 4294901760
    %2501 = vmatpush1.msra.mxu0 %v2500
    %v2502 = vand.u32 %v123, 4294901760
    %v2503 = vsub.f32 %v123, %v2502
    %v2504 = vand.u32 %v2503, 4294901760
    %2505 = vmatprep.subr.mxu0 %v2504
    %v2506 = vand.u32 %v122, 4294901760
    %v2507 = vsub.f32 %v122, %v2506
    %v2508 = vand.u32 %v2507, 4294901760
    %2509 = vmatpush1.msra.mxu0 %v2508
    %v2510 = vand.u32 %v115, 4294901760
    %v2511 = vsub.f32 %v115, %v2510
    %v2512 = vand.u32 %v2511, 4294901760
    %2513 = vmatprep.subr.mxu0 %v2512
    %v2514 = vand.u32 %v114, 4294901760
    %v2515 = vsub.f32 %v114, %v2514
    %v2516 = vand.u32 %v2515, 4294901760
    %2517 = vmatpush1.msra.mxu0 %v2516
    %v2518 = vand.u32 %v107, 4294901760
    %v2519 = vsub.f32 %v107, %v2518
    %v2520 = vand.u32 %v2519, 4294901760
    %2521 = vmatprep.subr.mxu0 %v2520
    %v2522 = vand.u32 %v106, 4294901760
    %v2523 = vsub.f32 %v106, %v2522
    %v2524 = vand.u32 %v2523, 4294901760
    %2525 = vmatpush1.msra.mxu0 %v2524
    %v2526 = vand.u32 %v99, 4294901760
    %v2527 = vsub.f32 %v99, %v2526
    %v2528 = vand.u32 %v2527, 4294901760
    %2529 = vmatprep.subr.mxu0 %v2528
    %v2530 = vand.u32 %v98, 4294901760
    %v2531 = vsub.f32 %v98, %v2530
    %v2532 = vand.u32 %v2531, 4294901760
    %2533 = vmatpush1.msra.mxu0 %v2532
    %v2534 = vand.u32 %v91, 4294901760
    %v2535 = vsub.f32 %v91, %v2534
    %v2536 = vand.u32 %v2535, 4294901760
    %2537 = vmatprep.subr.mxu0 %v2536
    %v2538 = vand.u32 %v90, 4294901760
    %v2539 = vsub.f32 %v90, %v2538
    %v2540 = vand.u32 %v2539, 4294901760
    %2541 = vmatpush1.msra.mxu0 %v2540
    %v2542 = vand.u32 %v83, 4294901760
    %v2543 = vsub.f32 %v83, %v2542
    %v2544 = vand.u32 %v2543, 4294901760
    %2545 = vmatprep.subr.mxu0 %v2544
    %v2546 = vand.u32 %v82, 4294901760
    %v2547 = vsub.f32 %v82, %v2546
    %v2548 = vand.u32 %v2547, 4294901760
    %2549 = vmatpush1.msra.mxu0 %v2548
    %v2550 = vand.u32 %v75, 4294901760
    %v2551 = vsub.f32 %v75, %v2550
    %v2552 = vand.u32 %v2551, 4294901760
    %2553 = vmatprep.subr.mxu0 %v2552
    %v2554 = vand.u32 %v74, 4294901760
    %v2555 = vsub.f32 %v74, %v2554
    %v2556 = vand.u32 %v2555, 4294901760
    %2557 = vmatpush1.msra.mxu0 %v2556
    %v2558 = vand.u32 %v67, 4294901760
    %v2559 = vsub.f32 %v67, %v2558
    %v2560 = vand.u32 %v2559, 4294901760
    %2561 = vmatprep.subr.mxu0 %v2560
    %v2562 = vand.u32 %v66, 4294901760
    %v2563 = vsub.f32 %v66, %v2562
    %v2564 = vand.u32 %v2563, 4294901760
    %2565 = vmatpush1.msra.mxu0 %v2564
    %v2566 = vand.u32 %v59, 4294901760
    %v2567 = vsub.f32 %v59, %v2566
    %v2568 = vand.u32 %v2567, 4294901760
    %2569 = vmatprep.subr.mxu0 %v2568
    %v2570 = vand.u32 %v58, 4294901760
    %v2571 = vsub.f32 %v58, %v2570
    %v2572 = vand.u32 %v2571, 4294901760
    %2573 = vmatpush1.msra.mxu0 %v2572
    %v2574 = vand.u32 %v51, 4294901760
    %v2575 = vsub.f32 %v51, %v2574
    %v2576 = vand.u32 %v2575, 4294901760
    %2577 = vmatprep.subr.mxu0 %v2576
    %v2578 = vand.u32 %v50, 4294901760
    %v2579 = vsub.f32 %v50, %v2578
    %v2580 = vand.u32 %v2579, 4294901760
    %2581 = vmatpush1.msra.mxu0 %v2580
    %v2582 = vand.u32 %v43, 4294901760
    %v2583 = vsub.f32 %v43, %v2582
    %v2584 = vand.u32 %v2583, 4294901760
    %2585 = vmatprep.subr.mxu0 %v2584
    %v2586 = vand.u32 %v42, 4294901760
    %v2587 = vsub.f32 %v42, %v2586
    %v2588 = vand.u32 %v2587, 4294901760
    %2589 = vmatpush1.msra.mxu0 %v2588
    %v2590 = vand.u32 %v291, 4294901760
    %v2591 = vsub.f32 %v291, %v2590
    %v2592 = vand.u32 %v2591, 4294901760
    %2593 = vmatprep.subr.mxu0 %v2592
    %v2594 = vand.u32 %v290, 4294901760
    %v2595 = vsub.f32 %v290, %v2594
    %v2596 = vand.u32 %v2595, 4294901760
    %2597 = vmatpush2.msra.mxu0 %v2596
    %v2598 = vand.u32 %v283, 4294901760
    %v2599 = vsub.f32 %v283, %v2598
    %v2600 = vand.u32 %v2599, 4294901760
    %2601 = vmatprep.subr.mxu0 %v2600
    %v2602 = vand.u32 %v282, 4294901760
    %v2603 = vsub.f32 %v282, %v2602
    %v2604 = vand.u32 %v2603, 4294901760
    %2605 = vmatpush2.msra.mxu0 %v2604
    %v2606 = vand.u32 %v275, 4294901760
    %v2607 = vsub.f32 %v275, %v2606
    %v2608 = vand.u32 %v2607, 4294901760
    %2609 = vmatprep.subr.mxu0 %v2608
    %v2610 = vand.u32 %v274, 4294901760
    %v2611 = vsub.f32 %v274, %v2610
    %v2612 = vand.u32 %v2611, 4294901760
    %2613 = vmatpush2.msra.mxu0 %v2612
    %v2614 = vand.u32 %v267, 4294901760
    %v2615 = vsub.f32 %v267, %v2614
    %v2616 = vand.u32 %v2615, 4294901760
    %2617 = vmatprep.subr.mxu0 %v2616
    %v2618 = vand.u32 %v266, 4294901760
    %v2619 = vsub.f32 %v266, %v2618
    %v2620 = vand.u32 %v2619, 4294901760
    %2621 = vmatpush2.msra.mxu0 %v2620
    %v2622 = vand.u32 %v259, 4294901760
    %v2623 = vsub.f32 %v259, %v2622
    %v2624 = vand.u32 %v2623, 4294901760
    %2625 = vmatprep.subr.mxu0 %v2624
    %v2626 = vand.u32 %v258, 4294901760
    %v2627 = vsub.f32 %v258, %v2626
    %v2628 = vand.u32 %v2627, 4294901760
    %2629 = vmatpush2.msra.mxu0 %v2628
    %v2630 = vand.u32 %v251, 4294901760
    %v2631 = vsub.f32 %v251, %v2630
    %v2632 = vand.u32 %v2631, 4294901760
    %2633 = vmatprep.subr.mxu0 %v2632
    %v2634 = vand.u32 %v250, 4294901760
    %v2635 = vsub.f32 %v250, %v2634
    %v2636 = vand.u32 %v2635, 4294901760
    %2637 = vmatpush2.msra.mxu0 %v2636
    %v2638 = vand.u32 %v243, 4294901760
    %v2639 = vsub.f32 %v243, %v2638
    %v2640 = vand.u32 %v2639, 4294901760
    %2641 = vmatprep.subr.mxu0 %v2640
    %v2642 = vand.u32 %v242, 4294901760
    %v2643 = vsub.f32 %v242, %v2642
    %v2644 = vand.u32 %v2643, 4294901760
    %2645 = vmatpush2.msra.mxu0 %v2644
    %v2646 = vand.u32 %v235, 4294901760
    %v2647 = vsub.f32 %v235, %v2646
    %v2648 = vand.u32 %v2647, 4294901760
    %2649 = vmatprep.subr.mxu0 %v2648
    %v2650 = vand.u32 %v234, 4294901760
    %v2651 = vsub.f32 %v234, %v2650
    %v2652 = vand.u32 %v2651, 4294901760
    %2653 = vmatpush2.msra.mxu0 %v2652
    %v2654 = vand.u32 %v227, 4294901760
    %v2655 = vsub.f32 %v227, %v2654
    %v2656 = vand.u32 %v2655, 4294901760
    %2657 = vmatprep.subr.mxu0 %v2656
    %v2658 = vand.u32 %v226, 4294901760
    %v2659 = vsub.f32 %v226, %v2658
    %v2660 = vand.u32 %v2659, 4294901760
    %2661 = vmatpush2.msra.mxu0 %v2660
    %v2662 = vand.u32 %v219, 4294901760
    %v2663 = vsub.f32 %v219, %v2662
    %v2664 = vand.u32 %v2663, 4294901760
    %2665 = vmatprep.subr.mxu0 %v2664
    %v2666 = vand.u32 %v218, 4294901760
    %v2667 = vsub.f32 %v218, %v2666
    %v2668 = vand.u32 %v2667, 4294901760
    %2669 = vmatpush2.msra.mxu0 %v2668
    %v2670 = vand.u32 %v211, 4294901760
    %v2671 = vsub.f32 %v211, %v2670
    %v2672 = vand.u32 %v2671, 4294901760
    %2673 = vmatprep.subr.mxu0 %v2672
    %v2674 = vand.u32 %v210, 4294901760
    %v2675 = vsub.f32 %v210, %v2674
    %v2676 = vand.u32 %v2675, 4294901760
    %2677 = vmatpush2.msra.mxu0 %v2676
    %v2678 = vand.u32 %v203, 4294901760
    %v2679 = vsub.f32 %v203, %v2678
    %v2680 = vand.u32 %v2679, 4294901760
    %2681 = vmatprep.subr.mxu0 %v2680
    %v2682 = vand.u32 %v202, 4294901760
    %v2683 = vsub.f32 %v202, %v2682
    %v2684 = vand.u32 %v2683, 4294901760
    %2685 = vmatpush2.msra.mxu0 %v2684
    %v2686 = vand.u32 %v195, 4294901760
    %v2687 = vsub.f32 %v195, %v2686
    %v2688 = vand.u32 %v2687, 4294901760
    %2689 = vmatprep.subr.mxu0 %v2688
    %v2690 = vand.u32 %v194, 4294901760
    %v2691 = vsub.f32 %v194, %v2690
    %v2692 = vand.u32 %v2691, 4294901760
    %2693 = vmatpush2.msra.mxu0 %v2692
    %v2694 = vand.u32 %v187, 4294901760
    %v2695 = vsub.f32 %v187, %v2694
    %v2696 = vand.u32 %v2695, 4294901760
    %2697 = vmatprep.subr.mxu0 %v2696
    %v2698 = vand.u32 %v186, 4294901760
    %v2699 = vsub.f32 %v186, %v2698
    %v2700 = vand.u32 %v2699, 4294901760
    %2701 = vmatpush2.msra.mxu0 %v2700
    %v2702 = vand.u32 %v179, 4294901760
    %v2703 = vsub.f32 %v179, %v2702
    %v2704 = vand.u32 %v2703, 4294901760
    %2705 = vmatprep.subr.mxu0 %v2704
    %v2706 = vand.u32 %v178, 4294901760
    %v2707 = vsub.f32 %v178, %v2706
    %v2708 = vand.u32 %v2707, 4294901760
    %2709 = vmatpush2.msra.mxu0 %v2708
    %v2710 = vand.u32 %v171, 4294901760
    %v2711 = vsub.f32 %v171, %v2710
    %v2712 = vand.u32 %v2711, 4294901760
    %2713 = vmatprep.subr.mxu0 %v2712
    %v2714 = vand.u32 %v170, 4294901760
    %v2715 = vsub.f32 %v170, %v2714
    %v2716 = vand.u32 %v2715, 4294901760
    %2717 = vmatpush2.msra.mxu0 %v2716
    %v2718 = vand.u32 %v39, 4294901760
    %2719 = vmatprep.mubr.f32.mxu0 %v2718
    %v2720 = vand.u32 %v38, 4294901760
    %2721 = vmatmul.mubr.f32.gmra.mxu0 %v2720
    %v2722 = vpop.f32.mrf.mxu0
    %v2723 = vadd.f32 %v2458, %v2722
    %v2724 = vpop.f32.mrf.mxu0
    %v2725 = vadd.f32 %v2460, %v2724
    %2726 = vdwg.mxu0
    %v2727 = vand.u32 %v163, 4294901760
    %2728 = vmatprep.subr.mxu0 %v2727
    %v2729 = vand.u32 %v162, 4294901760
    %2730 = vmatpush1.msra.mxu0 %v2729
    %v2731 = vand.u32 %v155, 4294901760
    %2732 = vmatprep.subr.mxu0 %v2731
    %v2733 = vand.u32 %v154, 4294901760
    %2734 = vmatpush1.msra.mxu0 %v2733
    %v2735 = vand.u32 %v147, 4294901760
    %2736 = vmatprep.subr.mxu0 %v2735
    %v2737 = vand.u32 %v146, 4294901760
    %2738 = vmatpush1.msra.mxu0 %v2737
    %v2739 = vand.u32 %v139, 4294901760
    %2740 = vmatprep.subr.mxu0 %v2739
    %v2741 = vand.u32 %v138, 4294901760
    %2742 = vmatpush1.msra.mxu0 %v2741
    %v2743 = vand.u32 %v131, 4294901760
    %2744 = vmatprep.subr.mxu0 %v2743
    %v2745 = vand.u32 %v130, 4294901760
    %2746 = vmatpush1.msra.mxu0 %v2745
    %v2747 = vand.u32 %v123, 4294901760
    %2748 = vmatprep.subr.mxu0 %v2747
    %v2749 = vand.u32 %v122, 4294901760
    %2750 = vmatpush1.msra.mxu0 %v2749
    %v2751 = vand.u32 %v115, 4294901760
    %2752 = vmatprep.subr.mxu0 %v2751
    %v2753 = vand.u32 %v114, 4294901760
    %2754 = vmatpush1.msra.mxu0 %v2753
    %v2755 = vand.u32 %v107, 4294901760
    %2756 = vmatprep.subr.mxu0 %v2755
    %v2757 = vand.u32 %v106, 4294901760
    %2758 = vmatpush1.msra.mxu0 %v2757
    %v2759 = vand.u32 %v99, 4294901760
    %2760 = vmatprep.subr.mxu0 %v2759
    %v2761 = vand.u32 %v98, 4294901760
    %2762 = vmatpush1.msra.mxu0 %v2761
    %v2763 = vand.u32 %v91, 4294901760
    %2764 = vmatprep.subr.mxu0 %v2763
    %v2765 = vand.u32 %v90, 4294901760
    %2766 = vmatpush1.msra.mxu0 %v2765
    %v2767 = vand.u32 %v83, 4294901760
    %2768 = vmatprep.subr.mxu0 %v2767
    %v2769 = vand.u32 %v82, 4294901760
    %2770 = vmatpush1.msra.mxu0 %v2769
    %v2771 = vand.u32 %v75, 4294901760
    %2772 = vmatprep.subr.mxu0 %v2771
    %v2773 = vand.u32 %v74, 4294901760
    %2774 = vmatpush1.msra.mxu0 %v2773
    %v2775 = vand.u32 %v67, 4294901760
    %2776 = vmatprep.subr.mxu0 %v2775
    %v2777 = vand.u32 %v66, 4294901760
    %2778 = vmatpush1.msra.mxu0 %v2777
    %v2779 = vand.u32 %v59, 4294901760
    %2780 = vmatprep.subr.mxu0 %v2779
    %v2781 = vand.u32 %v58, 4294901760
    %2782 = vmatpush1.msra.mxu0 %v2781
    %v2783 = vand.u32 %v51, 4294901760
    %2784 = vmatprep.subr.mxu0 %v2783
    %v2785 = vand.u32 %v50, 4294901760
    %2786 = vmatpush1.msra.mxu0 %v2785
    %v2787 = vand.u32 %v43, 4294901760
    %2788 = vmatprep.subr.mxu0 %v2787
    %v2789 = vand.u32 %v42, 4294901760
    %2790 = vmatpush1.msra.mxu0 %v2789
    %v2791 = vand.u32 %v291, 4294901760
    %2792 = vmatprep.subr.mxu0 %v2791
    %v2793 = vand.u32 %v290, 4294901760
    %2794 = vmatpush2.msra.mxu0 %v2793
    %v2795 = vand.u32 %v283, 4294901760
    %2796 = vmatprep.subr.mxu0 %v2795
    %v2797 = vand.u32 %v282, 4294901760
    %2798 = vmatpush2.msra.mxu0 %v2797
    %v2799 = vand.u32 %v275, 4294901760
    %2800 = vmatprep.subr.mxu0 %v2799
    %v2801 = vand.u32 %v274, 4294901760
    %2802 = vmatpush2.msra.mxu0 %v2801
    %v2803 = vand.u32 %v267, 4294901760
    %2804 = vmatprep.subr.mxu0 %v2803
    %v2805 = vand.u32 %v266, 4294901760
    %2806 = vmatpush2.msra.mxu0 %v2805
    %v2807 = vand.u32 %v259, 4294901760
    %2808 = vmatprep.subr.mxu0 %v2807
    %v2809 = vand.u32 %v258, 4294901760
    %2810 = vmatpush2.msra.mxu0 %v2809
    %v2811 = vand.u32 %v251, 4294901760
    %2812 = vmatprep.subr.mxu0 %v2811
    %v2813 = vand.u32 %v250, 4294901760
    %2814 = vmatpush2.msra.mxu0 %v2813
    %v2815 = vand.u32 %v243, 4294901760
    %2816 = vmatprep.subr.mxu0 %v2815
    %v2817 = vand.u32 %v242, 4294901760
    %2818 = vmatpush2.msra.mxu0 %v2817
    %v2819 = vand.u32 %v235, 4294901760
    %2820 = vmatprep.subr.mxu0 %v2819
    %v2821 = vand.u32 %v234, 4294901760
    %2822 = vmatpush2.msra.mxu0 %v2821
    %v2823 = vand.u32 %v227, 4294901760
    %2824 = vmatprep.subr.mxu0 %v2823
    %v2825 = vand.u32 %v226, 4294901760
    %2826 = vmatpush2.msra.mxu0 %v2825
    %v2827 = vand.u32 %v219, 4294901760
    %2828 = vmatprep.subr.mxu0 %v2827
    %v2829 = vand.u32 %v218, 4294901760
    %2830 = vmatpush2.msra.mxu0 %v2829
    %v2831 = vand.u32 %v211, 4294901760
    %2832 = vmatprep.subr.mxu0 %v2831
    %v2833 = vand.u32 %v210, 4294901760
    %2834 = vmatpush2.msra.mxu0 %v2833
    %v2835 = vand.u32 %v203, 4294901760
    %2836 = vmatprep.subr.mxu0 %v2835
    %v2837 = vand.u32 %v202, 4294901760
    %2838 = vmatpush2.msra.mxu0 %v2837
    %v2839 = vand.u32 %v195, 4294901760
    %2840 = vmatprep.subr.mxu0 %v2839
    %v2841 = vand.u32 %v194, 4294901760
    %2842 = vmatpush2.msra.mxu0 %v2841
    %v2843 = vand.u32 %v187, 4294901760
    %2844 = vmatprep.subr.mxu0 %v2843
    %v2845 = vand.u32 %v186, 4294901760
    %2846 = vmatpush2.msra.mxu0 %v2845
    %v2847 = vand.u32 %v179, 4294901760
    %2848 = vmatprep.subr.mxu0 %v2847
    %v2849 = vand.u32 %v178, 4294901760
    %2850 = vmatpush2.msra.mxu0 %v2849
    %v2851 = vand.u32 %v171, 4294901760
    %2852 = vmatprep.subr.mxu0 %v2851
    %v2853 = vand.u32 %v170, 4294901760
    %2854 = vmatpush2.msra.mxu0 %v2853
    %v2855 = vand.u32 %v39, 4294901760
    %2856 = vmatprep.mubr.f32.mxu0 %v2855
    %v2857 = vand.u32 %v38, 4294901760
    %2858 = vmatmul.mubr.f32.gmra.mxu0 %v2857
    %v2859 = vpop.f32.mrf.mxu0
    %v2860 = vadd.f32 %v2723, %v2859
    %v2861 = vpop.f32.mrf.mxu0
    %v2862 = vadd.f32 %v2725, %v2861
    %2863 = vdwg.mxu0
    %v2864 = vand.u32 %v165, 4294901760
    %2865 = vmatprep.subr.mxu0 %v2864
    %v2866 = vand.u32 %v164, 4294901760
    %2867 = vmatpush1.msra.mxu0 %v2866
    %v2868 = vand.u32 %v157, 4294901760
    %2869 = vmatprep.subr.mxu0 %v2868
    %v2870 = vand.u32 %v156, 4294901760
    %2871 = vmatpush1.msra.mxu0 %v2870
    %v2872 = vand.u32 %v149, 4294901760
    %2873 = vmatprep.subr.mxu0 %v2872
    %v2874 = vand.u32 %v148, 4294901760
    %2875 = vmatpush1.msra.mxu0 %v2874
    %v2876 = vand.u32 %v141, 4294901760
    %2877 = vmatprep.subr.mxu0 %v2876
    %v2878 = vand.u32 %v140, 4294901760
    %2879 = vmatpush1.msra.mxu0 %v2878
    %v2880 = vand.u32 %v133, 4294901760
    %2881 = vmatprep.subr.mxu0 %v2880
    %v2882 = vand.u32 %v132, 4294901760
    %2883 = vmatpush1.msra.mxu0 %v2882
    %v2884 = vand.u32 %v125, 4294901760
    %2885 = vmatprep.subr.mxu0 %v2884
    %v2886 = vand.u32 %v124, 4294901760
    %2887 = vmatpush1.msra.mxu0 %v2886
    %v2888 = vand.u32 %v117, 4294901760
    %2889 = vmatprep.subr.mxu0 %v2888
    %v2890 = vand.u32 %v116, 4294901760
    %2891 = vmatpush1.msra.mxu0 %v2890
    %v2892 = vand.u32 %v109, 4294901760
    %2893 = vmatprep.subr.mxu0 %v2892
    %v2894 = vand.u32 %v108, 4294901760
    %2895 = vmatpush1.msra.mxu0 %v2894
    %v2896 = vand.u32 %v101, 4294901760
    %2897 = vmatprep.subr.mxu0 %v2896
    %v2898 = vand.u32 %v100, 4294901760
    %2899 = vmatpush1.msra.mxu0 %v2898
    %v2900 = vand.u32 %v93, 4294901760
    %2901 = vmatprep.subr.mxu0 %v2900
    %v2902 = vand.u32 %v92, 4294901760
    %2903 = vmatpush1.msra.mxu0 %v2902
    %v2904 = vand.u32 %v85, 4294901760
    %2905 = vmatprep.subr.mxu0 %v2904
    %v2906 = vand.u32 %v84, 4294901760
    %2907 = vmatpush1.msra.mxu0 %v2906
    %v2908 = vand.u32 %v77, 4294901760
    %2909 = vmatprep.subr.mxu0 %v2908
    %v2910 = vand.u32 %v76, 4294901760
    %2911 = vmatpush1.msra.mxu0 %v2910
    %v2912 = vand.u32 %v69, 4294901760
    %2913 = vmatprep.subr.mxu0 %v2912
    %v2914 = vand.u32 %v68, 4294901760
    %2915 = vmatpush1.msra.mxu0 %v2914
    %v2916 = vand.u32 %v61, 4294901760
    %2917 = vmatprep.subr.mxu0 %v2916
    %v2918 = vand.u32 %v60, 4294901760
    %2919 = vmatpush1.msra.mxu0 %v2918
    %v2920 = vand.u32 %v53, 4294901760
    %2921 = vmatprep.subr.mxu0 %v2920
    %v2922 = vand.u32 %v52, 4294901760
    %2923 = vmatpush1.msra.mxu0 %v2922
    %v2924 = vand.u32 %v45, 4294901760
    %2925 = vmatprep.subr.mxu0 %v2924
    %v2926 = vand.u32 %v44, 4294901760
    %2927 = vmatpush1.msra.mxu0 %v2926
    %v2928 = vand.u32 %v293, 4294901760
    %2929 = vmatprep.subr.mxu0 %v2928
    %v2930 = vand.u32 %v292, 4294901760
    %2931 = vmatpush2.msra.mxu0 %v2930
    %v2932 = vand.u32 %v285, 4294901760
    %2933 = vmatprep.subr.mxu0 %v2932
    %v2934 = vand.u32 %v284, 4294901760
    %2935 = vmatpush2.msra.mxu0 %v2934
    %v2936 = vand.u32 %v277, 4294901760
    %2937 = vmatprep.subr.mxu0 %v2936
    %v2938 = vand.u32 %v276, 4294901760
    %2939 = vmatpush2.msra.mxu0 %v2938
    %v2940 = vand.u32 %v269, 4294901760
    %2941 = vmatprep.subr.mxu0 %v2940
    %v2942 = vand.u32 %v268, 4294901760
    %2943 = vmatpush2.msra.mxu0 %v2942
    %v2944 = vand.u32 %v261, 4294901760
    %2945 = vmatprep.subr.mxu0 %v2944
    %v2946 = vand.u32 %v260, 4294901760
    %2947 = vmatpush2.msra.mxu0 %v2946
    %v2948 = vand.u32 %v253, 4294901760
    %2949 = vmatprep.subr.mxu0 %v2948
    %v2950 = vand.u32 %v252, 4294901760
    %2951 = vmatpush2.msra.mxu0 %v2950
    %v2952 = vand.u32 %v245, 4294901760
    %2953 = vmatprep.subr.mxu0 %v2952
    %v2954 = vand.u32 %v244, 4294901760
    %2955 = vmatpush2.msra.mxu0 %v2954
    %v2956 = vand.u32 %v237, 4294901760
    %2957 = vmatprep.subr.mxu0 %v2956
    %v2958 = vand.u32 %v236, 4294901760
    %2959 = vmatpush2.msra.mxu0 %v2958
    %v2960 = vand.u32 %v229, 4294901760
    %2961 = vmatprep.subr.mxu0 %v2960
    %v2962 = vand.u32 %v228, 4294901760
    %2963 = vmatpush2.msra.mxu0 %v2962
    %v2964 = vand.u32 %v221, 4294901760
    %2965 = vmatprep.subr.mxu0 %v2964
    %v2966 = vand.u32 %v220, 4294901760
    %2967 = vmatpush2.msra.mxu0 %v2966
    %v2968 = vand.u32 %v213, 4294901760
    %2969 = vmatprep.subr.mxu0 %v2968
    %v2970 = vand.u32 %v212, 4294901760
    %2971 = vmatpush2.msra.mxu0 %v2970
    %v2972 = vand.u32 %v205, 4294901760
    %2973 = vmatprep.subr.mxu0 %v2972
    %v2974 = vand.u32 %v204, 4294901760
    %2975 = vmatpush2.msra.mxu0 %v2974
    %v2976 = vand.u32 %v197, 4294901760
    %2977 = vmatprep.subr.mxu0 %v2976
    %v2978 = vand.u32 %v196, 4294901760
    %2979 = vmatpush2.msra.mxu0 %v2978
    %v2980 = vand.u32 %v189, 4294901760
    %2981 = vmatprep.subr.mxu0 %v2980
    %v2982 = vand.u32 %v188, 4294901760
    %2983 = vmatpush2.msra.mxu0 %v2982
    %v2984 = vand.u32 %v181, 4294901760
    %2985 = vmatprep.subr.mxu0 %v2984
    %v2986 = vand.u32 %v180, 4294901760
    %2987 = vmatpush2.msra.mxu0 %v2986
    %v2988 = vand.u32 %v173, 4294901760
    %2989 = vmatprep.subr.mxu0 %v2988
    %v2990 = vand.u32 %v172, 4294901760
    %2991 = vmatpush2.msra.mxu0 %v2990
    %v2992 = vand.u32 %v39, 4294901760
    %v2993 = vsub.f32 %v39, %v2992
    %v2994 = vand.u32 %v2993, 4294901760
    %v2995 = vsub.f32 %v2993, %v2994
    %v2996 = vand.u32 %v2995, 4294901760
    %2997 = vmatprep.mubr.f32.mxu0 %v2996
    %v2998 = vand.u32 %v38, 4294901760
    %v2999 = vsub.f32 %v38, %v2998
    %v3000 = vand.u32 %v2999, 4294901760
    %v3001 = vsub.f32 %v2999, %v3000
    %v3002 = vand.u32 %v3001, 4294901760
    %3003 = vmatmul.mubr.f32.gmra.mxu0 %v3002
    %v3004 = vpop.f32.mrf.mxu0
    %v3005 = vadd.f32 0.0, %v3004
    %v3006 = vpop.f32.mrf.mxu0
    %v3007 = vadd.f32 0.0, %v3006
    %3008 = vdwg.mxu0
    %v3009 = vand.u32 %v165, 4294901760
    %v3010 = vsub.f32 %v165, %v3009
    %v3011 = vand.u32 %v3010, 4294901760
    %v3012 = vsub.f32 %v3010, %v3011
    %v3013 = vand.u32 %v3012, 4294901760
    %3014 = vmatprep.subr.mxu0 %v3013
    %v3015 = vand.u32 %v164, 4294901760
    %v3016 = vsub.f32 %v164, %v3015
    %v3017 = vand.u32 %v3016, 4294901760
    %v3018 = vsub.f32 %v3016, %v3017
    %v3019 = vand.u32 %v3018, 4294901760
    %3020 = vmatpush1.msra.mxu0 %v3019
    %v3021 = vand.u32 %v157, 4294901760
    %v3022 = vsub.f32 %v157, %v3021
    %v3023 = vand.u32 %v3022, 4294901760
    %v3024 = vsub.f32 %v3022, %v3023
    %v3025 = vand.u32 %v3024, 4294901760
    %3026 = vmatprep.subr.mxu0 %v3025
    %v3027 = vand.u32 %v156, 4294901760
    %v3028 = vsub.f32 %v156, %v3027
    %v3029 = vand.u32 %v3028, 4294901760
    %v3030 = vsub.f32 %v3028, %v3029
    %v3031 = vand.u32 %v3030, 4294901760
    %3032 = vmatpush1.msra.mxu0 %v3031
    %v3033 = vand.u32 %v149, 4294901760
    %v3034 = vsub.f32 %v149, %v3033
    %v3035 = vand.u32 %v3034, 4294901760
    %v3036 = vsub.f32 %v3034, %v3035
    %v3037 = vand.u32 %v3036, 4294901760
    %3038 = vmatprep.subr.mxu0 %v3037
    %v3039 = vand.u32 %v148, 4294901760
    %v3040 = vsub.f32 %v148, %v3039
    %v3041 = vand.u32 %v3040, 4294901760
    %v3042 = vsub.f32 %v3040, %v3041
    %v3043 = vand.u32 %v3042, 4294901760
    %3044 = vmatpush1.msra.mxu0 %v3043
    %v3045 = vand.u32 %v141, 4294901760
    %v3046 = vsub.f32 %v141, %v3045
    %v3047 = vand.u32 %v3046, 4294901760
    %v3048 = vsub.f32 %v3046, %v3047
    %v3049 = vand.u32 %v3048, 4294901760
    %3050 = vmatprep.subr.mxu0 %v3049
    %v3051 = vand.u32 %v140, 4294901760
    %v3052 = vsub.f32 %v140, %v3051
    %v3053 = vand.u32 %v3052, 4294901760
    %v3054 = vsub.f32 %v3052, %v3053
    %v3055 = vand.u32 %v3054, 4294901760
    %3056 = vmatpush1.msra.mxu0 %v3055
    %v3057 = vand.u32 %v133, 4294901760
    %v3058 = vsub.f32 %v133, %v3057
    %v3059 = vand.u32 %v3058, 4294901760
    %v3060 = vsub.f32 %v3058, %v3059
    %v3061 = vand.u32 %v3060, 4294901760
    %3062 = vmatprep.subr.mxu0 %v3061
    %v3063 = vand.u32 %v132, 4294901760
    %v3064 = vsub.f32 %v132, %v3063
    %v3065 = vand.u32 %v3064, 4294901760
    %v3066 = vsub.f32 %v3064, %v3065
    %v3067 = vand.u32 %v3066, 4294901760
    %3068 = vmatpush1.msra.mxu0 %v3067
    %v3069 = vand.u32 %v125, 4294901760
    %v3070 = vsub.f32 %v125, %v3069
    %v3071 = vand.u32 %v3070, 4294901760
    %v3072 = vsub.f32 %v3070, %v3071
    %v3073 = vand.u32 %v3072, 4294901760
    %3074 = vmatprep.subr.mxu0 %v3073
    %v3075 = vand.u32 %v124, 4294901760
    %v3076 = vsub.f32 %v124, %v3075
    %v3077 = vand.u32 %v3076, 4294901760
    %v3078 = vsub.f32 %v3076, %v3077
    %v3079 = vand.u32 %v3078, 4294901760
    %3080 = vmatpush1.msra.mxu0 %v3079
    %v3081 = vand.u32 %v117, 4294901760
    %v3082 = vsub.f32 %v117, %v3081
    %v3083 = vand.u32 %v3082, 4294901760
    %v3084 = vsub.f32 %v3082, %v3083
    %v3085 = vand.u32 %v3084, 4294901760
    %3086 = vmatprep.subr.mxu0 %v3085
    %v3087 = vand.u32 %v116, 4294901760
    %v3088 = vsub.f32 %v116, %v3087
    %v3089 = vand.u32 %v3088, 4294901760
    %v3090 = vsub.f32 %v3088, %v3089
    %v3091 = vand.u32 %v3090, 4294901760
    %3092 = vmatpush1.msra.mxu0 %v3091
    %v3093 = vand.u32 %v109, 4294901760
    %v3094 = vsub.f32 %v109, %v3093
    %v3095 = vand.u32 %v3094, 4294901760
    %v3096 = vsub.f32 %v3094, %v3095
    %v3097 = vand.u32 %v3096, 4294901760
    %3098 = vmatprep.subr.mxu0 %v3097
    %v3099 = vand.u32 %v108, 4294901760
    %v3100 = vsub.f32 %v108, %v3099
    %v3101 = vand.u32 %v3100, 4294901760
    %v3102 = vsub.f32 %v3100, %v3101
    %v3103 = vand.u32 %v3102, 4294901760
    %3104 = vmatpush1.msra.mxu0 %v3103
    %v3105 = vand.u32 %v101, 4294901760
    %v3106 = vsub.f32 %v101, %v3105
    %v3107 = vand.u32 %v3106, 4294901760
    %v3108 = vsub.f32 %v3106, %v3107
    %v3109 = vand.u32 %v3108, 4294901760
    %3110 = vmatprep.subr.mxu0 %v3109
    %v3111 = vand.u32 %v100, 4294901760
    %v3112 = vsub.f32 %v100, %v3111
    %v3113 = vand.u32 %v3112, 4294901760
    %v3114 = vsub.f32 %v3112, %v3113
    %v3115 = vand.u32 %v3114, 4294901760
    %3116 = vmatpush1.msra.mxu0 %v3115
    %v3117 = vand.u32 %v93, 4294901760
    %v3118 = vsub.f32 %v93, %v3117
    %v3119 = vand.u32 %v3118, 4294901760
    %v3120 = vsub.f32 %v3118, %v3119
    %v3121 = vand.u32 %v3120, 4294901760
    %3122 = vmatprep.subr.mxu0 %v3121
    %v3123 = vand.u32 %v92, 4294901760
    %v3124 = vsub.f32 %v92, %v3123
    %v3125 = vand.u32 %v3124, 4294901760
    %v3126 = vsub.f32 %v3124, %v3125
    %v3127 = vand.u32 %v3126, 4294901760
    %3128 = vmatpush1.msra.mxu0 %v3127
    %v3129 = vand.u32 %v85, 4294901760
    %v3130 = vsub.f32 %v85, %v3129
    %v3131 = vand.u32 %v3130, 4294901760
    %v3132 = vsub.f32 %v3130, %v3131
    %v3133 = vand.u32 %v3132, 4294901760
    %3134 = vmatprep.subr.mxu0 %v3133
    %v3135 = vand.u32 %v84, 4294901760
    %v3136 = vsub.f32 %v84, %v3135
    %v3137 = vand.u32 %v3136, 4294901760
    %v3138 = vsub.f32 %v3136, %v3137
    %v3139 = vand.u32 %v3138, 4294901760
    %3140 = vmatpush1.msra.mxu0 %v3139
    %v3141 = vand.u32 %v77, 4294901760
    %v3142 = vsub.f32 %v77, %v3141
    %v3143 = vand.u32 %v3142, 4294901760
    %v3144 = vsub.f32 %v3142, %v3143
    %v3145 = vand.u32 %v3144, 4294901760
    %3146 = vmatprep.subr.mxu0 %v3145
    %v3147 = vand.u32 %v76, 4294901760
    %v3148 = vsub.f32 %v76, %v3147
    %v3149 = vand.u32 %v3148, 4294901760
    %v3150 = vsub.f32 %v3148, %v3149
    %v3151 = vand.u32 %v3150, 4294901760
    %3152 = vmatpush1.msra.mxu0 %v3151
    %v3153 = vand.u32 %v69, 4294901760
    %v3154 = vsub.f32 %v69, %v3153
    %v3155 = vand.u32 %v3154, 4294901760
    %v3156 = vsub.f32 %v3154, %v3155
    %v3157 = vand.u32 %v3156, 4294901760
    %3158 = vmatprep.subr.mxu0 %v3157
    %v3159 = vand.u32 %v68, 4294901760
    %v3160 = vsub.f32 %v68, %v3159
    %v3161 = vand.u32 %v3160, 4294901760
    %v3162 = vsub.f32 %v3160, %v3161
    %v3163 = vand.u32 %v3162, 4294901760
    %3164 = vmatpush1.msra.mxu0 %v3163
    %v3165 = vand.u32 %v61, 4294901760
    %v3166 = vsub.f32 %v61, %v3165
    %v3167 = vand.u32 %v3166, 4294901760
    %v3168 = vsub.f32 %v3166, %v3167
    %v3169 = vand.u32 %v3168, 4294901760
    %3170 = vmatprep.subr.mxu0 %v3169
    %v3171 = vand.u32 %v60, 4294901760
    %v3172 = vsub.f32 %v60, %v3171
    %v3173 = vand.u32 %v3172, 4294901760
    %v3174 = vsub.f32 %v3172, %v3173
    %v3175 = vand.u32 %v3174, 4294901760
    %3176 = vmatpush1.msra.mxu0 %v3175
    %v3177 = vand.u32 %v53, 4294901760
    %v3178 = vsub.f32 %v53, %v3177
    %v3179 = vand.u32 %v3178, 4294901760
    %v3180 = vsub.f32 %v3178, %v3179
    %v3181 = vand.u32 %v3180, 4294901760
    %3182 = vmatprep.subr.mxu0 %v3181
    %v3183 = vand.u32 %v52, 4294901760
    %v3184 = vsub.f32 %v52, %v3183
    %v3185 = vand.u32 %v3184, 4294901760
    %v3186 = vsub.f32 %v3184, %v3185
    %v3187 = vand.u32 %v3186, 4294901760
    %3188 = vmatpush1.msra.mxu0 %v3187
    %v3189 = vand.u32 %v45, 4294901760
    %v3190 = vsub.f32 %v45, %v3189
    %v3191 = vand.u32 %v3190, 4294901760
    %v3192 = vsub.f32 %v3190, %v3191
    %v3193 = vand.u32 %v3192, 4294901760
    %3194 = vmatprep.subr.mxu0 %v3193
    %v3195 = vand.u32 %v44, 4294901760
    %v3196 = vsub.f32 %v44, %v3195
    %v3197 = vand.u32 %v3196, 4294901760
    %v3198 = vsub.f32 %v3196, %v3197
    %v3199 = vand.u32 %v3198, 4294901760
    %3200 = vmatpush1.msra.mxu0 %v3199
    %v3201 = vand.u32 %v293, 4294901760
    %v3202 = vsub.f32 %v293, %v3201
    %v3203 = vand.u32 %v3202, 4294901760
    %v3204 = vsub.f32 %v3202, %v3203
    %v3205 = vand.u32 %v3204, 4294901760
    %3206 = vmatprep.subr.mxu0 %v3205
    %v3207 = vand.u32 %v292, 4294901760
    %v3208 = vsub.f32 %v292, %v3207
    %v3209 = vand.u32 %v3208, 4294901760
    %v3210 = vsub.f32 %v3208, %v3209
    %v3211 = vand.u32 %v3210, 4294901760
    %3212 = vmatpush2.msra.mxu0 %v3211
    %v3213 = vand.u32 %v285, 4294901760
    %v3214 = vsub.f32 %v285, %v3213
    %v3215 = vand.u32 %v3214, 4294901760
    %v3216 = vsub.f32 %v3214, %v3215
    %v3217 = vand.u32 %v3216, 4294901760
    %3218 = vmatprep.subr.mxu0 %v3217
    %v3219 = vand.u32 %v284, 4294901760
    %v3220 = vsub.f32 %v284, %v3219
    %v3221 = vand.u32 %v3220, 4294901760
    %v3222 = vsub.f32 %v3220, %v3221
    %v3223 = vand.u32 %v3222, 4294901760
    %3224 = vmatpush2.msra.mxu0 %v3223
    %v3225 = vand.u32 %v277, 4294901760
    %v3226 = vsub.f32 %v277, %v3225
    %v3227 = vand.u32 %v3226, 4294901760
    %v3228 = vsub.f32 %v3226, %v3227
    %v3229 = vand.u32 %v3228, 4294901760
    %3230 = vmatprep.subr.mxu0 %v3229
    %v3231 = vand.u32 %v276, 4294901760
    %v3232 = vsub.f32 %v276, %v3231
    %v3233 = vand.u32 %v3232, 4294901760
    %v3234 = vsub.f32 %v3232, %v3233
    %v3235 = vand.u32 %v3234, 4294901760
    %3236 = vmatpush2.msra.mxu0 %v3235
    %v3237 = vand.u32 %v269, 4294901760
    %v3238 = vsub.f32 %v269, %v3237
    %v3239 = vand.u32 %v3238, 4294901760
    %v3240 = vsub.f32 %v3238, %v3239
    %v3241 = vand.u32 %v3240, 4294901760
    %3242 = vmatprep.subr.mxu0 %v3241
    %v3243 = vand.u32 %v268, 4294901760
    %v3244 = vsub.f32 %v268, %v3243
    %v3245 = vand.u32 %v3244, 4294901760
    %v3246 = vsub.f32 %v3244, %v3245
    %v3247 = vand.u32 %v3246, 4294901760
    %3248 = vmatpush2.msra.mxu0 %v3247
    %v3249 = vand.u32 %v261, 4294901760
    %v3250 = vsub.f32 %v261, %v3249
    %v3251 = vand.u32 %v3250, 4294901760
    %v3252 = vsub.f32 %v3250, %v3251
    %v3253 = vand.u32 %v3252, 4294901760
    %3254 = vmatprep.subr.mxu0 %v3253
    %v3255 = vand.u32 %v260, 4294901760
    %v3256 = vsub.f32 %v260, %v3255
    %v3257 = vand.u32 %v3256, 4294901760
    %v3258 = vsub.f32 %v3256, %v3257
    %v3259 = vand.u32 %v3258, 4294901760
    %3260 = vmatpush2.msra.mxu0 %v3259
    %v3261 = vand.u32 %v253, 4294901760
    %v3262 = vsub.f32 %v253, %v3261
    %v3263 = vand.u32 %v3262, 4294901760
    %v3264 = vsub.f32 %v3262, %v3263
    %v3265 = vand.u32 %v3264, 4294901760
    %3266 = vmatprep.subr.mxu0 %v3265
    %v3267 = vand.u32 %v252, 4294901760
    %v3268 = vsub.f32 %v252, %v3267
    %v3269 = vand.u32 %v3268, 4294901760
    %v3270 = vsub.f32 %v3268, %v3269
    %v3271 = vand.u32 %v3270, 4294901760
    %3272 = vmatpush2.msra.mxu0 %v3271
    %v3273 = vand.u32 %v245, 4294901760
    %v3274 = vsub.f32 %v245, %v3273
    %v3275 = vand.u32 %v3274, 4294901760
    %v3276 = vsub.f32 %v3274, %v3275
    %v3277 = vand.u32 %v3276, 4294901760
    %3278 = vmatprep.subr.mxu0 %v3277
    %v3279 = vand.u32 %v244, 4294901760
    %v3280 = vsub.f32 %v244, %v3279
    %v3281 = vand.u32 %v3280, 4294901760
    %v3282 = vsub.f32 %v3280, %v3281
    %v3283 = vand.u32 %v3282, 4294901760
    %3284 = vmatpush2.msra.mxu0 %v3283
    %v3285 = vand.u32 %v237, 4294901760
    %v3286 = vsub.f32 %v237, %v3285
    %v3287 = vand.u32 %v3286, 4294901760
    %v3288 = vsub.f32 %v3286, %v3287
    %v3289 = vand.u32 %v3288, 4294901760
    %3290 = vmatprep.subr.mxu0 %v3289
    %v3291 = vand.u32 %v236, 4294901760
    %v3292 = vsub.f32 %v236, %v3291
    %v3293 = vand.u32 %v3292, 4294901760
    %v3294 = vsub.f32 %v3292, %v3293
    %v3295 = vand.u32 %v3294, 4294901760
    %3296 = vmatpush2.msra.mxu0 %v3295
    %v3297 = vand.u32 %v229, 4294901760
    %v3298 = vsub.f32 %v229, %v3297
    %v3299 = vand.u32 %v3298, 4294901760
    %v3300 = vsub.f32 %v3298, %v3299
    %v3301 = vand.u32 %v3300, 4294901760
    %3302 = vmatprep.subr.mxu0 %v3301
    %v3303 = vand.u32 %v228, 4294901760
    %v3304 = vsub.f32 %v228, %v3303
    %v3305 = vand.u32 %v3304, 4294901760
    %v3306 = vsub.f32 %v3304, %v3305
    %v3307 = vand.u32 %v3306, 4294901760
    %3308 = vmatpush2.msra.mxu0 %v3307
    %v3309 = vand.u32 %v221, 4294901760
    %v3310 = vsub.f32 %v221, %v3309
    %v3311 = vand.u32 %v3310, 4294901760
    %v3312 = vsub.f32 %v3310, %v3311
    %v3313 = vand.u32 %v3312, 4294901760
    %3314 = vmatprep.subr.mxu0 %v3313
    %v3315 = vand.u32 %v220, 4294901760
    %v3316 = vsub.f32 %v220, %v3315
    %v3317 = vand.u32 %v3316, 4294901760
    %v3318 = vsub.f32 %v3316, %v3317
    %v3319 = vand.u32 %v3318, 4294901760
    %3320 = vmatpush2.msra.mxu0 %v3319
    %v3321 = vand.u32 %v213, 4294901760
    %v3322 = vsub.f32 %v213, %v3321
    %v3323 = vand.u32 %v3322, 4294901760
    %v3324 = vsub.f32 %v3322, %v3323
    %v3325 = vand.u32 %v3324, 4294901760
    %3326 = vmatprep.subr.mxu0 %v3325
    %v3327 = vand.u32 %v212, 4294901760
    %v3328 = vsub.f32 %v212, %v3327
    %v3329 = vand.u32 %v3328, 4294901760
    %v3330 = vsub.f32 %v3328, %v3329
    %v3331 = vand.u32 %v3330, 4294901760
    %3332 = vmatpush2.msra.mxu0 %v3331
    %v3333 = vand.u32 %v205, 4294901760
    %v3334 = vsub.f32 %v205, %v3333
    %v3335 = vand.u32 %v3334, 4294901760
    %v3336 = vsub.f32 %v3334, %v3335
    %v3337 = vand.u32 %v3336, 4294901760
    %3338 = vmatprep.subr.mxu0 %v3337
    %v3339 = vand.u32 %v204, 4294901760
    %v3340 = vsub.f32 %v204, %v3339
    %v3341 = vand.u32 %v3340, 4294901760
    %v3342 = vsub.f32 %v3340, %v3341
    %v3343 = vand.u32 %v3342, 4294901760
    %3344 = vmatpush2.msra.mxu0 %v3343
    %v3345 = vand.u32 %v197, 4294901760
    %v3346 = vsub.f32 %v197, %v3345
    %v3347 = vand.u32 %v3346, 4294901760
    %v3348 = vsub.f32 %v3346, %v3347
    %v3349 = vand.u32 %v3348, 4294901760
    %3350 = vmatprep.subr.mxu0 %v3349
    %v3351 = vand.u32 %v196, 4294901760
    %v3352 = vsub.f32 %v196, %v3351
    %v3353 = vand.u32 %v3352, 4294901760
    %v3354 = vsub.f32 %v3352, %v3353
    %v3355 = vand.u32 %v3354, 4294901760
    %3356 = vmatpush2.msra.mxu0 %v3355
    %v3357 = vand.u32 %v189, 4294901760
    %v3358 = vsub.f32 %v189, %v3357
    %v3359 = vand.u32 %v3358, 4294901760
    %v3360 = vsub.f32 %v3358, %v3359
    %v3361 = vand.u32 %v3360, 4294901760
    %3362 = vmatprep.subr.mxu0 %v3361
    %v3363 = vand.u32 %v188, 4294901760
    %v3364 = vsub.f32 %v188, %v3363
    %v3365 = vand.u32 %v3364, 4294901760
    %v3366 = vsub.f32 %v3364, %v3365
    %v3367 = vand.u32 %v3366, 4294901760
    %3368 = vmatpush2.msra.mxu0 %v3367
    %v3369 = vand.u32 %v181, 4294901760
    %v3370 = vsub.f32 %v181, %v3369
    %v3371 = vand.u32 %v3370, 4294901760
    %v3372 = vsub.f32 %v3370, %v3371
    %v3373 = vand.u32 %v3372, 4294901760
    %3374 = vmatprep.subr.mxu0 %v3373
    %v3375 = vand.u32 %v180, 4294901760
    %v3376 = vsub.f32 %v180, %v3375
    %v3377 = vand.u32 %v3376, 4294901760
    %v3378 = vsub.f32 %v3376, %v3377
    %v3379 = vand.u32 %v3378, 4294901760
    %3380 = vmatpush2.msra.mxu0 %v3379
    %v3381 = vand.u32 %v173, 4294901760
    %v3382 = vsub.f32 %v173, %v3381
    %v3383 = vand.u32 %v3382, 4294901760
    %v3384 = vsub.f32 %v3382, %v3383
    %v3385 = vand.u32 %v3384, 4294901760
    %3386 = vmatprep.subr.mxu0 %v3385
    %v3387 = vand.u32 %v172, 4294901760
    %v3388 = vsub.f32 %v172, %v3387
    %v3389 = vand.u32 %v3388, 4294901760
    %v3390 = vsub.f32 %v3388, %v3389
    %v3391 = vand.u32 %v3390, 4294901760
    %3392 = vmatpush2.msra.mxu0 %v3391
    %v3393 = vand.u32 %v39, 4294901760
    %3394 = vmatprep.mubr.f32.mxu0 %v3393
    %v3395 = vand.u32 %v38, 4294901760
    %3396 = vmatmul.mubr.f32.gmra.mxu0 %v3395
    %v3397 = vpop.f32.mrf.mxu0
    %v3398 = vadd.f32 %v3005, %v3397
    %v3399 = vpop.f32.mrf.mxu0
    %v3400 = vadd.f32 %v3007, %v3399
    %3401 = vdwg.mxu0
    %v3402 = vand.u32 %v165, 4294901760
    %v3403 = vsub.f32 %v165, %v3402
    %3404 = vmatprep.subr.mxu0 %v3403
    %v3405 = vand.u32 %v164, 4294901760
    %v3406 = vsub.f32 %v164, %v3405
    %3407 = vmatpush1.msra.mxu0 %v3406
    %v3408 = vand.u32 %v157, 4294901760
    %v3409 = vsub.f32 %v157, %v3408
    %3410 = vmatprep.subr.mxu0 %v3409
    %v3411 = vand.u32 %v156, 4294901760
    %v3412 = vsub.f32 %v156, %v3411
    %3413 = vmatpush1.msra.mxu0 %v3412
    %v3414 = vand.u32 %v149, 4294901760
    %v3415 = vsub.f32 %v149, %v3414
    %3416 = vmatprep.subr.mxu0 %v3415
    %v3417 = vand.u32 %v148, 4294901760
    %v3418 = vsub.f32 %v148, %v3417
    %3419 = vmatpush1.msra.mxu0 %v3418
    %v3420 = vand.u32 %v141, 4294901760
    %v3421 = vsub.f32 %v141, %v3420
    %3422 = vmatprep.subr.mxu0 %v3421
    %v3423 = vand.u32 %v140, 4294901760
    %v3424 = vsub.f32 %v140, %v3423
    %3425 = vmatpush1.msra.mxu0 %v3424
    %v3426 = vand.u32 %v133, 4294901760
    %v3427 = vsub.f32 %v133, %v3426
    %3428 = vmatprep.subr.mxu0 %v3427
    %v3429 = vand.u32 %v132, 4294901760
    %v3430 = vsub.f32 %v132, %v3429
    %3431 = vmatpush1.msra.mxu0 %v3430
    %v3432 = vand.u32 %v125, 4294901760
    %v3433 = vsub.f32 %v125, %v3432
    %3434 = vmatprep.subr.mxu0 %v3433
    %v3435 = vand.u32 %v124, 4294901760
    %v3436 = vsub.f32 %v124, %v3435
    %3437 = vmatpush1.msra.mxu0 %v3436
    %v3438 = vand.u32 %v117, 4294901760
    %v3439 = vsub.f32 %v117, %v3438
    %3440 = vmatprep.subr.mxu0 %v3439
    %v3441 = vand.u32 %v116, 4294901760
    %v3442 = vsub.f32 %v116, %v3441
    %3443 = vmatpush1.msra.mxu0 %v3442
    %v3444 = vand.u32 %v109, 4294901760
    %v3445 = vsub.f32 %v109, %v3444
    %3446 = vmatprep.subr.mxu0 %v3445
    %v3447 = vand.u32 %v108, 4294901760
    %v3448 = vsub.f32 %v108, %v3447
    %3449 = vmatpush1.msra.mxu0 %v3448
    %v3450 = vand.u32 %v101, 4294901760
    %v3451 = vsub.f32 %v101, %v3450
    %3452 = vmatprep.subr.mxu0 %v3451
    %v3453 = vand.u32 %v100, 4294901760
    %v3454 = vsub.f32 %v100, %v3453
    %3455 = vmatpush1.msra.mxu0 %v3454
    %v3456 = vand.u32 %v93, 4294901760
    %v3457 = vsub.f32 %v93, %v3456
    %3458 = vmatprep.subr.mxu0 %v3457
    %v3459 = vand.u32 %v92, 4294901760
    %v3460 = vsub.f32 %v92, %v3459
    %3461 = vmatpush1.msra.mxu0 %v3460
    %v3462 = vand.u32 %v85, 4294901760
    %v3463 = vsub.f32 %v85, %v3462
    %3464 = vmatprep.subr.mxu0 %v3463
    %v3465 = vand.u32 %v84, 4294901760
    %v3466 = vsub.f32 %v84, %v3465
    %3467 = vmatpush1.msra.mxu0 %v3466
    %v3468 = vand.u32 %v77, 4294901760
    %v3469 = vsub.f32 %v77, %v3468
    %3470 = vmatprep.subr.mxu0 %v3469
    %v3471 = vand.u32 %v76, 4294901760
    %v3472 = vsub.f32 %v76, %v3471
    %3473 = vmatpush1.msra.mxu0 %v3472
    %v3474 = vand.u32 %v69, 4294901760
    %v3475 = vsub.f32 %v69, %v3474
    %3476 = vmatprep.subr.mxu0 %v3475
    %v3477 = vand.u32 %v68, 4294901760
    %v3478 = vsub.f32 %v68, %v3477
    %3479 = vmatpush1.msra.mxu0 %v3478
    %v3480 = vand.u32 %v61, 4294901760
    %v3481 = vsub.f32 %v61, %v3480
    %3482 = vmatprep.subr.mxu0 %v3481
    %v3483 = vand.u32 %v60, 4294901760
    %v3484 = vsub.f32 %v60, %v3483
    %3485 = vmatpush1.msra.mxu0 %v3484
    %v3486 = vand.u32 %v53, 4294901760
    %v3487 = vsub.f32 %v53, %v3486
    %3488 = vmatprep.subr.mxu0 %v3487
    %v3489 = vand.u32 %v52, 4294901760
    %v3490 = vsub.f32 %v52, %v3489
    %3491 = vmatpush1.msra.mxu0 %v3490
    %v3492 = vand.u32 %v45, 4294901760
    %v3493 = vsub.f32 %v45, %v3492
    %3494 = vmatprep.subr.mxu0 %v3493
    %v3495 = vand.u32 %v44, 4294901760
    %v3496 = vsub.f32 %v44, %v3495
    %3497 = vmatpush1.msra.mxu0 %v3496
    %v3498 = vand.u32 %v293, 4294901760
    %v3499 = vsub.f32 %v293, %v3498
    %3500 = vmatprep.subr.mxu0 %v3499
    %v3501 = vand.u32 %v292, 4294901760
    %v3502 = vsub.f32 %v292, %v3501
    %3503 = vmatpush2.msra.mxu0 %v3502
    %v3504 = vand.u32 %v285, 4294901760
    %v3505 = vsub.f32 %v285, %v3504
    %3506 = vmatprep.subr.mxu0 %v3505
    %v3507 = vand.u32 %v284, 4294901760
    %v3508 = vsub.f32 %v284, %v3507
    %3509 = vmatpush2.msra.mxu0 %v3508
    %v3510 = vand.u32 %v277, 4294901760
    %v3511 = vsub.f32 %v277, %v3510
    %3512 = vmatprep.subr.mxu0 %v3511
    %v3513 = vand.u32 %v276, 4294901760
    %v3514 = vsub.f32 %v276, %v3513
    %3515 = vmatpush2.msra.mxu0 %v3514
    %v3516 = vand.u32 %v269, 4294901760
    %v3517 = vsub.f32 %v269, %v3516
    %3518 = vmatprep.subr.mxu0 %v3517
    %v3519 = vand.u32 %v268, 4294901760
    %v3520 = vsub.f32 %v268, %v3519
    %3521 = vmatpush2.msra.mxu0 %v3520
    %v3522 = vand.u32 %v261, 4294901760
    %v3523 = vsub.f32 %v261, %v3522
    %3524 = vmatprep.subr.mxu0 %v3523
    %v3525 = vand.u32 %v260, 4294901760
    %v3526 = vsub.f32 %v260, %v3525
    %3527 = vmatpush2.msra.mxu0 %v3526
    %v3528 = vand.u32 %v253, 4294901760
    %v3529 = vsub.f32 %v253, %v3528
    %3530 = vmatprep.subr.mxu0 %v3529
    %v3531 = vand.u32 %v252, 4294901760
    %v3532 = vsub.f32 %v252, %v3531
    %3533 = vmatpush2.msra.mxu0 %v3532
    %v3534 = vand.u32 %v245, 4294901760
    %v3535 = vsub.f32 %v245, %v3534
    %3536 = vmatprep.subr.mxu0 %v3535
    %v3537 = vand.u32 %v244, 4294901760
    %v3538 = vsub.f32 %v244, %v3537
    %3539 = vmatpush2.msra.mxu0 %v3538
    %v3540 = vand.u32 %v237, 4294901760
    %v3541 = vsub.f32 %v237, %v3540
    %3542 = vmatprep.subr.mxu0 %v3541
    %v3543 = vand.u32 %v236, 4294901760
    %v3544 = vsub.f32 %v236, %v3543
    %3545 = vmatpush2.msra.mxu0 %v3544
    %v3546 = vand.u32 %v229, 4294901760
    %v3547 = vsub.f32 %v229, %v3546
    %3548 = vmatprep.subr.mxu0 %v3547
    %v3549 = vand.u32 %v228, 4294901760
    %v3550 = vsub.f32 %v228, %v3549
    %3551 = vmatpush2.msra.mxu0 %v3550
    %v3552 = vand.u32 %v221, 4294901760
    %v3553 = vsub.f32 %v221, %v3552
    %3554 = vmatprep.subr.mxu0 %v3553
    %v3555 = vand.u32 %v220, 4294901760
    %v3556 = vsub.f32 %v220, %v3555
    %3557 = vmatpush2.msra.mxu0 %v3556
    %v3558 = vand.u32 %v213, 4294901760
    %v3559 = vsub.f32 %v213, %v3558
    %3560 = vmatprep.subr.mxu0 %v3559
    %v3561 = vand.u32 %v212, 4294901760
    %v3562 = vsub.f32 %v212, %v3561
    %3563 = vmatpush2.msra.mxu0 %v3562
    %v3564 = vand.u32 %v205, 4294901760
    %v3565 = vsub.f32 %v205, %v3564
    %3566 = vmatprep.subr.mxu0 %v3565
    %v3567 = vand.u32 %v204, 4294901760
    %v3568 = vsub.f32 %v204, %v3567
    %3569 = vmatpush2.msra.mxu0 %v3568
    %v3570 = vand.u32 %v197, 4294901760
    %v3571 = vsub.f32 %v197, %v3570
    %3572 = vmatprep.subr.mxu0 %v3571
    %v3573 = vand.u32 %v196, 4294901760
    %v3574 = vsub.f32 %v196, %v3573
    %3575 = vmatpush2.msra.mxu0 %v3574
    %v3576 = vand.u32 %v189, 4294901760
    %v3577 = vsub.f32 %v189, %v3576
    %3578 = vmatprep.subr.mxu0 %v3577
    %v3579 = vand.u32 %v188, 4294901760
    %v3580 = vsub.f32 %v188, %v3579
    %3581 = vmatpush2.msra.mxu0 %v3580
    %v3582 = vand.u32 %v181, 4294901760
    %v3583 = vsub.f32 %v181, %v3582
    %3584 = vmatprep.subr.mxu0 %v3583
    %v3585 = vand.u32 %v180, 4294901760
    %v3586 = vsub.f32 %v180, %v3585
    %3587 = vmatpush2.msra.mxu0 %v3586
    %v3588 = vand.u32 %v173, 4294901760
    %v3589 = vsub.f32 %v173, %v3588
    %3590 = vmatprep.subr.mxu0 %v3589
    %v3591 = vand.u32 %v172, 4294901760
    %v3592 = vsub.f32 %v172, %v3591
    %3593 = vmatpush2.msra.mxu0 %v3592
    %v3594 = vand.u32 %v39, 4294901760
    %v3595 = vsub.f32 %v39, %v3594
    %3596 = vmatprep.mubr.f32.mxu0 %v3595
    %v3597 = vand.u32 %v38, 4294901760
    %v3598 = vsub.f32 %v38, %v3597
    %3599 = vmatmul.mubr.f32.gmra.mxu0 %v3598
    %v3600 = vpop.f32.mrf.mxu0
    %v3601 = vadd.f32 %v3398, %v3600
    %v3602 = vpop.f32.mrf.mxu0
    %v3603 = vadd.f32 %v3400, %v3602
    %3604 = vdwg.mxu0
    %v3605 = vand.u32 %v165, 4294901760
    %3606 = vmatprep.subr.mxu0 %v3605
    %v3607 = vand.u32 %v164, 4294901760
    %3608 = vmatpush1.msra.mxu0 %v3607
    %v3609 = vand.u32 %v157, 4294901760
    %3610 = vmatprep.subr.mxu0 %v3609
    %v3611 = vand.u32 %v156, 4294901760
    %3612 = vmatpush1.msra.mxu0 %v3611
    %v3613 = vand.u32 %v149, 4294901760
    %3614 = vmatprep.subr.mxu0 %v3613
    %v3615 = vand.u32 %v148, 4294901760
    %3616 = vmatpush1.msra.mxu0 %v3615
    %v3617 = vand.u32 %v141, 4294901760
    %3618 = vmatprep.subr.mxu0 %v3617
    %v3619 = vand.u32 %v140, 4294901760
    %3620 = vmatpush1.msra.mxu0 %v3619
    %v3621 = vand.u32 %v133, 4294901760
    %3622 = vmatprep.subr.mxu0 %v3621
    %v3623 = vand.u32 %v132, 4294901760
    %3624 = vmatpush1.msra.mxu0 %v3623
    %v3625 = vand.u32 %v125, 4294901760
    %3626 = vmatprep.subr.mxu0 %v3625
    %v3627 = vand.u32 %v124, 4294901760
    %3628 = vmatpush1.msra.mxu0 %v3627
    %v3629 = vand.u32 %v117, 4294901760
    %3630 = vmatprep.subr.mxu0 %v3629
    %v3631 = vand.u32 %v116, 4294901760
    %3632 = vmatpush1.msra.mxu0 %v3631
    %v3633 = vand.u32 %v109, 4294901760
    %3634 = vmatprep.subr.mxu0 %v3633
    %v3635 = vand.u32 %v108, 4294901760
    %3636 = vmatpush1.msra.mxu0 %v3635
    %v3637 = vand.u32 %v101, 4294901760
    %3638 = vmatprep.subr.mxu0 %v3637
    %v3639 = vand.u32 %v100, 4294901760
    %3640 = vmatpush1.msra.mxu0 %v3639
    %v3641 = vand.u32 %v93, 4294901760
    %3642 = vmatprep.subr.mxu0 %v3641
    %v3643 = vand.u32 %v92, 4294901760
    %3644 = vmatpush1.msra.mxu0 %v3643
    %v3645 = vand.u32 %v85, 4294901760
    %3646 = vmatprep.subr.mxu0 %v3645
    %v3647 = vand.u32 %v84, 4294901760
    %3648 = vmatpush1.msra.mxu0 %v3647
    %v3649 = vand.u32 %v77, 4294901760
    %3650 = vmatprep.subr.mxu0 %v3649
    %v3651 = vand.u32 %v76, 4294901760
    %3652 = vmatpush1.msra.mxu0 %v3651
    %v3653 = vand.u32 %v69, 4294901760
    %3654 = vmatprep.subr.mxu0 %v3653
    %v3655 = vand.u32 %v68, 4294901760
    %3656 = vmatpush1.msra.mxu0 %v3655
    %v3657 = vand.u32 %v61, 4294901760
    %3658 = vmatprep.subr.mxu0 %v3657
    %v3659 = vand.u32 %v60, 4294901760
    %3660 = vmatpush1.msra.mxu0 %v3659
    %v3661 = vand.u32 %v53, 4294901760
    %3662 = vmatprep.subr.mxu0 %v3661
    %v3663 = vand.u32 %v52, 4294901760
    %3664 = vmatpush1.msra.mxu0 %v3663
    %v3665 = vand.u32 %v45, 4294901760
    %3666 = vmatprep.subr.mxu0 %v3665
    %v3667 = vand.u32 %v44, 4294901760
    %3668 = vmatpush1.msra.mxu0 %v3667
    %v3669 = vand.u32 %v293, 4294901760
    %3670 = vmatprep.subr.mxu0 %v3669
    %v3671 = vand.u32 %v292, 4294901760
    %3672 = vmatpush2.msra.mxu0 %v3671
    %v3673 = vand.u32 %v285, 4294901760
    %3674 = vmatprep.subr.mxu0 %v3673
    %v3675 = vand.u32 %v284, 4294901760
    %3676 = vmatpush2.msra.mxu0 %v3675
    %v3677 = vand.u32 %v277, 4294901760
    %3678 = vmatprep.subr.mxu0 %v3677
    %v3679 = vand.u32 %v276, 4294901760
    %3680 = vmatpush2.msra.mxu0 %v3679
    %v3681 = vand.u32 %v269, 4294901760
    %3682 = vmatprep.subr.mxu0 %v3681
    %v3683 = vand.u32 %v268, 4294901760
    %3684 = vmatpush2.msra.mxu0 %v3683
    %v3685 = vand.u32 %v261, 4294901760
    %3686 = vmatprep.subr.mxu0 %v3685
    %v3687 = vand.u32 %v260, 4294901760
    %3688 = vmatpush2.msra.mxu0 %v3687
    %v3689 = vand.u32 %v253, 4294901760
    %3690 = vmatprep.subr.mxu0 %v3689
    %v3691 = vand.u32 %v252, 4294901760
    %3692 = vmatpush2.msra.mxu0 %v3691
    %v3693 = vand.u32 %v245, 4294901760
    %3694 = vmatprep.subr.mxu0 %v3693
    %v3695 = vand.u32 %v244, 4294901760
    %3696 = vmatpush2.msra.mxu0 %v3695
    %v3697 = vand.u32 %v237, 4294901760
    %3698 = vmatprep.subr.mxu0 %v3697
    %v3699 = vand.u32 %v236, 4294901760
    %3700 = vmatpush2.msra.mxu0 %v3699
    %v3701 = vand.u32 %v229, 4294901760
    %3702 = vmatprep.subr.mxu0 %v3701
    %v3703 = vand.u32 %v228, 4294901760
    %3704 = vmatpush2.msra.mxu0 %v3703
    %v3705 = vand.u32 %v221, 4294901760
    %3706 = vmatprep.subr.mxu0 %v3705
    %v3707 = vand.u32 %v220, 4294901760
    %3708 = vmatpush2.msra.mxu0 %v3707
    %v3709 = vand.u32 %v213, 4294901760
    %3710 = vmatprep.subr.mxu0 %v3709
    %v3711 = vand.u32 %v212, 4294901760
    %3712 = vmatpush2.msra.mxu0 %v3711
    %v3713 = vand.u32 %v205, 4294901760
    %3714 = vmatprep.subr.mxu0 %v3713
    %v3715 = vand.u32 %v204, 4294901760
    %3716 = vmatpush2.msra.mxu0 %v3715
    %v3717 = vand.u32 %v197, 4294901760
    %3718 = vmatprep.subr.mxu0 %v3717
    %v3719 = vand.u32 %v196, 4294901760
    %3720 = vmatpush2.msra.mxu0 %v3719
    %v3721 = vand.u32 %v189, 4294901760
    %3722 = vmatprep.subr.mxu0 %v3721
    %v3723 = vand.u32 %v188, 4294901760
    %3724 = vmatpush2.msra.mxu0 %v3723
    %v3725 = vand.u32 %v181, 4294901760
    %3726 = vmatprep.subr.mxu0 %v3725
    %v3727 = vand.u32 %v180, 4294901760
    %3728 = vmatpush2.msra.mxu0 %v3727
    %v3729 = vand.u32 %v173, 4294901760
    %3730 = vmatprep.subr.mxu0 %v3729
    %v3731 = vand.u32 %v172, 4294901760
    %3732 = vmatpush2.msra.mxu0 %v3731
    %v3733 = vand.u32 %v39, 4294901760
    %v3734 = vsub.f32 %v39, %v3733
    %v3735 = vand.u32 %v3734, 4294901760
    %3736 = vmatprep.mubr.f32.mxu0 %v3735
    %v3737 = vand.u32 %v38, 4294901760
    %v3738 = vsub.f32 %v38, %v3737
    %v3739 = vand.u32 %v3738, 4294901760
    %3740 = vmatmul.mubr.f32.gmra.mxu0 %v3739
    %v3741 = vpop.f32.mrf.mxu0
    %v3742 = vadd.f32 %v3601, %v3741
    %v3743 = vpop.f32.mrf.mxu0
    %v3744 = vadd.f32 %v3603, %v3743
    %3745 = vdwg.mxu0
    %v3746 = vand.u32 %v165, 4294901760
    %v3747 = vsub.f32 %v165, %v3746
    %v3748 = vand.u32 %v3747, 4294901760
    %3749 = vmatprep.subr.mxu0 %v3748
    %v3750 = vand.u32 %v164, 4294901760
    %v3751 = vsub.f32 %v164, %v3750
    %v3752 = vand.u32 %v3751, 4294901760
    %3753 = vmatpush1.msra.mxu0 %v3752
    %v3754 = vand.u32 %v157, 4294901760
    %v3755 = vsub.f32 %v157, %v3754
    %v3756 = vand.u32 %v3755, 4294901760
    %3757 = vmatprep.subr.mxu0 %v3756
    %v3758 = vand.u32 %v156, 4294901760
    %v3759 = vsub.f32 %v156, %v3758
    %v3760 = vand.u32 %v3759, 4294901760
    %3761 = vmatpush1.msra.mxu0 %v3760
    %v3762 = vand.u32 %v149, 4294901760
    %v3763 = vsub.f32 %v149, %v3762
    %v3764 = vand.u32 %v3763, 4294901760
    %3765 = vmatprep.subr.mxu0 %v3764
    %v3766 = vand.u32 %v148, 4294901760
    %v3767 = vsub.f32 %v148, %v3766
    %v3768 = vand.u32 %v3767, 4294901760
    %3769 = vmatpush1.msra.mxu0 %v3768
    %v3770 = vand.u32 %v141, 4294901760
    %v3771 = vsub.f32 %v141, %v3770
    %v3772 = vand.u32 %v3771, 4294901760
    %3773 = vmatprep.subr.mxu0 %v3772
    %v3774 = vand.u32 %v140, 4294901760
    %v3775 = vsub.f32 %v140, %v3774
    %v3776 = vand.u32 %v3775, 4294901760
    %3777 = vmatpush1.msra.mxu0 %v3776
    %v3778 = vand.u32 %v133, 4294901760
    %v3779 = vsub.f32 %v133, %v3778
    %v3780 = vand.u32 %v3779, 4294901760
    %3781 = vmatprep.subr.mxu0 %v3780
    %v3782 = vand.u32 %v132, 4294901760
    %v3783 = vsub.f32 %v132, %v3782
    %v3784 = vand.u32 %v3783, 4294901760
    %3785 = vmatpush1.msra.mxu0 %v3784
    %v3786 = vand.u32 %v125, 4294901760
    %v3787 = vsub.f32 %v125, %v3786
    %v3788 = vand.u32 %v3787, 4294901760
    %3789 = vmatprep.subr.mxu0 %v3788
    %v3790 = vand.u32 %v124, 4294901760
    %v3791 = vsub.f32 %v124, %v3790
    %v3792 = vand.u32 %v3791, 4294901760
    %3793 = vmatpush1.msra.mxu0 %v3792
    %v3794 = vand.u32 %v117, 4294901760
    %v3795 = vsub.f32 %v117, %v3794
    %v3796 = vand.u32 %v3795, 4294901760
    %3797 = vmatprep.subr.mxu0 %v3796
    %v3798 = vand.u32 %v116, 4294901760
    %v3799 = vsub.f32 %v116, %v3798
    %v3800 = vand.u32 %v3799, 4294901760
    %3801 = vmatpush1.msra.mxu0 %v3800
    %v3802 = vand.u32 %v109, 4294901760
    %v3803 = vsub.f32 %v109, %v3802
    %v3804 = vand.u32 %v3803, 4294901760
    %3805 = vmatprep.subr.mxu0 %v3804
    %v3806 = vand.u32 %v108, 4294901760
    %v3807 = vsub.f32 %v108, %v3806
    %v3808 = vand.u32 %v3807, 4294901760
    %3809 = vmatpush1.msra.mxu0 %v3808
    %v3810 = vand.u32 %v101, 4294901760
    %v3811 = vsub.f32 %v101, %v3810
    %v3812 = vand.u32 %v3811, 4294901760
    %3813 = vmatprep.subr.mxu0 %v3812
    %v3814 = vand.u32 %v100, 4294901760
    %v3815 = vsub.f32 %v100, %v3814
    %v3816 = vand.u32 %v3815, 4294901760
    %3817 = vmatpush1.msra.mxu0 %v3816
    %v3818 = vand.u32 %v93, 4294901760
    %v3819 = vsub.f32 %v93, %v3818
    %v3820 = vand.u32 %v3819, 4294901760
    %3821 = vmatprep.subr.mxu0 %v3820
    %v3822 = vand.u32 %v92, 4294901760
    %v3823 = vsub.f32 %v92, %v3822
    %v3824 = vand.u32 %v3823, 4294901760
    %3825 = vmatpush1.msra.mxu0 %v3824
    %v3826 = vand.u32 %v85, 4294901760
    %v3827 = vsub.f32 %v85, %v3826
    %v3828 = vand.u32 %v3827, 4294901760
    %3829 = vmatprep.subr.mxu0 %v3828
    %v3830 = vand.u32 %v84, 4294901760
    %v3831 = vsub.f32 %v84, %v3830
    %v3832 = vand.u32 %v3831, 4294901760
    %3833 = vmatpush1.msra.mxu0 %v3832
    %v3834 = vand.u32 %v77, 4294901760
    %v3835 = vsub.f32 %v77, %v3834
    %v3836 = vand.u32 %v3835, 4294901760
    %3837 = vmatprep.subr.mxu0 %v3836
    %v3838 = vand.u32 %v76, 4294901760
    %v3839 = vsub.f32 %v76, %v3838
    %v3840 = vand.u32 %v3839, 4294901760
    %3841 = vmatpush1.msra.mxu0 %v3840
    %v3842 = vand.u32 %v69, 4294901760
    %v3843 = vsub.f32 %v69, %v3842
    %v3844 = vand.u32 %v3843, 4294901760
    %3845 = vmatprep.subr.mxu0 %v3844
    %v3846 = vand.u32 %v68, 4294901760
    %v3847 = vsub.f32 %v68, %v3846
    %v3848 = vand.u32 %v3847, 4294901760
    %3849 = vmatpush1.msra.mxu0 %v3848
    %v3850 = vand.u32 %v61, 4294901760
    %v3851 = vsub.f32 %v61, %v3850
    %v3852 = vand.u32 %v3851, 4294901760
    %3853 = vmatprep.subr.mxu0 %v3852
    %v3854 = vand.u32 %v60, 4294901760
    %v3855 = vsub.f32 %v60, %v3854
    %v3856 = vand.u32 %v3855, 4294901760
    %3857 = vmatpush1.msra.mxu0 %v3856
    %v3858 = vand.u32 %v53, 4294901760
    %v3859 = vsub.f32 %v53, %v3858
    %v3860 = vand.u32 %v3859, 4294901760
    %3861 = vmatprep.subr.mxu0 %v3860
    %v3862 = vand.u32 %v52, 4294901760
    %v3863 = vsub.f32 %v52, %v3862
    %v3864 = vand.u32 %v3863, 4294901760
    %3865 = vmatpush1.msra.mxu0 %v3864
    %v3866 = vand.u32 %v45, 4294901760
    %v3867 = vsub.f32 %v45, %v3866
    %v3868 = vand.u32 %v3867, 4294901760
    %3869 = vmatprep.subr.mxu0 %v3868
    %v3870 = vand.u32 %v44, 4294901760
    %v3871 = vsub.f32 %v44, %v3870
    %v3872 = vand.u32 %v3871, 4294901760
    %3873 = vmatpush1.msra.mxu0 %v3872
    %v3874 = vand.u32 %v293, 4294901760
    %v3875 = vsub.f32 %v293, %v3874
    %v3876 = vand.u32 %v3875, 4294901760
    %3877 = vmatprep.subr.mxu0 %v3876
    %v3878 = vand.u32 %v292, 4294901760
    %v3879 = vsub.f32 %v292, %v3878
    %v3880 = vand.u32 %v3879, 4294901760
    %3881 = vmatpush2.msra.mxu0 %v3880
    %v3882 = vand.u32 %v285, 4294901760
    %v3883 = vsub.f32 %v285, %v3882
    %v3884 = vand.u32 %v3883, 4294901760
    %3885 = vmatprep.subr.mxu0 %v3884
    %v3886 = vand.u32 %v284, 4294901760
    %v3887 = vsub.f32 %v284, %v3886
    %v3888 = vand.u32 %v3887, 4294901760
    %3889 = vmatpush2.msra.mxu0 %v3888
    %v3890 = vand.u32 %v277, 4294901760
    %v3891 = vsub.f32 %v277, %v3890
    %v3892 = vand.u32 %v3891, 4294901760
    %3893 = vmatprep.subr.mxu0 %v3892
    %v3894 = vand.u32 %v276, 4294901760
    %v3895 = vsub.f32 %v276, %v3894
    %v3896 = vand.u32 %v3895, 4294901760
    %3897 = vmatpush2.msra.mxu0 %v3896
    %v3898 = vand.u32 %v269, 4294901760
    %v3899 = vsub.f32 %v269, %v3898
    %v3900 = vand.u32 %v3899, 4294901760
    %3901 = vmatprep.subr.mxu0 %v3900
    %v3902 = vand.u32 %v268, 4294901760
    %v3903 = vsub.f32 %v268, %v3902
    %v3904 = vand.u32 %v3903, 4294901760
    %3905 = vmatpush2.msra.mxu0 %v3904
    %v3906 = vand.u32 %v261, 4294901760
    %v3907 = vsub.f32 %v261, %v3906
    %v3908 = vand.u32 %v3907, 4294901760
    %3909 = vmatprep.subr.mxu0 %v3908
    %v3910 = vand.u32 %v260, 4294901760
    %v3911 = vsub.f32 %v260, %v3910
    %v3912 = vand.u32 %v3911, 4294901760
    %3913 = vmatpush2.msra.mxu0 %v3912
    %v3914 = vand.u32 %v253, 4294901760
    %v3915 = vsub.f32 %v253, %v3914
    %v3916 = vand.u32 %v3915, 4294901760
    %3917 = vmatprep.subr.mxu0 %v3916
    %v3918 = vand.u32 %v252, 4294901760
    %v3919 = vsub.f32 %v252, %v3918
    %v3920 = vand.u32 %v3919, 4294901760
    %3921 = vmatpush2.msra.mxu0 %v3920
    %v3922 = vand.u32 %v245, 4294901760
    %v3923 = vsub.f32 %v245, %v3922
    %v3924 = vand.u32 %v3923, 4294901760
    %3925 = vmatprep.subr.mxu0 %v3924
    %v3926 = vand.u32 %v244, 4294901760
    %v3927 = vsub.f32 %v244, %v3926
    %v3928 = vand.u32 %v3927, 4294901760
    %3929 = vmatpush2.msra.mxu0 %v3928
    %v3930 = vand.u32 %v237, 4294901760
    %v3931 = vsub.f32 %v237, %v3930
    %v3932 = vand.u32 %v3931, 4294901760
    %3933 = vmatprep.subr.mxu0 %v3932
    %v3934 = vand.u32 %v236, 4294901760
    %v3935 = vsub.f32 %v236, %v3934
    %v3936 = vand.u32 %v3935, 4294901760
    %3937 = vmatpush2.msra.mxu0 %v3936
    %v3938 = vand.u32 %v229, 4294901760
    %v3939 = vsub.f32 %v229, %v3938
    %v3940 = vand.u32 %v3939, 4294901760
    %3941 = vmatprep.subr.mxu0 %v3940
    %v3942 = vand.u32 %v228, 4294901760
    %v3943 = vsub.f32 %v228, %v3942
    %v3944 = vand.u32 %v3943, 4294901760
    %3945 = vmatpush2.msra.mxu0 %v3944
    %v3946 = vand.u32 %v221, 4294901760
    %v3947 = vsub.f32 %v221, %v3946
    %v3948 = vand.u32 %v3947, 4294901760
    %3949 = vmatprep.subr.mxu0 %v3948
    %v3950 = vand.u32 %v220, 4294901760
    %v3951 = vsub.f32 %v220, %v3950
    %v3952 = vand.u32 %v3951, 4294901760
    %3953 = vmatpush2.msra.mxu0 %v3952
    %v3954 = vand.u32 %v213, 4294901760
    %v3955 = vsub.f32 %v213, %v3954
    %v3956 = vand.u32 %v3955, 4294901760
    %3957 = vmatprep.subr.mxu0 %v3956
    %v3958 = vand.u32 %v212, 4294901760
    %v3959 = vsub.f32 %v212, %v3958
    %v3960 = vand.u32 %v3959, 4294901760
    %3961 = vmatpush2.msra.mxu0 %v3960
    %v3962 = vand.u32 %v205, 4294901760
    %v3963 = vsub.f32 %v205, %v3962
    %v3964 = vand.u32 %v3963, 4294901760
    %3965 = vmatprep.subr.mxu0 %v3964
    %v3966 = vand.u32 %v204, 4294901760
    %v3967 = vsub.f32 %v204, %v3966
    %v3968 = vand.u32 %v3967, 4294901760
    %3969 = vmatpush2.msra.mxu0 %v3968
    %v3970 = vand.u32 %v197, 4294901760
    %v3971 = vsub.f32 %v197, %v3970
    %v3972 = vand.u32 %v3971, 4294901760
    %3973 = vmatprep.subr.mxu0 %v3972
    %v3974 = vand.u32 %v196, 4294901760
    %v3975 = vsub.f32 %v196, %v3974
    %v3976 = vand.u32 %v3975, 4294901760
    %3977 = vmatpush2.msra.mxu0 %v3976
    %v3978 = vand.u32 %v189, 4294901760
    %v3979 = vsub.f32 %v189, %v3978
    %v3980 = vand.u32 %v3979, 4294901760
    %3981 = vmatprep.subr.mxu0 %v3980
    %v3982 = vand.u32 %v188, 4294901760
    %v3983 = vsub.f32 %v188, %v3982
    %v3984 = vand.u32 %v3983, 4294901760
    %3985 = vmatpush2.msra.mxu0 %v3984
    %v3986 = vand.u32 %v181, 4294901760
    %v3987 = vsub.f32 %v181, %v3986
    %v3988 = vand.u32 %v3987, 4294901760
    %3989 = vmatprep.subr.mxu0 %v3988
    %v3990 = vand.u32 %v180, 4294901760
    %v3991 = vsub.f32 %v180, %v3990
    %v3992 = vand.u32 %v3991, 4294901760
    %3993 = vmatpush2.msra.mxu0 %v3992
    %v3994 = vand.u32 %v173, 4294901760
    %v3995 = vsub.f32 %v173, %v3994
    %v3996 = vand.u32 %v3995, 4294901760
    %3997 = vmatprep.subr.mxu0 %v3996
    %v3998 = vand.u32 %v172, 4294901760
    %v3999 = vsub.f32 %v172, %v3998
    %v4000 = vand.u32 %v3999, 4294901760
    %4001 = vmatpush2.msra.mxu0 %v4000
    %v4002 = vand.u32 %v39, 4294901760
    %4003 = vmatprep.mubr.f32.mxu0 %v4002
    %v4004 = vand.u32 %v38, 4294901760
    %4005 = vmatmul.mubr.f32.gmra.mxu0 %v4004
    %v4006 = vpop.f32.mrf.mxu0
    %v4007 = vadd.f32 %v3742, %v4006
    %v4008 = vpop.f32.mrf.mxu0
    %v4009 = vadd.f32 %v3744, %v4008
    %4010 = vdwg.mxu0
    %v4011 = vand.u32 %v165, 4294901760
    %4012 = vmatprep.subr.mxu0 %v4011
    %v4013 = vand.u32 %v164, 4294901760
    %4014 = vmatpush1.msra.mxu0 %v4013
    %v4015 = vand.u32 %v157, 4294901760
    %4016 = vmatprep.subr.mxu0 %v4015
    %v4017 = vand.u32 %v156, 4294901760
    %4018 = vmatpush1.msra.mxu0 %v4017
    %v4019 = vand.u32 %v149, 4294901760
    %4020 = vmatprep.subr.mxu0 %v4019
    %v4021 = vand.u32 %v148, 4294901760
    %4022 = vmatpush1.msra.mxu0 %v4021
    %v4023 = vand.u32 %v141, 4294901760
    %4024 = vmatprep.subr.mxu0 %v4023
    %v4025 = vand.u32 %v140, 4294901760
    %4026 = vmatpush1.msra.mxu0 %v4025
    %v4027 = vand.u32 %v133, 4294901760
    %4028 = vmatprep.subr.mxu0 %v4027
    %v4029 = vand.u32 %v132, 4294901760
    %4030 = vmatpush1.msra.mxu0 %v4029
    %v4031 = vand.u32 %v125, 4294901760
    %4032 = vmatprep.subr.mxu0 %v4031
    %v4033 = vand.u32 %v124, 4294901760
    %4034 = vmatpush1.msra.mxu0 %v4033
    %v4035 = vand.u32 %v117, 4294901760
    %4036 = vmatprep.subr.mxu0 %v4035
    %v4037 = vand.u32 %v116, 4294901760
    %4038 = vmatpush1.msra.mxu0 %v4037
    %v4039 = vand.u32 %v109, 4294901760
    %4040 = vmatprep.subr.mxu0 %v4039
    %v4041 = vand.u32 %v108, 4294901760
    %4042 = vmatpush1.msra.mxu0 %v4041
    %v4043 = vand.u32 %v101, 4294901760
    %4044 = vmatprep.subr.mxu0 %v4043
    %v4045 = vand.u32 %v100, 4294901760
    %4046 = vmatpush1.msra.mxu0 %v4045
    %v4047 = vand.u32 %v93, 4294901760
    %4048 = vmatprep.subr.mxu0 %v4047
    %v4049 = vand.u32 %v92, 4294901760
    %4050 = vmatpush1.msra.mxu0 %v4049
    %v4051 = vand.u32 %v85, 4294901760
    %4052 = vmatprep.subr.mxu0 %v4051
    %v4053 = vand.u32 %v84, 4294901760
    %4054 = vmatpush1.msra.mxu0 %v4053
    %v4055 = vand.u32 %v77, 4294901760
    %4056 = vmatprep.subr.mxu0 %v4055
    %v4057 = vand.u32 %v76, 4294901760
    %4058 = vmatpush1.msra.mxu0 %v4057
    %v4059 = vand.u32 %v69, 4294901760
    %4060 = vmatprep.subr.mxu0 %v4059
    %v4061 = vand.u32 %v68, 4294901760
    %4062 = vmatpush1.msra.mxu0 %v4061
    %v4063 = vand.u32 %v61, 4294901760
    %4064 = vmatprep.subr.mxu0 %v4063
    %v4065 = vand.u32 %v60, 4294901760
    %4066 = vmatpush1.msra.mxu0 %v4065
    %v4067 = vand.u32 %v53, 4294901760
    %4068 = vmatprep.subr.mxu0 %v4067
    %v4069 = vand.u32 %v52, 4294901760
    %4070 = vmatpush1.msra.mxu0 %v4069
    %v4071 = vand.u32 %v45, 4294901760
    %4072 = vmatprep.subr.mxu0 %v4071
    %v4073 = vand.u32 %v44, 4294901760
    %4074 = vmatpush1.msra.mxu0 %v4073
    %v4075 = vand.u32 %v293, 4294901760
    %4076 = vmatprep.subr.mxu0 %v4075
    %v4077 = vand.u32 %v292, 4294901760
    %4078 = vmatpush2.msra.mxu0 %v4077
    %v4079 = vand.u32 %v285, 4294901760
    %4080 = vmatprep.subr.mxu0 %v4079
    %v4081 = vand.u32 %v284, 4294901760
    %4082 = vmatpush2.msra.mxu0 %v4081
    %v4083 = vand.u32 %v277, 4294901760
    %4084 = vmatprep.subr.mxu0 %v4083
    %v4085 = vand.u32 %v276, 4294901760
    %4086 = vmatpush2.msra.mxu0 %v4085
    %v4087 = vand.u32 %v269, 4294901760
    %4088 = vmatprep.subr.mxu0 %v4087
    %v4089 = vand.u32 %v268, 4294901760
    %4090 = vmatpush2.msra.mxu0 %v4089
    %v4091 = vand.u32 %v261, 4294901760
    %4092 = vmatprep.subr.mxu0 %v4091
    %v4093 = vand.u32 %v260, 4294901760
    %4094 = vmatpush2.msra.mxu0 %v4093
    %v4095 = vand.u32 %v253, 4294901760
    %4096 = vmatprep.subr.mxu0 %v4095
    %v4097 = vand.u32 %v252, 4294901760
    %4098 = vmatpush2.msra.mxu0 %v4097
    %v4099 = vand.u32 %v245, 4294901760
    %4100 = vmatprep.subr.mxu0 %v4099
    %v4101 = vand.u32 %v244, 4294901760
    %4102 = vmatpush2.msra.mxu0 %v4101
    %v4103 = vand.u32 %v237, 4294901760
    %4104 = vmatprep.subr.mxu0 %v4103
    %v4105 = vand.u32 %v236, 4294901760
    %4106 = vmatpush2.msra.mxu0 %v4105
    %v4107 = vand.u32 %v229, 4294901760
    %4108 = vmatprep.subr.mxu0 %v4107
    %v4109 = vand.u32 %v228, 4294901760
    %4110 = vmatpush2.msra.mxu0 %v4109
    %v4111 = vand.u32 %v221, 4294901760
    %4112 = vmatprep.subr.mxu0 %v4111
    %v4113 = vand.u32 %v220, 4294901760
    %4114 = vmatpush2.msra.mxu0 %v4113
    %v4115 = vand.u32 %v213, 4294901760
    %4116 = vmatprep.subr.mxu0 %v4115
    %v4117 = vand.u32 %v212, 4294901760
    %4118 = vmatpush2.msra.mxu0 %v4117
    %v4119 = vand.u32 %v205, 4294901760
    %4120 = vmatprep.subr.mxu0 %v4119
    %v4121 = vand.u32 %v204, 4294901760
    %4122 = vmatpush2.msra.mxu0 %v4121
    %v4123 = vand.u32 %v197, 4294901760
    %4124 = vmatprep.subr.mxu0 %v4123
    %v4125 = vand.u32 %v196, 4294901760
    %4126 = vmatpush2.msra.mxu0 %v4125
    %v4127 = vand.u32 %v189, 4294901760
    %4128 = vmatprep.subr.mxu0 %v4127
    %v4129 = vand.u32 %v188, 4294901760
    %4130 = vmatpush2.msra.mxu0 %v4129
    %v4131 = vand.u32 %v181, 4294901760
    %4132 = vmatprep.subr.mxu0 %v4131
    %v4133 = vand.u32 %v180, 4294901760
    %4134 = vmatpush2.msra.mxu0 %v4133
    %v4135 = vand.u32 %v173, 4294901760
    %4136 = vmatprep.subr.mxu0 %v4135
    %v4137 = vand.u32 %v172, 4294901760
    %4138 = vmatpush2.msra.mxu0 %v4137
    %v4139 = vand.u32 %v39, 4294901760
    %4140 = vmatprep.mubr.f32.mxu0 %v4139
    %v4141 = vand.u32 %v38, 4294901760
    %4142 = vmatmul.mubr.f32.gmra.mxu0 %v4141
    %v4143 = vpop.f32.mrf.mxu0
    %v4144 = vadd.f32 %v4007, %v4143
    %v4145 = vpop.f32.mrf.mxu0
    %v4146 = vadd.f32 %v4009, %v4145
    %4147 = vdwg.mxu0
    %v4148 = vand.u32 %v167, 4294901760
    %4149 = vmatprep.subr.mxu0 %v4148
    %v4150 = vand.u32 %v166, 4294901760
    %4151 = vmatpush1.msra.mxu0 %v4150
    %v4152 = vand.u32 %v159, 4294901760
    %4153 = vmatprep.subr.mxu0 %v4152
    %v4154 = vand.u32 %v158, 4294901760
    %4155 = vmatpush1.msra.mxu0 %v4154
    %v4156 = vand.u32 %v151, 4294901760
    %4157 = vmatprep.subr.mxu0 %v4156
    %v4158 = vand.u32 %v150, 4294901760
    %4159 = vmatpush1.msra.mxu0 %v4158
    %v4160 = vand.u32 %v143, 4294901760
    %4161 = vmatprep.subr.mxu0 %v4160
    %v4162 = vand.u32 %v142, 4294901760
    %4163 = vmatpush1.msra.mxu0 %v4162
    %v4164 = vand.u32 %v135, 4294901760
    %4165 = vmatprep.subr.mxu0 %v4164
    %v4166 = vand.u32 %v134, 4294901760
    %4167 = vmatpush1.msra.mxu0 %v4166
    %v4168 = vand.u32 %v127, 4294901760
    %4169 = vmatprep.subr.mxu0 %v4168
    %v4170 = vand.u32 %v126, 4294901760
    %4171 = vmatpush1.msra.mxu0 %v4170
    %v4172 = vand.u32 %v119, 4294901760
    %4173 = vmatprep.subr.mxu0 %v4172
    %v4174 = vand.u32 %v118, 4294901760
    %4175 = vmatpush1.msra.mxu0 %v4174
    %v4176 = vand.u32 %v111, 4294901760
    %4177 = vmatprep.subr.mxu0 %v4176
    %v4178 = vand.u32 %v110, 4294901760
    %4179 = vmatpush1.msra.mxu0 %v4178
    %v4180 = vand.u32 %v103, 4294901760
    %4181 = vmatprep.subr.mxu0 %v4180
    %v4182 = vand.u32 %v102, 4294901760
    %4183 = vmatpush1.msra.mxu0 %v4182
    %v4184 = vand.u32 %v95, 4294901760
    %4185 = vmatprep.subr.mxu0 %v4184
    %v4186 = vand.u32 %v94, 4294901760
    %4187 = vmatpush1.msra.mxu0 %v4186
    %v4188 = vand.u32 %v87, 4294901760
    %4189 = vmatprep.subr.mxu0 %v4188
    %v4190 = vand.u32 %v86, 4294901760
    %4191 = vmatpush1.msra.mxu0 %v4190
    %v4192 = vand.u32 %v79, 4294901760
    %4193 = vmatprep.subr.mxu0 %v4192
    %v4194 = vand.u32 %v78, 4294901760
    %4195 = vmatpush1.msra.mxu0 %v4194
    %v4196 = vand.u32 %v71, 4294901760
    %4197 = vmatprep.subr.mxu0 %v4196
    %v4198 = vand.u32 %v70, 4294901760
    %4199 = vmatpush1.msra.mxu0 %v4198
    %v4200 = vand.u32 %v63, 4294901760
    %4201 = vmatprep.subr.mxu0 %v4200
    %v4202 = vand.u32 %v62, 4294901760
    %4203 = vmatpush1.msra.mxu0 %v4202
    %v4204 = vand.u32 %v55, 4294901760
    %4205 = vmatprep.subr.mxu0 %v4204
    %v4206 = vand.u32 %v54, 4294901760
    %4207 = vmatpush1.msra.mxu0 %v4206
    %v4208 = vand.u32 %v47, 4294901760
    %4209 = vmatprep.subr.mxu0 %v4208
    %v4210 = vand.u32 %v46, 4294901760
    %4211 = vmatpush1.msra.mxu0 %v4210
    %v4212 = vand.u32 %v295, 4294901760
    %4213 = vmatprep.subr.mxu0 %v4212
    %v4214 = vand.u32 %v294, 4294901760
    %4215 = vmatpush2.msra.mxu0 %v4214
    %v4216 = vand.u32 %v287, 4294901760
    %4217 = vmatprep.subr.mxu0 %v4216
    %v4218 = vand.u32 %v286, 4294901760
    %4219 = vmatpush2.msra.mxu0 %v4218
    %v4220 = vand.u32 %v279, 4294901760
    %4221 = vmatprep.subr.mxu0 %v4220
    %v4222 = vand.u32 %v278, 4294901760
    %4223 = vmatpush2.msra.mxu0 %v4222
    %v4224 = vand.u32 %v271, 4294901760
    %4225 = vmatprep.subr.mxu0 %v4224
    %v4226 = vand.u32 %v270, 4294901760
    %4227 = vmatpush2.msra.mxu0 %v4226
    %v4228 = vand.u32 %v263, 4294901760
    %4229 = vmatprep.subr.mxu0 %v4228
    %v4230 = vand.u32 %v262, 4294901760
    %4231 = vmatpush2.msra.mxu0 %v4230
    %v4232 = vand.u32 %v255, 4294901760
    %4233 = vmatprep.subr.mxu0 %v4232
    %v4234 = vand.u32 %v254, 4294901760
    %4235 = vmatpush2.msra.mxu0 %v4234
    %v4236 = vand.u32 %v247, 4294901760
    %4237 = vmatprep.subr.mxu0 %v4236
    %v4238 = vand.u32 %v246, 4294901760
    %4239 = vmatpush2.msra.mxu0 %v4238
    %v4240 = vand.u32 %v239, 4294901760
    %4241 = vmatprep.subr.mxu0 %v4240
    %v4242 = vand.u32 %v238, 4294901760
    %4243 = vmatpush2.msra.mxu0 %v4242
    %v4244 = vand.u32 %v231, 4294901760
    %4245 = vmatprep.subr.mxu0 %v4244
    %v4246 = vand.u32 %v230, 4294901760
    %4247 = vmatpush2.msra.mxu0 %v4246
    %v4248 = vand.u32 %v223, 4294901760
    %4249 = vmatprep.subr.mxu0 %v4248
    %v4250 = vand.u32 %v222, 4294901760
    %4251 = vmatpush2.msra.mxu0 %v4250
    %v4252 = vand.u32 %v215, 4294901760
    %4253 = vmatprep.subr.mxu0 %v4252
    %v4254 = vand.u32 %v214, 4294901760
    %4255 = vmatpush2.msra.mxu0 %v4254
    %v4256 = vand.u32 %v207, 4294901760
    %4257 = vmatprep.subr.mxu0 %v4256
    %v4258 = vand.u32 %v206, 4294901760
    %4259 = vmatpush2.msra.mxu0 %v4258
    %v4260 = vand.u32 %v199, 4294901760
    %4261 = vmatprep.subr.mxu0 %v4260
    %v4262 = vand.u32 %v198, 4294901760
    %4263 = vmatpush2.msra.mxu0 %v4262
    %v4264 = vand.u32 %v191, 4294901760
    %4265 = vmatprep.subr.mxu0 %v4264
    %v4266 = vand.u32 %v190, 4294901760
    %4267 = vmatpush2.msra.mxu0 %v4266
    %v4268 = vand.u32 %v183, 4294901760
    %4269 = vmatprep.subr.mxu0 %v4268
    %v4270 = vand.u32 %v182, 4294901760
    %4271 = vmatpush2.msra.mxu0 %v4270
    %v4272 = vand.u32 %v175, 4294901760
    %4273 = vmatprep.subr.mxu0 %v4272
    %v4274 = vand.u32 %v174, 4294901760
    %4275 = vmatpush2.msra.mxu0 %v4274
    %v4276 = vand.u32 %v39, 4294901760
    %v4277 = vsub.f32 %v39, %v4276
    %v4278 = vand.u32 %v4277, 4294901760
    %v4279 = vsub.f32 %v4277, %v4278
    %v4280 = vand.u32 %v4279, 4294901760
    %4281 = vmatprep.mubr.f32.mxu0 %v4280
    %v4282 = vand.u32 %v38, 4294901760
    %v4283 = vsub.f32 %v38, %v4282
    %v4284 = vand.u32 %v4283, 4294901760
    %v4285 = vsub.f32 %v4283, %v4284
    %v4286 = vand.u32 %v4285, 4294901760
    %4287 = vmatmul.mubr.f32.gmra.mxu0 %v4286
    %v4288 = vpop.f32.mrf.mxu0
    %v4289 = vadd.f32 0.0, %v4288
    %v4290 = vpop.f32.mrf.mxu0
    %v4291 = vadd.f32 0.0, %v4290
    %4292 = vdwg.mxu0
    %v4293 = vand.u32 %v167, 4294901760
    %v4294 = vsub.f32 %v167, %v4293
    %v4295 = vand.u32 %v4294, 4294901760
    %v4296 = vsub.f32 %v4294, %v4295
    %v4297 = vand.u32 %v4296, 4294901760
    %4298 = vmatprep.subr.mxu0 %v4297
    %v4299 = vand.u32 %v166, 4294901760
    %v4300 = vsub.f32 %v166, %v4299
    %v4301 = vand.u32 %v4300, 4294901760
    %v4302 = vsub.f32 %v4300, %v4301
    %v4303 = vand.u32 %v4302, 4294901760
    %4304 = vmatpush1.msra.mxu0 %v4303
    %v4305 = vand.u32 %v159, 4294901760
    %v4306 = vsub.f32 %v159, %v4305
    %v4307 = vand.u32 %v4306, 4294901760
    %v4308 = vsub.f32 %v4306, %v4307
    %v4309 = vand.u32 %v4308, 4294901760
    %4310 = vmatprep.subr.mxu0 %v4309
    %v4311 = vand.u32 %v158, 4294901760
    %v4312 = vsub.f32 %v158, %v4311
    %v4313 = vand.u32 %v4312, 4294901760
    %v4314 = vsub.f32 %v4312, %v4313
    %v4315 = vand.u32 %v4314, 4294901760
    %4316 = vmatpush1.msra.mxu0 %v4315
    %v4317 = vand.u32 %v151, 4294901760
    %v4318 = vsub.f32 %v151, %v4317
    %v4319 = vand.u32 %v4318, 4294901760
    %v4320 = vsub.f32 %v4318, %v4319
    %v4321 = vand.u32 %v4320, 4294901760
    %4322 = vmatprep.subr.mxu0 %v4321
    %v4323 = vand.u32 %v150, 4294901760
    %v4324 = vsub.f32 %v150, %v4323
    %v4325 = vand.u32 %v4324, 4294901760
    %v4326 = vsub.f32 %v4324, %v4325
    %v4327 = vand.u32 %v4326, 4294901760
    %4328 = vmatpush1.msra.mxu0 %v4327
    %v4329 = vand.u32 %v143, 4294901760
    %v4330 = vsub.f32 %v143, %v4329
    %v4331 = vand.u32 %v4330, 4294901760
    %v4332 = vsub.f32 %v4330, %v4331
    %v4333 = vand.u32 %v4332, 4294901760
    %4334 = vmatprep.subr.mxu0 %v4333
    %v4335 = vand.u32 %v142, 4294901760
    %v4336 = vsub.f32 %v142, %v4335
    %v4337 = vand.u32 %v4336, 4294901760
    %v4338 = vsub.f32 %v4336, %v4337
    %v4339 = vand.u32 %v4338, 4294901760
    %4340 = vmatpush1.msra.mxu0 %v4339
    %v4341 = vand.u32 %v135, 4294901760
    %v4342 = vsub.f32 %v135, %v4341
    %v4343 = vand.u32 %v4342, 4294901760
    %v4344 = vsub.f32 %v4342, %v4343
    %v4345 = vand.u32 %v4344, 4294901760
    %4346 = vmatprep.subr.mxu0 %v4345
    %v4347 = vand.u32 %v134, 4294901760
    %v4348 = vsub.f32 %v134, %v4347
    %v4349 = vand.u32 %v4348, 4294901760
    %v4350 = vsub.f32 %v4348, %v4349
    %v4351 = vand.u32 %v4350, 4294901760
    %4352 = vmatpush1.msra.mxu0 %v4351
    %v4353 = vand.u32 %v127, 4294901760
    %v4354 = vsub.f32 %v127, %v4353
    %v4355 = vand.u32 %v4354, 4294901760
    %v4356 = vsub.f32 %v4354, %v4355
    %v4357 = vand.u32 %v4356, 4294901760
    %4358 = vmatprep.subr.mxu0 %v4357
    %v4359 = vand.u32 %v126, 4294901760
    %v4360 = vsub.f32 %v126, %v4359
    %v4361 = vand.u32 %v4360, 4294901760
    %v4362 = vsub.f32 %v4360, %v4361
    %v4363 = vand.u32 %v4362, 4294901760
    %4364 = vmatpush1.msra.mxu0 %v4363
    %v4365 = vand.u32 %v119, 4294901760
    %v4366 = vsub.f32 %v119, %v4365
    %v4367 = vand.u32 %v4366, 4294901760
    %v4368 = vsub.f32 %v4366, %v4367
    %v4369 = vand.u32 %v4368, 4294901760
    %4370 = vmatprep.subr.mxu0 %v4369
    %v4371 = vand.u32 %v118, 4294901760
    %v4372 = vsub.f32 %v118, %v4371
    %v4373 = vand.u32 %v4372, 4294901760
    %v4374 = vsub.f32 %v4372, %v4373
    %v4375 = vand.u32 %v4374, 4294901760
    %4376 = vmatpush1.msra.mxu0 %v4375
    %v4377 = vand.u32 %v111, 4294901760
    %v4378 = vsub.f32 %v111, %v4377
    %v4379 = vand.u32 %v4378, 4294901760
    %v4380 = vsub.f32 %v4378, %v4379
    %v4381 = vand.u32 %v4380, 4294901760
    %4382 = vmatprep.subr.mxu0 %v4381
    %v4383 = vand.u32 %v110, 4294901760
    %v4384 = vsub.f32 %v110, %v4383
    %v4385 = vand.u32 %v4384, 4294901760
    %v4386 = vsub.f32 %v4384, %v4385
    %v4387 = vand.u32 %v4386, 4294901760
    %4388 = vmatpush1.msra.mxu0 %v4387
    %v4389 = vand.u32 %v103, 4294901760
    %v4390 = vsub.f32 %v103, %v4389
    %v4391 = vand.u32 %v4390, 4294901760
    %v4392 = vsub.f32 %v4390, %v4391
    %v4393 = vand.u32 %v4392, 4294901760
    %4394 = vmatprep.subr.mxu0 %v4393
    %v4395 = vand.u32 %v102, 4294901760
    %v4396 = vsub.f32 %v102, %v4395
    %v4397 = vand.u32 %v4396, 4294901760
    %v4398 = vsub.f32 %v4396, %v4397
    %v4399 = vand.u32 %v4398, 4294901760
    %4400 = vmatpush1.msra.mxu0 %v4399
    %v4401 = vand.u32 %v95, 4294901760
    %v4402 = vsub.f32 %v95, %v4401
    %v4403 = vand.u32 %v4402, 4294901760
    %v4404 = vsub.f32 %v4402, %v4403
    %v4405 = vand.u32 %v4404, 4294901760
    %4406 = vmatprep.subr.mxu0 %v4405
    %v4407 = vand.u32 %v94, 4294901760
    %v4408 = vsub.f32 %v94, %v4407
    %v4409 = vand.u32 %v4408, 4294901760
    %v4410 = vsub.f32 %v4408, %v4409
    %v4411 = vand.u32 %v4410, 4294901760
    %4412 = vmatpush1.msra.mxu0 %v4411
    %v4413 = vand.u32 %v87, 4294901760
    %v4414 = vsub.f32 %v87, %v4413
    %v4415 = vand.u32 %v4414, 4294901760
    %v4416 = vsub.f32 %v4414, %v4415
    %v4417 = vand.u32 %v4416, 4294901760
    %4418 = vmatprep.subr.mxu0 %v4417
    %v4419 = vand.u32 %v86, 4294901760
    %v4420 = vsub.f32 %v86, %v4419
    %v4421 = vand.u32 %v4420, 4294901760
    %v4422 = vsub.f32 %v4420, %v4421
    %v4423 = vand.u32 %v4422, 4294901760
    %4424 = vmatpush1.msra.mxu0 %v4423
    %v4425 = vand.u32 %v79, 4294901760
    %v4426 = vsub.f32 %v79, %v4425
    %v4427 = vand.u32 %v4426, 4294901760
    %v4428 = vsub.f32 %v4426, %v4427
    %v4429 = vand.u32 %v4428, 4294901760
    %4430 = vmatprep.subr.mxu0 %v4429
    %v4431 = vand.u32 %v78, 4294901760
    %v4432 = vsub.f32 %v78, %v4431
    %v4433 = vand.u32 %v4432, 4294901760
    %v4434 = vsub.f32 %v4432, %v4433
    %v4435 = vand.u32 %v4434, 4294901760
    %4436 = vmatpush1.msra.mxu0 %v4435
    %v4437 = vand.u32 %v71, 4294901760
    %v4438 = vsub.f32 %v71, %v4437
    %v4439 = vand.u32 %v4438, 4294901760
    %v4440 = vsub.f32 %v4438, %v4439
    %v4441 = vand.u32 %v4440, 4294901760
    %4442 = vmatprep.subr.mxu0 %v4441
    %v4443 = vand.u32 %v70, 4294901760
    %v4444 = vsub.f32 %v70, %v4443
    %v4445 = vand.u32 %v4444, 4294901760
    %v4446 = vsub.f32 %v4444, %v4445
    %v4447 = vand.u32 %v4446, 4294901760
    %4448 = vmatpush1.msra.mxu0 %v4447
    %v4449 = vand.u32 %v63, 4294901760
    %v4450 = vsub.f32 %v63, %v4449
    %v4451 = vand.u32 %v4450, 4294901760
    %v4452 = vsub.f32 %v4450, %v4451
    %v4453 = vand.u32 %v4452, 4294901760
    %4454 = vmatprep.subr.mxu0 %v4453
    %v4455 = vand.u32 %v62, 4294901760
    %v4456 = vsub.f32 %v62, %v4455
    %v4457 = vand.u32 %v4456, 4294901760
    %v4458 = vsub.f32 %v4456, %v4457
    %v4459 = vand.u32 %v4458, 4294901760
    %4460 = vmatpush1.msra.mxu0 %v4459
    %v4461 = vand.u32 %v55, 4294901760
    %v4462 = vsub.f32 %v55, %v4461
    %v4463 = vand.u32 %v4462, 4294901760
    %v4464 = vsub.f32 %v4462, %v4463
    %v4465 = vand.u32 %v4464, 4294901760
    %4466 = vmatprep.subr.mxu0 %v4465
    %v4467 = vand.u32 %v54, 4294901760
    %v4468 = vsub.f32 %v54, %v4467
    %v4469 = vand.u32 %v4468, 4294901760
    %v4470 = vsub.f32 %v4468, %v4469
    %v4471 = vand.u32 %v4470, 4294901760
    %4472 = vmatpush1.msra.mxu0 %v4471
    %v4473 = vand.u32 %v47, 4294901760
    %v4474 = vsub.f32 %v47, %v4473
    %v4475 = vand.u32 %v4474, 4294901760
    %v4476 = vsub.f32 %v4474, %v4475
    %v4477 = vand.u32 %v4476, 4294901760
    %4478 = vmatprep.subr.mxu0 %v4477
    %v4479 = vand.u32 %v46, 4294901760
    %v4480 = vsub.f32 %v46, %v4479
    %v4481 = vand.u32 %v4480, 4294901760
    %v4482 = vsub.f32 %v4480, %v4481
    %v4483 = vand.u32 %v4482, 4294901760
    %4484 = vmatpush1.msra.mxu0 %v4483
    %v4485 = vand.u32 %v295, 4294901760
    %v4486 = vsub.f32 %v295, %v4485
    %v4487 = vand.u32 %v4486, 4294901760
    %v4488 = vsub.f32 %v4486, %v4487
    %v4489 = vand.u32 %v4488, 4294901760
    %4490 = vmatprep.subr.mxu0 %v4489
    %v4491 = vand.u32 %v294, 4294901760
    %v4492 = vsub.f32 %v294, %v4491
    %v4493 = vand.u32 %v4492, 4294901760
    %v4494 = vsub.f32 %v4492, %v4493
    %v4495 = vand.u32 %v4494, 4294901760
    %4496 = vmatpush2.msra.mxu0 %v4495
    %v4497 = vand.u32 %v287, 4294901760
    %v4498 = vsub.f32 %v287, %v4497
    %v4499 = vand.u32 %v4498, 4294901760
    %v4500 = vsub.f32 %v4498, %v4499
    %v4501 = vand.u32 %v4500, 4294901760
    %4502 = vmatprep.subr.mxu0 %v4501
    %v4503 = vand.u32 %v286, 4294901760
    %v4504 = vsub.f32 %v286, %v4503
    %v4505 = vand.u32 %v4504, 4294901760
    %v4506 = vsub.f32 %v4504, %v4505
    %v4507 = vand.u32 %v4506, 4294901760
    %4508 = vmatpush2.msra.mxu0 %v4507
    %v4509 = vand.u32 %v279, 4294901760
    %v4510 = vsub.f32 %v279, %v4509
    %v4511 = vand.u32 %v4510, 4294901760
    %v4512 = vsub.f32 %v4510, %v4511
    %v4513 = vand.u32 %v4512, 4294901760
    %4514 = vmatprep.subr.mxu0 %v4513
    %v4515 = vand.u32 %v278, 4294901760
    %v4516 = vsub.f32 %v278, %v4515
    %v4517 = vand.u32 %v4516, 4294901760
    %v4518 = vsub.f32 %v4516, %v4517
    %v4519 = vand.u32 %v4518, 4294901760
    %4520 = vmatpush2.msra.mxu0 %v4519
    %v4521 = vand.u32 %v271, 4294901760
    %v4522 = vsub.f32 %v271, %v4521
    %v4523 = vand.u32 %v4522, 4294901760
    %v4524 = vsub.f32 %v4522, %v4523
    %v4525 = vand.u32 %v4524, 4294901760
    %4526 = vmatprep.subr.mxu0 %v4525
    %v4527 = vand.u32 %v270, 4294901760
    %v4528 = vsub.f32 %v270, %v4527
    %v4529 = vand.u32 %v4528, 4294901760
    %v4530 = vsub.f32 %v4528, %v4529
    %v4531 = vand.u32 %v4530, 4294901760
    %4532 = vmatpush2.msra.mxu0 %v4531
    %v4533 = vand.u32 %v263, 4294901760
    %v4534 = vsub.f32 %v263, %v4533
    %v4535 = vand.u32 %v4534, 4294901760
    %v4536 = vsub.f32 %v4534, %v4535
    %v4537 = vand.u32 %v4536, 4294901760
    %4538 = vmatprep.subr.mxu0 %v4537
    %v4539 = vand.u32 %v262, 4294901760
    %v4540 = vsub.f32 %v262, %v4539
    %v4541 = vand.u32 %v4540, 4294901760
    %v4542 = vsub.f32 %v4540, %v4541
    %v4543 = vand.u32 %v4542, 4294901760
    %4544 = vmatpush2.msra.mxu0 %v4543
    %v4545 = vand.u32 %v255, 4294901760
    %v4546 = vsub.f32 %v255, %v4545
    %v4547 = vand.u32 %v4546, 4294901760
    %v4548 = vsub.f32 %v4546, %v4547
    %v4549 = vand.u32 %v4548, 4294901760
    %4550 = vmatprep.subr.mxu0 %v4549
    %v4551 = vand.u32 %v254, 4294901760
    %v4552 = vsub.f32 %v254, %v4551
    %v4553 = vand.u32 %v4552, 4294901760
    %v4554 = vsub.f32 %v4552, %v4553
    %v4555 = vand.u32 %v4554, 4294901760
    %4556 = vmatpush2.msra.mxu0 %v4555
    %v4557 = vand.u32 %v247, 4294901760
    %v4558 = vsub.f32 %v247, %v4557
    %v4559 = vand.u32 %v4558, 4294901760
    %v4560 = vsub.f32 %v4558, %v4559
    %v4561 = vand.u32 %v4560, 4294901760
    %4562 = vmatprep.subr.mxu0 %v4561
    %v4563 = vand.u32 %v246, 4294901760
    %v4564 = vsub.f32 %v246, %v4563
    %v4565 = vand.u32 %v4564, 4294901760
    %v4566 = vsub.f32 %v4564, %v4565
    %v4567 = vand.u32 %v4566, 4294901760
    %4568 = vmatpush2.msra.mxu0 %v4567
    %v4569 = vand.u32 %v239, 4294901760
    %v4570 = vsub.f32 %v239, %v4569
    %v4571 = vand.u32 %v4570, 4294901760
    %v4572 = vsub.f32 %v4570, %v4571
    %v4573 = vand.u32 %v4572, 4294901760
    %4574 = vmatprep.subr.mxu0 %v4573
    %v4575 = vand.u32 %v238, 4294901760
    %v4576 = vsub.f32 %v238, %v4575
    %v4577 = vand.u32 %v4576, 4294901760
    %v4578 = vsub.f32 %v4576, %v4577
    %v4579 = vand.u32 %v4578, 4294901760
    %4580 = vmatpush2.msra.mxu0 %v4579
    %v4581 = vand.u32 %v231, 4294901760
    %v4582 = vsub.f32 %v231, %v4581
    %v4583 = vand.u32 %v4582, 4294901760
    %v4584 = vsub.f32 %v4582, %v4583
    %v4585 = vand.u32 %v4584, 4294901760
    %4586 = vmatprep.subr.mxu0 %v4585
    %v4587 = vand.u32 %v230, 4294901760
    %v4588 = vsub.f32 %v230, %v4587
    %v4589 = vand.u32 %v4588, 4294901760
    %v4590 = vsub.f32 %v4588, %v4589
    %v4591 = vand.u32 %v4590, 4294901760
    %4592 = vmatpush2.msra.mxu0 %v4591
    %v4593 = vand.u32 %v223, 4294901760
    %v4594 = vsub.f32 %v223, %v4593
    %v4595 = vand.u32 %v4594, 4294901760
    %v4596 = vsub.f32 %v4594, %v4595
    %v4597 = vand.u32 %v4596, 4294901760
    %4598 = vmatprep.subr.mxu0 %v4597
    %v4599 = vand.u32 %v222, 4294901760
    %v4600 = vsub.f32 %v222, %v4599
    %v4601 = vand.u32 %v4600, 4294901760
    %v4602 = vsub.f32 %v4600, %v4601
    %v4603 = vand.u32 %v4602, 4294901760
    %4604 = vmatpush2.msra.mxu0 %v4603
    %v4605 = vand.u32 %v215, 4294901760
    %v4606 = vsub.f32 %v215, %v4605
    %v4607 = vand.u32 %v4606, 4294901760
    %v4608 = vsub.f32 %v4606, %v4607
    %v4609 = vand.u32 %v4608, 4294901760
    %4610 = vmatprep.subr.mxu0 %v4609
    %v4611 = vand.u32 %v214, 4294901760
    %v4612 = vsub.f32 %v214, %v4611
    %v4613 = vand.u32 %v4612, 4294901760
    %v4614 = vsub.f32 %v4612, %v4613
    %v4615 = vand.u32 %v4614, 4294901760
    %4616 = vmatpush2.msra.mxu0 %v4615
    %v4617 = vand.u32 %v207, 4294901760
    %v4618 = vsub.f32 %v207, %v4617
    %v4619 = vand.u32 %v4618, 4294901760
    %v4620 = vsub.f32 %v4618, %v4619
    %v4621 = vand.u32 %v4620, 4294901760
    %4622 = vmatprep.subr.mxu0 %v4621
    %v4623 = vand.u32 %v206, 4294901760
    %v4624 = vsub.f32 %v206, %v4623
    %v4625 = vand.u32 %v4624, 4294901760
    %v4626 = vsub.f32 %v4624, %v4625
    %v4627 = vand.u32 %v4626, 4294901760
    %4628 = vmatpush2.msra.mxu0 %v4627
    %v4629 = vand.u32 %v199, 4294901760
    %v4630 = vsub.f32 %v199, %v4629
    %v4631 = vand.u32 %v4630, 4294901760
    %v4632 = vsub.f32 %v4630, %v4631
    %v4633 = vand.u32 %v4632, 4294901760
    %4634 = vmatprep.subr.mxu0 %v4633
    %v4635 = vand.u32 %v198, 4294901760
    %v4636 = vsub.f32 %v198, %v4635
    %v4637 = vand.u32 %v4636, 4294901760
    %v4638 = vsub.f32 %v4636, %v4637
    %v4639 = vand.u32 %v4638, 4294901760
    %4640 = vmatpush2.msra.mxu0 %v4639
    %v4641 = vand.u32 %v191, 4294901760
    %v4642 = vsub.f32 %v191, %v4641
    %v4643 = vand.u32 %v4642, 4294901760
    %v4644 = vsub.f32 %v4642, %v4643
    %v4645 = vand.u32 %v4644, 4294901760
    %4646 = vmatprep.subr.mxu0 %v4645
    %v4647 = vand.u32 %v190, 4294901760
    %v4648 = vsub.f32 %v190, %v4647
    %v4649 = vand.u32 %v4648, 4294901760
    %v4650 = vsub.f32 %v4648, %v4649
    %v4651 = vand.u32 %v4650, 4294901760
    %4652 = vmatpush2.msra.mxu0 %v4651
    %v4653 = vand.u32 %v183, 4294901760
    %v4654 = vsub.f32 %v183, %v4653
    %v4655 = vand.u32 %v4654, 4294901760
    %v4656 = vsub.f32 %v4654, %v4655
    %v4657 = vand.u32 %v4656, 4294901760
    %4658 = vmatprep.subr.mxu0 %v4657
    %v4659 = vand.u32 %v182, 4294901760
    %v4660 = vsub.f32 %v182, %v4659
    %v4661 = vand.u32 %v4660, 4294901760
    %v4662 = vsub.f32 %v4660, %v4661
    %v4663 = vand.u32 %v4662, 4294901760
    %4664 = vmatpush2.msra.mxu0 %v4663
    %v4665 = vand.u32 %v175, 4294901760
    %v4666 = vsub.f32 %v175, %v4665
    %v4667 = vand.u32 %v4666, 4294901760
    %v4668 = vsub.f32 %v4666, %v4667
    %v4669 = vand.u32 %v4668, 4294901760
    %4670 = vmatprep.subr.mxu0 %v4669
    %v4671 = vand.u32 %v174, 4294901760
    %v4672 = vsub.f32 %v174, %v4671
    %v4673 = vand.u32 %v4672, 4294901760
    %v4674 = vsub.f32 %v4672, %v4673
    %v4675 = vand.u32 %v4674, 4294901760
    %4676 = vmatpush2.msra.mxu0 %v4675
    %v4677 = vand.u32 %v39, 4294901760
    %4678 = vmatprep.mubr.f32.mxu0 %v4677
    %v4679 = vand.u32 %v38, 4294901760
    %4680 = vmatmul.mubr.f32.gmra.mxu0 %v4679
    %v4681 = vpop.f32.mrf.mxu0
    %v4682 = vadd.f32 %v4289, %v4681
    %v4683 = vpop.f32.mrf.mxu0
    %v4684 = vadd.f32 %v4291, %v4683
    %4685 = vdwg.mxu0
    %v4686 = vand.u32 %v167, 4294901760
    %v4687 = vsub.f32 %v167, %v4686
    %4688 = vmatprep.subr.mxu0 %v4687
    %v4689 = vand.u32 %v166, 4294901760
    %v4690 = vsub.f32 %v166, %v4689
    %4691 = vmatpush1.msra.mxu0 %v4690
    %v4692 = vand.u32 %v159, 4294901760
    %v4693 = vsub.f32 %v159, %v4692
    %4694 = vmatprep.subr.mxu0 %v4693
    %v4695 = vand.u32 %v158, 4294901760
    %v4696 = vsub.f32 %v158, %v4695
    %4697 = vmatpush1.msra.mxu0 %v4696
    %v4698 = vand.u32 %v151, 4294901760
    %v4699 = vsub.f32 %v151, %v4698
    %4700 = vmatprep.subr.mxu0 %v4699
    %v4701 = vand.u32 %v150, 4294901760
    %v4702 = vsub.f32 %v150, %v4701
    %4703 = vmatpush1.msra.mxu0 %v4702
    %v4704 = vand.u32 %v143, 4294901760
    %v4705 = vsub.f32 %v143, %v4704
    %4706 = vmatprep.subr.mxu0 %v4705
    %v4707 = vand.u32 %v142, 4294901760
    %v4708 = vsub.f32 %v142, %v4707
    %4709 = vmatpush1.msra.mxu0 %v4708
    %v4710 = vand.u32 %v135, 4294901760
    %v4711 = vsub.f32 %v135, %v4710
    %4712 = vmatprep.subr.mxu0 %v4711
    %v4713 = vand.u32 %v134, 4294901760
    %v4714 = vsub.f32 %v134, %v4713
    %4715 = vmatpush1.msra.mxu0 %v4714
    %v4716 = vand.u32 %v127, 4294901760
    %v4717 = vsub.f32 %v127, %v4716
    %4718 = vmatprep.subr.mxu0 %v4717
    %v4719 = vand.u32 %v126, 4294901760
    %v4720 = vsub.f32 %v126, %v4719
    %4721 = vmatpush1.msra.mxu0 %v4720
    %v4722 = vand.u32 %v119, 4294901760
    %v4723 = vsub.f32 %v119, %v4722
    %4724 = vmatprep.subr.mxu0 %v4723
    %v4725 = vand.u32 %v118, 4294901760
    %v4726 = vsub.f32 %v118, %v4725
    %4727 = vmatpush1.msra.mxu0 %v4726
    %v4728 = vand.u32 %v111, 4294901760
    %v4729 = vsub.f32 %v111, %v4728
    %4730 = vmatprep.subr.mxu0 %v4729
    %v4731 = vand.u32 %v110, 4294901760
    %v4732 = vsub.f32 %v110, %v4731
    %4733 = vmatpush1.msra.mxu0 %v4732
    %v4734 = vand.u32 %v103, 4294901760
    %v4735 = vsub.f32 %v103, %v4734
    %4736 = vmatprep.subr.mxu0 %v4735
    %v4737 = vand.u32 %v102, 4294901760
    %v4738 = vsub.f32 %v102, %v4737
    %4739 = vmatpush1.msra.mxu0 %v4738
    %v4740 = vand.u32 %v95, 4294901760
    %v4741 = vsub.f32 %v95, %v4740
    %4742 = vmatprep.subr.mxu0 %v4741
    %v4743 = vand.u32 %v94, 4294901760
    %v4744 = vsub.f32 %v94, %v4743
    %4745 = vmatpush1.msra.mxu0 %v4744
    %v4746 = vand.u32 %v87, 4294901760
    %v4747 = vsub.f32 %v87, %v4746
    %4748 = vmatprep.subr.mxu0 %v4747
    %v4749 = vand.u32 %v86, 4294901760
    %v4750 = vsub.f32 %v86, %v4749
    %4751 = vmatpush1.msra.mxu0 %v4750
    %v4752 = vand.u32 %v79, 4294901760
    %v4753 = vsub.f32 %v79, %v4752
    %4754 = vmatprep.subr.mxu0 %v4753
    %v4755 = vand.u32 %v78, 4294901760
    %v4756 = vsub.f32 %v78, %v4755
    %4757 = vmatpush1.msra.mxu0 %v4756
    %v4758 = vand.u32 %v71, 4294901760
    %v4759 = vsub.f32 %v71, %v4758
    %4760 = vmatprep.subr.mxu0 %v4759
    %v4761 = vand.u32 %v70, 4294901760
    %v4762 = vsub.f32 %v70, %v4761
    %4763 = vmatpush1.msra.mxu0 %v4762
    %v4764 = vand.u32 %v63, 4294901760
    %v4765 = vsub.f32 %v63, %v4764
    %4766 = vmatprep.subr.mxu0 %v4765
    %v4767 = vand.u32 %v62, 4294901760
    %v4768 = vsub.f32 %v62, %v4767
    %4769 = vmatpush1.msra.mxu0 %v4768
    %v4770 = vand.u32 %v55, 4294901760
    %v4771 = vsub.f32 %v55, %v4770
    %4772 = vmatprep.subr.mxu0 %v4771
    %v4773 = vand.u32 %v54, 4294901760
    %v4774 = vsub.f32 %v54, %v4773
    %4775 = vmatpush1.msra.mxu0 %v4774
    %v4776 = vand.u32 %v47, 4294901760
    %v4777 = vsub.f32 %v47, %v4776
    %4778 = vmatprep.subr.mxu0 %v4777
    %v4779 = vand.u32 %v46, 4294901760
    %v4780 = vsub.f32 %v46, %v4779
    %4781 = vmatpush1.msra.mxu0 %v4780
    %v4782 = vand.u32 %v295, 4294901760
    %v4783 = vsub.f32 %v295, %v4782
    %4784 = vmatprep.subr.mxu0 %v4783
    %v4785 = vand.u32 %v294, 4294901760
    %v4786 = vsub.f32 %v294, %v4785
    %4787 = vmatpush2.msra.mxu0 %v4786
    %v4788 = vand.u32 %v287, 4294901760
    %v4789 = vsub.f32 %v287, %v4788
    %4790 = vmatprep.subr.mxu0 %v4789
    %v4791 = vand.u32 %v286, 4294901760
    %v4792 = vsub.f32 %v286, %v4791
    %4793 = vmatpush2.msra.mxu0 %v4792
    %v4794 = vand.u32 %v279, 4294901760
    %v4795 = vsub.f32 %v279, %v4794
    %4796 = vmatprep.subr.mxu0 %v4795
    %v4797 = vand.u32 %v278, 4294901760
    %v4798 = vsub.f32 %v278, %v4797
    %4799 = vmatpush2.msra.mxu0 %v4798
    %v4800 = vand.u32 %v271, 4294901760
    %v4801 = vsub.f32 %v271, %v4800
    %4802 = vmatprep.subr.mxu0 %v4801
    %v4803 = vand.u32 %v270, 4294901760
    %v4804 = vsub.f32 %v270, %v4803
    %4805 = vmatpush2.msra.mxu0 %v4804
    %v4806 = vand.u32 %v263, 4294901760
    %v4807 = vsub.f32 %v263, %v4806
    %4808 = vmatprep.subr.mxu0 %v4807
    %v4809 = vand.u32 %v262, 4294901760
    %v4810 = vsub.f32 %v262, %v4809
    %4811 = vmatpush2.msra.mxu0 %v4810
    %v4812 = vand.u32 %v255, 4294901760
    %v4813 = vsub.f32 %v255, %v4812
    %4814 = vmatprep.subr.mxu0 %v4813
    %v4815 = vand.u32 %v254, 4294901760
    %v4816 = vsub.f32 %v254, %v4815
    %4817 = vmatpush2.msra.mxu0 %v4816
    %v4818 = vand.u32 %v247, 4294901760
    %v4819 = vsub.f32 %v247, %v4818
    %4820 = vmatprep.subr.mxu0 %v4819
    %v4821 = vand.u32 %v246, 4294901760
    %v4822 = vsub.f32 %v246, %v4821
    %4823 = vmatpush2.msra.mxu0 %v4822
    %v4824 = vand.u32 %v239, 4294901760
    %v4825 = vsub.f32 %v239, %v4824
    %4826 = vmatprep.subr.mxu0 %v4825
    %v4827 = vand.u32 %v238, 4294901760
    %v4828 = vsub.f32 %v238, %v4827
    %4829 = vmatpush2.msra.mxu0 %v4828
    %v4830 = vand.u32 %v231, 4294901760
    %v4831 = vsub.f32 %v231, %v4830
    %4832 = vmatprep.subr.mxu0 %v4831
    %v4833 = vand.u32 %v230, 4294901760
    %v4834 = vsub.f32 %v230, %v4833
    %4835 = vmatpush2.msra.mxu0 %v4834
    %v4836 = vand.u32 %v223, 4294901760
    %v4837 = vsub.f32 %v223, %v4836
    %4838 = vmatprep.subr.mxu0 %v4837
    %v4839 = vand.u32 %v222, 4294901760
    %v4840 = vsub.f32 %v222, %v4839
    %4841 = vmatpush2.msra.mxu0 %v4840
    %v4842 = vand.u32 %v215, 4294901760
    %v4843 = vsub.f32 %v215, %v4842
    %4844 = vmatprep.subr.mxu0 %v4843
    %v4845 = vand.u32 %v214, 4294901760
    %v4846 = vsub.f32 %v214, %v4845
    %4847 = vmatpush2.msra.mxu0 %v4846
    %v4848 = vand.u32 %v207, 4294901760
    %v4849 = vsub.f32 %v207, %v4848
    %4850 = vmatprep.subr.mxu0 %v4849
    %v4851 = vand.u32 %v206, 4294901760
    %v4852 = vsub.f32 %v206, %v4851
    %4853 = vmatpush2.msra.mxu0 %v4852
    %v4854 = vand.u32 %v199, 4294901760
    %v4855 = vsub.f32 %v199, %v4854
    %4856 = vmatprep.subr.mxu0 %v4855
    %v4857 = vand.u32 %v198, 4294901760
    %v4858 = vsub.f32 %v198, %v4857
    %4859 = vmatpush2.msra.mxu0 %v4858
    %v4860 = vand.u32 %v191, 4294901760
    %v4861 = vsub.f32 %v191, %v4860
    %4862 = vmatprep.subr.mxu0 %v4861
    %v4863 = vand.u32 %v190, 4294901760
    %v4864 = vsub.f32 %v190, %v4863
    %4865 = vmatpush2.msra.mxu0 %v4864
    %v4866 = vand.u32 %v183, 4294901760
    %v4867 = vsub.f32 %v183, %v4866
    %4868 = vmatprep.subr.mxu0 %v4867
    %v4869 = vand.u32 %v182, 4294901760
    %v4870 = vsub.f32 %v182, %v4869
    %4871 = vmatpush2.msra.mxu0 %v4870
    %v4872 = vand.u32 %v175, 4294901760
    %v4873 = vsub.f32 %v175, %v4872
    %4874 = vmatprep.subr.mxu0 %v4873
    %v4875 = vand.u32 %v174, 4294901760
    %v4876 = vsub.f32 %v174, %v4875
    %4877 = vmatpush2.msra.mxu0 %v4876
    %v4878 = vand.u32 %v39, 4294901760
    %v4879 = vsub.f32 %v39, %v4878
    %4880 = vmatprep.mubr.f32.mxu0 %v4879
    %v4881 = vand.u32 %v38, 4294901760
    %v4882 = vsub.f32 %v38, %v4881
    %4883 = vmatmul.mubr.f32.gmra.mxu0 %v4882
    %v4884 = vpop.f32.mrf.mxu0
    %v4885 = vadd.f32 %v4682, %v4884
    %v4886 = vpop.f32.mrf.mxu0
    %v4887 = vadd.f32 %v4684, %v4886
    %4888 = vdwg.mxu0
    %v4889 = vand.u32 %v167, 4294901760
    %4890 = vmatprep.subr.mxu0 %v4889
    %v4891 = vand.u32 %v166, 4294901760
    %4892 = vmatpush1.msra.mxu0 %v4891
    %v4893 = vand.u32 %v159, 4294901760
    %4894 = vmatprep.subr.mxu0 %v4893
    %v4895 = vand.u32 %v158, 4294901760
    %4896 = vmatpush1.msra.mxu0 %v4895
    %v4897 = vand.u32 %v151, 4294901760
    %4898 = vmatprep.subr.mxu0 %v4897
    %v4899 = vand.u32 %v150, 4294901760
    %4900 = vmatpush1.msra.mxu0 %v4899
    %v4901 = vand.u32 %v143, 4294901760
    %4902 = vmatprep.subr.mxu0 %v4901
    %v4903 = vand.u32 %v142, 4294901760
    %4904 = vmatpush1.msra.mxu0 %v4903
    %v4905 = vand.u32 %v135, 4294901760
    %4906 = vmatprep.subr.mxu0 %v4905
    %v4907 = vand.u32 %v134, 4294901760
    %4908 = vmatpush1.msra.mxu0 %v4907
    %v4909 = vand.u32 %v127, 4294901760
    %4910 = vmatprep.subr.mxu0 %v4909
    %v4911 = vand.u32 %v126, 4294901760
    %4912 = vmatpush1.msra.mxu0 %v4911
    %v4913 = vand.u32 %v119, 4294901760
    %4914 = vmatprep.subr.mxu0 %v4913
    %v4915 = vand.u32 %v118, 4294901760
    %4916 = vmatpush1.msra.mxu0 %v4915
    %v4917 = vand.u32 %v111, 4294901760
    %4918 = vmatprep.subr.mxu0 %v4917
    %v4919 = vand.u32 %v110, 4294901760
    %4920 = vmatpush1.msra.mxu0 %v4919
    %v4921 = vand.u32 %v103, 4294901760
    %4922 = vmatprep.subr.mxu0 %v4921
    %v4923 = vand.u32 %v102, 4294901760
    %4924 = vmatpush1.msra.mxu0 %v4923
    %v4925 = vand.u32 %v95, 4294901760
    %4926 = vmatprep.subr.mxu0 %v4925
    %v4927 = vand.u32 %v94, 4294901760
    %4928 = vmatpush1.msra.mxu0 %v4927
    %v4929 = vand.u32 %v87, 4294901760
    %4930 = vmatprep.subr.mxu0 %v4929
    %v4931 = vand.u32 %v86, 4294901760
    %4932 = vmatpush1.msra.mxu0 %v4931
    %v4933 = vand.u32 %v79, 4294901760
    %4934 = vmatprep.subr.mxu0 %v4933
    %v4935 = vand.u32 %v78, 4294901760
    %4936 = vmatpush1.msra.mxu0 %v4935
    %v4937 = vand.u32 %v71, 4294901760
    %4938 = vmatprep.subr.mxu0 %v4937
    %v4939 = vand.u32 %v70, 4294901760
    %4940 = vmatpush1.msra.mxu0 %v4939
    %v4941 = vand.u32 %v63, 4294901760
    %4942 = vmatprep.subr.mxu0 %v4941
    %v4943 = vand.u32 %v62, 4294901760
    %4944 = vmatpush1.msra.mxu0 %v4943
    %v4945 = vand.u32 %v55, 4294901760
    %4946 = vmatprep.subr.mxu0 %v4945
    %v4947 = vand.u32 %v54, 4294901760
    %4948 = vmatpush1.msra.mxu0 %v4947
    %v4949 = vand.u32 %v47, 4294901760
    %4950 = vmatprep.subr.mxu0 %v4949
    %v4951 = vand.u32 %v46, 4294901760
    %4952 = vmatpush1.msra.mxu0 %v4951
    %v4953 = vand.u32 %v295, 4294901760
    %4954 = vmatprep.subr.mxu0 %v4953
    %v4955 = vand.u32 %v294, 4294901760
    %4956 = vmatpush2.msra.mxu0 %v4955
    %v4957 = vand.u32 %v287, 4294901760
    %4958 = vmatprep.subr.mxu0 %v4957
    %v4959 = vand.u32 %v286, 4294901760
    %4960 = vmatpush2.msra.mxu0 %v4959
    %v4961 = vand.u32 %v279, 4294901760
    %4962 = vmatprep.subr.mxu0 %v4961
    %v4963 = vand.u32 %v278, 4294901760
    %4964 = vmatpush2.msra.mxu0 %v4963
    %v4965 = vand.u32 %v271, 4294901760
    %4966 = vmatprep.subr.mxu0 %v4965
    %v4967 = vand.u32 %v270, 4294901760
    %4968 = vmatpush2.msra.mxu0 %v4967
    %v4969 = vand.u32 %v263, 4294901760
    %4970 = vmatprep.subr.mxu0 %v4969
    %v4971 = vand.u32 %v262, 4294901760
    %4972 = vmatpush2.msra.mxu0 %v4971
    %v4973 = vand.u32 %v255, 4294901760
    %4974 = vmatprep.subr.mxu0 %v4973
    %v4975 = vand.u32 %v254, 4294901760
    %4976 = vmatpush2.msra.mxu0 %v4975
    %v4977 = vand.u32 %v247, 4294901760
    %4978 = vmatprep.subr.mxu0 %v4977
    %v4979 = vand.u32 %v246, 4294901760
    %4980 = vmatpush2.msra.mxu0 %v4979
    %v4981 = vand.u32 %v239, 4294901760
    %4982 = vmatprep.subr.mxu0 %v4981
    %v4983 = vand.u32 %v238, 4294901760
    %4984 = vmatpush2.msra.mxu0 %v4983
    %v4985 = vand.u32 %v231, 4294901760
    %4986 = vmatprep.subr.mxu0 %v4985
    %v4987 = vand.u32 %v230, 4294901760
    %4988 = vmatpush2.msra.mxu0 %v4987
    %v4989 = vand.u32 %v223, 4294901760
    %4990 = vmatprep.subr.mxu0 %v4989
    %v4991 = vand.u32 %v222, 4294901760
    %4992 = vmatpush2.msra.mxu0 %v4991
    %v4993 = vand.u32 %v215, 4294901760
    %4994 = vmatprep.subr.mxu0 %v4993
    %v4995 = vand.u32 %v214, 4294901760
    %4996 = vmatpush2.msra.mxu0 %v4995
    %v4997 = vand.u32 %v207, 4294901760
    %4998 = vmatprep.subr.mxu0 %v4997
    %v4999 = vand.u32 %v206, 4294901760
    %5000 = vmatpush2.msra.mxu0 %v4999
    %v5001 = vand.u32 %v199, 4294901760
    %5002 = vmatprep.subr.mxu0 %v5001
    %v5003 = vand.u32 %v198, 4294901760
    %5004 = vmatpush2.msra.mxu0 %v5003
    %v5005 = vand.u32 %v191, 4294901760
    %5006 = vmatprep.subr.mxu0 %v5005
    %v5007 = vand.u32 %v190, 4294901760
    %5008 = vmatpush2.msra.mxu0 %v5007
    %v5009 = vand.u32 %v183, 4294901760
    %5010 = vmatprep.subr.mxu0 %v5009
    %v5011 = vand.u32 %v182, 4294901760
    %5012 = vmatpush2.msra.mxu0 %v5011
    %v5013 = vand.u32 %v175, 4294901760
    %5014 = vmatprep.subr.mxu0 %v5013
    %v5015 = vand.u32 %v174, 4294901760
    %5016 = vmatpush2.msra.mxu0 %v5015
    %v5017 = vand.u32 %v39, 4294901760
    %v5018 = vsub.f32 %v39, %v5017
    %v5019 = vand.u32 %v5018, 4294901760
    %5020 = vmatprep.mubr.f32.mxu0 %v5019
    %v5021 = vand.u32 %v38, 4294901760
    %v5022 = vsub.f32 %v38, %v5021
    %v5023 = vand.u32 %v5022, 4294901760
    %5024 = vmatmul.mubr.f32.gmra.mxu0 %v5023
    %v5025 = vpop.f32.mrf.mxu0
    %v5026 = vadd.f32 %v4885, %v5025
    %v5027 = vpop.f32.mrf.mxu0
    %v5028 = vadd.f32 %v4887, %v5027
    %5029 = vdwg.mxu0
    %v5030 = vand.u32 %v167, 4294901760
    %v5031 = vsub.f32 %v167, %v5030
    %v5032 = vand.u32 %v5031, 4294901760
    %5033 = vmatprep.subr.mxu0 %v5032
    %v5034 = vand.u32 %v166, 4294901760
    %v5035 = vsub.f32 %v166, %v5034
    %v5036 = vand.u32 %v5035, 4294901760
    %5037 = vmatpush1.msra.mxu0 %v5036
    %v5038 = vand.u32 %v159, 4294901760
    %v5039 = vsub.f32 %v159, %v5038
    %v5040 = vand.u32 %v5039, 4294901760
    %5041 = vmatprep.subr.mxu0 %v5040
    %v5042 = vand.u32 %v158, 4294901760
    %v5043 = vsub.f32 %v158, %v5042
    %v5044 = vand.u32 %v5043, 4294901760
    %5045 = vmatpush1.msra.mxu0 %v5044
    %v5046 = vand.u32 %v151, 4294901760
    %v5047 = vsub.f32 %v151, %v5046
    %v5048 = vand.u32 %v5047, 4294901760
    %5049 = vmatprep.subr.mxu0 %v5048
    %v5050 = vand.u32 %v150, 4294901760
    %v5051 = vsub.f32 %v150, %v5050
    %v5052 = vand.u32 %v5051, 4294901760
    %5053 = vmatpush1.msra.mxu0 %v5052
    %v5054 = vand.u32 %v143, 4294901760
    %v5055 = vsub.f32 %v143, %v5054
    %v5056 = vand.u32 %v5055, 4294901760
    %5057 = vmatprep.subr.mxu0 %v5056
    %v5058 = vand.u32 %v142, 4294901760
    %v5059 = vsub.f32 %v142, %v5058
    %v5060 = vand.u32 %v5059, 4294901760
    %5061 = vmatpush1.msra.mxu0 %v5060
    %v5062 = vand.u32 %v135, 4294901760
    %v5063 = vsub.f32 %v135, %v5062
    %v5064 = vand.u32 %v5063, 4294901760
    %5065 = vmatprep.subr.mxu0 %v5064
    %v5066 = vand.u32 %v134, 4294901760
    %v5067 = vsub.f32 %v134, %v5066
    %v5068 = vand.u32 %v5067, 4294901760
    %5069 = vmatpush1.msra.mxu0 %v5068
    %v5070 = vand.u32 %v127, 4294901760
    %v5071 = vsub.f32 %v127, %v5070
    %v5072 = vand.u32 %v5071, 4294901760
    %5073 = vmatprep.subr.mxu0 %v5072
    %v5074 = vand.u32 %v126, 4294901760
    %v5075 = vsub.f32 %v126, %v5074
    %v5076 = vand.u32 %v5075, 4294901760
    %5077 = vmatpush1.msra.mxu0 %v5076
    %v5078 = vand.u32 %v119, 4294901760
    %v5079 = vsub.f32 %v119, %v5078
    %v5080 = vand.u32 %v5079, 4294901760
    %5081 = vmatprep.subr.mxu0 %v5080
    %v5082 = vand.u32 %v118, 4294901760
    %v5083 = vsub.f32 %v118, %v5082
    %v5084 = vand.u32 %v5083, 4294901760
    %5085 = vmatpush1.msra.mxu0 %v5084
    %v5086 = vand.u32 %v111, 4294901760
    %v5087 = vsub.f32 %v111, %v5086
    %v5088 = vand.u32 %v5087, 4294901760
    %5089 = vmatprep.subr.mxu0 %v5088
    %v5090 = vand.u32 %v110, 4294901760
    %v5091 = vsub.f32 %v110, %v5090
    %v5092 = vand.u32 %v5091, 4294901760
    %5093 = vmatpush1.msra.mxu0 %v5092
    %v5094 = vand.u32 %v103, 4294901760
    %v5095 = vsub.f32 %v103, %v5094
    %v5096 = vand.u32 %v5095, 4294901760
    %5097 = vmatprep.subr.mxu0 %v5096
    %v5098 = vand.u32 %v102, 4294901760
    %v5099 = vsub.f32 %v102, %v5098
    %v5100 = vand.u32 %v5099, 4294901760
    %5101 = vmatpush1.msra.mxu0 %v5100
    %v5102 = vand.u32 %v95, 4294901760
    %v5103 = vsub.f32 %v95, %v5102
    %v5104 = vand.u32 %v5103, 4294901760
    %5105 = vmatprep.subr.mxu0 %v5104
    %v5106 = vand.u32 %v94, 4294901760
    %v5107 = vsub.f32 %v94, %v5106
    %v5108 = vand.u32 %v5107, 4294901760
    %5109 = vmatpush1.msra.mxu0 %v5108
    %v5110 = vand.u32 %v87, 4294901760
    %v5111 = vsub.f32 %v87, %v5110
    %v5112 = vand.u32 %v5111, 4294901760
    %5113 = vmatprep.subr.mxu0 %v5112
    %v5114 = vand.u32 %v86, 4294901760
    %v5115 = vsub.f32 %v86, %v5114
    %v5116 = vand.u32 %v5115, 4294901760
    %5117 = vmatpush1.msra.mxu0 %v5116
    %v5118 = vand.u32 %v79, 4294901760
    %v5119 = vsub.f32 %v79, %v5118
    %v5120 = vand.u32 %v5119, 4294901760
    %5121 = vmatprep.subr.mxu0 %v5120
    %v5122 = vand.u32 %v78, 4294901760
    %v5123 = vsub.f32 %v78, %v5122
    %v5124 = vand.u32 %v5123, 4294901760
    %5125 = vmatpush1.msra.mxu0 %v5124
    %v5126 = vand.u32 %v71, 4294901760
    %v5127 = vsub.f32 %v71, %v5126
    %v5128 = vand.u32 %v5127, 4294901760
    %5129 = vmatprep.subr.mxu0 %v5128
    %v5130 = vand.u32 %v70, 4294901760
    %v5131 = vsub.f32 %v70, %v5130
    %v5132 = vand.u32 %v5131, 4294901760
    %5133 = vmatpush1.msra.mxu0 %v5132
    %v5134 = vand.u32 %v63, 4294901760
    %v5135 = vsub.f32 %v63, %v5134
    %v5136 = vand.u32 %v5135, 4294901760
    %5137 = vmatprep.subr.mxu0 %v5136
    %v5138 = vand.u32 %v62, 4294901760
    %v5139 = vsub.f32 %v62, %v5138
    %v5140 = vand.u32 %v5139, 4294901760
    %5141 = vmatpush1.msra.mxu0 %v5140
    %v5142 = vand.u32 %v55, 4294901760
    %v5143 = vsub.f32 %v55, %v5142
    %v5144 = vand.u32 %v5143, 4294901760
    %5145 = vmatprep.subr.mxu0 %v5144
    %v5146 = vand.u32 %v54, 4294901760
    %v5147 = vsub.f32 %v54, %v5146
    %v5148 = vand.u32 %v5147, 4294901760
    %5149 = vmatpush1.msra.mxu0 %v5148
    %v5150 = vand.u32 %v47, 4294901760
    %v5151 = vsub.f32 %v47, %v5150
    %v5152 = vand.u32 %v5151, 4294901760
    %5153 = vmatprep.subr.mxu0 %v5152
    %v5154 = vand.u32 %v46, 4294901760
    %v5155 = vsub.f32 %v46, %v5154
    %v5156 = vand.u32 %v5155, 4294901760
    %5157 = vmatpush1.msra.mxu0 %v5156
    %v5158 = vand.u32 %v295, 4294901760
    %v5159 = vsub.f32 %v295, %v5158
    %v5160 = vand.u32 %v5159, 4294901760
    %5161 = vmatprep.subr.mxu0 %v5160
    %v5162 = vand.u32 %v294, 4294901760
    %v5163 = vsub.f32 %v294, %v5162
    %v5164 = vand.u32 %v5163, 4294901760
    %5165 = vmatpush2.msra.mxu0 %v5164
    %v5166 = vand.u32 %v287, 4294901760
    %v5167 = vsub.f32 %v287, %v5166
    %v5168 = vand.u32 %v5167, 4294901760
    %5169 = vmatprep.subr.mxu0 %v5168
    %v5170 = vand.u32 %v286, 4294901760
    %v5171 = vsub.f32 %v286, %v5170
    %v5172 = vand.u32 %v5171, 4294901760
    %5173 = vmatpush2.msra.mxu0 %v5172
    %v5174 = vand.u32 %v279, 4294901760
    %v5175 = vsub.f32 %v279, %v5174
    %v5176 = vand.u32 %v5175, 4294901760
    %5177 = vmatprep.subr.mxu0 %v5176
    %v5178 = vand.u32 %v278, 4294901760
    %v5179 = vsub.f32 %v278, %v5178
    %v5180 = vand.u32 %v5179, 4294901760
    %5181 = vmatpush2.msra.mxu0 %v5180
    %v5182 = vand.u32 %v271, 4294901760
    %v5183 = vsub.f32 %v271, %v5182
    %v5184 = vand.u32 %v5183, 4294901760
    %5185 = vmatprep.subr.mxu0 %v5184
    %v5186 = vand.u32 %v270, 4294901760
    %v5187 = vsub.f32 %v270, %v5186
    %v5188 = vand.u32 %v5187, 4294901760
    %5189 = vmatpush2.msra.mxu0 %v5188
    %v5190 = vand.u32 %v263, 4294901760
    %v5191 = vsub.f32 %v263, %v5190
    %v5192 = vand.u32 %v5191, 4294901760
    %5193 = vmatprep.subr.mxu0 %v5192
    %v5194 = vand.u32 %v262, 4294901760
    %v5195 = vsub.f32 %v262, %v5194
    %v5196 = vand.u32 %v5195, 4294901760
    %5197 = vmatpush2.msra.mxu0 %v5196
    %v5198 = vand.u32 %v255, 4294901760
    %v5199 = vsub.f32 %v255, %v5198
    %v5200 = vand.u32 %v5199, 4294901760
    %5201 = vmatprep.subr.mxu0 %v5200
    %v5202 = vand.u32 %v254, 4294901760
    %v5203 = vsub.f32 %v254, %v5202
    %v5204 = vand.u32 %v5203, 4294901760
    %5205 = vmatpush2.msra.mxu0 %v5204
    %v5206 = vand.u32 %v247, 4294901760
    %v5207 = vsub.f32 %v247, %v5206
    %v5208 = vand.u32 %v5207, 4294901760
    %5209 = vmatprep.subr.mxu0 %v5208
    %v5210 = vand.u32 %v246, 4294901760
    %v5211 = vsub.f32 %v246, %v5210
    %v5212 = vand.u32 %v5211, 4294901760
    %5213 = vmatpush2.msra.mxu0 %v5212
    %v5214 = vand.u32 %v239, 4294901760
    %v5215 = vsub.f32 %v239, %v5214
    %v5216 = vand.u32 %v5215, 4294901760
    %5217 = vmatprep.subr.mxu0 %v5216
    %v5218 = vand.u32 %v238, 4294901760
    %v5219 = vsub.f32 %v238, %v5218
    %v5220 = vand.u32 %v5219, 4294901760
    %5221 = vmatpush2.msra.mxu0 %v5220
    %v5222 = vand.u32 %v231, 4294901760
    %v5223 = vsub.f32 %v231, %v5222
    %v5224 = vand.u32 %v5223, 4294901760
    %5225 = vmatprep.subr.mxu0 %v5224
    %v5226 = vand.u32 %v230, 4294901760
    %v5227 = vsub.f32 %v230, %v5226
    %v5228 = vand.u32 %v5227, 4294901760
    %5229 = vmatpush2.msra.mxu0 %v5228
    %v5230 = vand.u32 %v223, 4294901760
    %v5231 = vsub.f32 %v223, %v5230
    %v5232 = vand.u32 %v5231, 4294901760
    %5233 = vmatprep.subr.mxu0 %v5232
    %v5234 = vand.u32 %v222, 4294901760
    %v5235 = vsub.f32 %v222, %v5234
    %v5236 = vand.u32 %v5235, 4294901760
    %5237 = vmatpush2.msra.mxu0 %v5236
    %v5238 = vand.u32 %v215, 4294901760
    %v5239 = vsub.f32 %v215, %v5238
    %v5240 = vand.u32 %v5239, 4294901760
    %5241 = vmatprep.subr.mxu0 %v5240
    %v5242 = vand.u32 %v214, 4294901760
    %v5243 = vsub.f32 %v214, %v5242
    %v5244 = vand.u32 %v5243, 4294901760
    %5245 = vmatpush2.msra.mxu0 %v5244
    %v5246 = vand.u32 %v207, 4294901760
    %v5247 = vsub.f32 %v207, %v5246
    %v5248 = vand.u32 %v5247, 4294901760
    %5249 = vmatprep.subr.mxu0 %v5248
    %v5250 = vand.u32 %v206, 4294901760
    %v5251 = vsub.f32 %v206, %v5250
    %v5252 = vand.u32 %v5251, 4294901760
    %5253 = vmatpush2.msra.mxu0 %v5252
    %v5254 = vand.u32 %v199, 4294901760
    %v5255 = vsub.f32 %v199, %v5254
    %v5256 = vand.u32 %v5255, 4294901760
    %5257 = vmatprep.subr.mxu0 %v5256
    %v5258 = vand.u32 %v198, 4294901760
    %v5259 = vsub.f32 %v198, %v5258
    %v5260 = vand.u32 %v5259, 4294901760
    %5261 = vmatpush2.msra.mxu0 %v5260
    %v5262 = vand.u32 %v191, 4294901760
    %v5263 = vsub.f32 %v191, %v5262
    %v5264 = vand.u32 %v5263, 4294901760
    %5265 = vmatprep.subr.mxu0 %v5264
    %v5266 = vand.u32 %v190, 4294901760
    %v5267 = vsub.f32 %v190, %v5266
    %v5268 = vand.u32 %v5267, 4294901760
    %5269 = vmatpush2.msra.mxu0 %v5268
    %v5270 = vand.u32 %v183, 4294901760
    %v5271 = vsub.f32 %v183, %v5270
    %v5272 = vand.u32 %v5271, 4294901760
    %5273 = vmatprep.subr.mxu0 %v5272
    %v5274 = vand.u32 %v182, 4294901760
    %v5275 = vsub.f32 %v182, %v5274
    %v5276 = vand.u32 %v5275, 4294901760
    %5277 = vmatpush2.msra.mxu0 %v5276
    %v5278 = vand.u32 %v175, 4294901760
    %v5279 = vsub.f32 %v175, %v5278
    %v5280 = vand.u32 %v5279, 4294901760
    %5281 = vmatprep.subr.mxu0 %v5280
    %v5282 = vand.u32 %v174, 4294901760
    %v5283 = vsub.f32 %v174, %v5282
    %v5284 = vand.u32 %v5283, 4294901760
    %5285 = vmatpush2.msra.mxu0 %v5284
    %v5286 = vand.u32 %v39, 4294901760
    %5287 = vmatprep.mubr.f32.mxu0 %v5286
    %v5288 = vand.u32 %v38, 4294901760
    %5289 = vmatmul.mubr.f32.gmra.mxu0 %v5288
    %v5290 = vpop.f32.mrf.mxu0
    %v5291 = vadd.f32 %v5026, %v5290
    %v5292 = vpop.f32.mrf.mxu0
    %v5293 = vadd.f32 %v5028, %v5292
    %5294 = vdwg.mxu0
    %v5295 = vand.u32 %v167, 4294901760
    %5296 = vmatprep.subr.mxu0 %v5295
    %v5297 = vand.u32 %v166, 4294901760
    %5298 = vmatpush1.msra.mxu0 %v5297
    %v5299 = vand.u32 %v159, 4294901760
    %5300 = vmatprep.subr.mxu0 %v5299
    %v5301 = vand.u32 %v158, 4294901760
    %5302 = vmatpush1.msra.mxu0 %v5301
    %v5303 = vand.u32 %v151, 4294901760
    %5304 = vmatprep.subr.mxu0 %v5303
    %v5305 = vand.u32 %v150, 4294901760
    %5306 = vmatpush1.msra.mxu0 %v5305
    %v5307 = vand.u32 %v143, 4294901760
    %5308 = vmatprep.subr.mxu0 %v5307
    %v5309 = vand.u32 %v142, 4294901760
    %5310 = vmatpush1.msra.mxu0 %v5309
    %v5311 = vand.u32 %v135, 4294901760
    %5312 = vmatprep.subr.mxu0 %v5311
    %v5313 = vand.u32 %v134, 4294901760
    %5314 = vmatpush1.msra.mxu0 %v5313
    %v5315 = vand.u32 %v127, 4294901760
    %5316 = vmatprep.subr.mxu0 %v5315
    %v5317 = vand.u32 %v126, 4294901760
    %5318 = vmatpush1.msra.mxu0 %v5317
    %v5319 = vand.u32 %v119, 4294901760
    %5320 = vmatprep.subr.mxu0 %v5319
    %v5321 = vand.u32 %v118, 4294901760
    %5322 = vmatpush1.msra.mxu0 %v5321
    %v5323 = vand.u32 %v111, 4294901760
    %5324 = vmatprep.subr.mxu0 %v5323
    %v5325 = vand.u32 %v110, 4294901760
    %5326 = vmatpush1.msra.mxu0 %v5325
    %v5327 = vand.u32 %v103, 4294901760
    %5328 = vmatprep.subr.mxu0 %v5327
    %v5329 = vand.u32 %v102, 4294901760
    %5330 = vmatpush1.msra.mxu0 %v5329
    %v5331 = vand.u32 %v95, 4294901760
    %5332 = vmatprep.subr.mxu0 %v5331
    %v5333 = vand.u32 %v94, 4294901760
    %5334 = vmatpush1.msra.mxu0 %v5333
    %v5335 = vand.u32 %v87, 4294901760
    %5336 = vmatprep.subr.mxu0 %v5335
    %v5337 = vand.u32 %v86, 4294901760
    %5338 = vmatpush1.msra.mxu0 %v5337
    %v5339 = vand.u32 %v79, 4294901760
    %5340 = vmatprep.subr.mxu0 %v5339
    %v5341 = vand.u32 %v78, 4294901760
    %5342 = vmatpush1.msra.mxu0 %v5341
    %v5343 = vand.u32 %v71, 4294901760
    %5344 = vmatprep.subr.mxu0 %v5343
    %v5345 = vand.u32 %v70, 4294901760
    %5346 = vmatpush1.msra.mxu0 %v5345
    %v5347 = vand.u32 %v63, 4294901760
    %5348 = vmatprep.subr.mxu0 %v5347
    %v5349 = vand.u32 %v62, 4294901760
    %5350 = vmatpush1.msra.mxu0 %v5349
    %v5351 = vand.u32 %v55, 4294901760
    %5352 = vmatprep.subr.mxu0 %v5351
    %v5353 = vand.u32 %v54, 4294901760
    %5354 = vmatpush1.msra.mxu0 %v5353
    %v5355 = vand.u32 %v47, 4294901760
    %5356 = vmatprep.subr.mxu0 %v5355
    %v5357 = vand.u32 %v46, 4294901760
    %5358 = vmatpush1.msra.mxu0 %v5357
    %v5359 = vand.u32 %v295, 4294901760
    %5360 = vmatprep.subr.mxu0 %v5359
    %v5361 = vand.u32 %v294, 4294901760
    %5362 = vmatpush2.msra.mxu0 %v5361
    %v5363 = vand.u32 %v287, 4294901760
    %5364 = vmatprep.subr.mxu0 %v5363
    %v5365 = vand.u32 %v286, 4294901760
    %5366 = vmatpush2.msra.mxu0 %v5365
    %v5367 = vand.u32 %v279, 4294901760
    %5368 = vmatprep.subr.mxu0 %v5367
    %v5369 = vand.u32 %v278, 4294901760
    %5370 = vmatpush2.msra.mxu0 %v5369
    %v5371 = vand.u32 %v271, 4294901760
    %5372 = vmatprep.subr.mxu0 %v5371
    %v5373 = vand.u32 %v270, 4294901760
    %5374 = vmatpush2.msra.mxu0 %v5373
    %v5375 = vand.u32 %v263, 4294901760
    %5376 = vmatprep.subr.mxu0 %v5375
    %v5377 = vand.u32 %v262, 4294901760
    %5378 = vmatpush2.msra.mxu0 %v5377
    %v5379 = vand.u32 %v255, 4294901760
    %5380 = vmatprep.subr.mxu0 %v5379
    %v5381 = vand.u32 %v254, 4294901760
    %5382 = vmatpush2.msra.mxu0 %v5381
    %v5383 = vand.u32 %v247, 4294901760
    %5384 = vmatprep.subr.mxu0 %v5383
    %v5385 = vand.u32 %v246, 4294901760
    %5386 = vmatpush2.msra.mxu0 %v5385
    %v5387 = vand.u32 %v239, 4294901760
    %5388 = vmatprep.subr.mxu0 %v5387
    %v5389 = vand.u32 %v238, 4294901760
    %5390 = vmatpush2.msra.mxu0 %v5389
    %v5391 = vand.u32 %v231, 4294901760
    %5392 = vmatprep.subr.mxu0 %v5391
    %v5393 = vand.u32 %v230, 4294901760
    %5394 = vmatpush2.msra.mxu0 %v5393
    %v5395 = vand.u32 %v223, 4294901760
    %5396 = vmatprep.subr.mxu0 %v5395
    %v5397 = vand.u32 %v222, 4294901760
    %5398 = vmatpush2.msra.mxu0 %v5397
    %v5399 = vand.u32 %v215, 4294901760
    %5400 = vmatprep.subr.mxu0 %v5399
    %v5401 = vand.u32 %v214, 4294901760
    %5402 = vmatpush2.msra.mxu0 %v5401
    %v5403 = vand.u32 %v207, 4294901760
    %5404 = vmatprep.subr.mxu0 %v5403
    %v5405 = vand.u32 %v206, 4294901760
    %5406 = vmatpush2.msra.mxu0 %v5405
    %v5407 = vand.u32 %v199, 4294901760
    %5408 = vmatprep.subr.mxu0 %v5407
    %v5409 = vand.u32 %v198, 4294901760
    %5410 = vmatpush2.msra.mxu0 %v5409
    %v5411 = vand.u32 %v191, 4294901760
    %5412 = vmatprep.subr.mxu0 %v5411
    %v5413 = vand.u32 %v190, 4294901760
    %5414 = vmatpush2.msra.mxu0 %v5413
    %v5415 = vand.u32 %v183, 4294901760
    %5416 = vmatprep.subr.mxu0 %v5415
    %v5417 = vand.u32 %v182, 4294901760
    %5418 = vmatpush2.msra.mxu0 %v5417
    %v5419 = vand.u32 %v175, 4294901760
    %5420 = vmatprep.subr.mxu0 %v5419
    %v5421 = vand.u32 %v174, 4294901760
    %5422 = vmatpush2.msra.mxu0 %v5421
    %v5423 = vand.u32 %v39, 4294901760
    %5424 = vmatprep.mubr.f32.mxu0 %v5423
    %v5425 = vand.u32 %v38, 4294901760
    %5426 = vmatmul.mubr.f32.gmra.mxu0 %v5425
    %v5427 = vpop.f32.mrf.mxu0
    %v5428 = vadd.f32 %v5291, %v5427
    %v5429 = vpop.f32.mrf.mxu0
    %v5430 = vadd.f32 %v5293, %v5429
    %5431 = vdwg.mxu0
    %5432 = vst [vmem:[#allocation7] sm:$0xff] %v1576
    %5433 = vst [vmem:[#allocation7 + $0x8] sm:$0xff] %v1578
    %5434 = vst [vmem:[#allocation7 + $0x10] sm:$0xff] %v2860
    %5435 = vst [vmem:[#allocation7 + $0x18] sm:$0xff] %v2862
    %5436 = vst [vmem:[#allocation7 + $0x20] sm:$0xff] %v4144
    %5437 = vst [vmem:[#allocation7 + $0x28] sm:$0xff] %v4146
    %5438 = vst [vmem:[#allocation7 + $0x30] sm:$0xff] %v5428
    %5439 = vst [vmem:[#allocation7 + $0x38] sm:$0xff] %v5430
    // Predicated region
    $region18: #{tpu_custom_call.1} parent=1 // pred_check
      _
    $region19: #{tpu_custom_call.1} parent=1 // pred_check_branch
      %5441 = sbr.rel (0) target = $region21
    $region20: #{tpu_custom_call.1} parent=1 // pred_region
      %s5443 = ssub.s32 1024, 1024
      %5444 = vsyncadd [#allocation4], %s5443
      %s5446 = sshll.u32 [#allocation7], 4
      %s5447 = int_to_ptr.vmem [resolvable:$true] %s5446
      %5449 = dma.vmem_to_hbm [thread:$0]  %s5447, 1024, %s2, [#allocation4]
    $region21: #{tpu_custom_call.1} parent=1 // pred_fallthru
      _
    // Predicated region
    $region22: #{tpu_custom_call.1} parent=1 // pred_check
      _
    $region23: #{tpu_custom_call.1} parent=1 // pred_check_branch
      %5451 = sbr.rel (0) target = $region25
    $region24: #{tpu_custom_call.1} parent=1 // pred_region
      %5452 = dma.done [#allocation4], 1024
    $region25: #{tpu_custom_call.1} parent=1 // pred_fallthru
      _
    %5453 = vsyncpa [#allocation3], 1
    %5454 = vsyncpa [#allocation6], 1
    %5455 = vsyncpa [#allocation4], 1

</llo_original>
